<compile_context>
chip_gen: v7x
topology: tpu7x:2x2x1
jax: 0.10.0
libtpu: 0.0.40
codegen_flags: <defaults>
</compile_context>

<pallas_src>
import functools
import math

import jax
import jax.numpy as jnp
from jax.experimental import pallas as pl
from jax.experimental.pallas import tpu as pltpu


def _round_up(x, m):
    return ((x + m - 1) // m) * m


def _pick_vmem_limit():
    """~80% of physical VMEM for the current TPU generation (fallback 48 MiB)."""
    try:
        cap = pltpu.get_tpu_info().vmem_capacity_bytes
        return max(32 * 1024 * 1024, int(cap * 0.8))
    except Exception:
        return 48 * 1024 * 1024


def mam_fc_kernel(x_ref, wt_ref, b_ref, o_ref, mx_ref, mn_ref, *, tk, compute_dtype):
    """One (m-tile, n-tile, k-tile) grid step of the MAM fully-connected layer.

    x_ref  : (tm, tk)  activation tile (streamed)
    wt_ref : (tk, tn)  transposed-weight tile (streamed)
    b_ref  : (1,  tn)  bias tile
    o_ref  : (tm, tn)  output tile (resident across the K grid axis)
    mx_ref / mn_ref : (tm, tn) running max / min scratch
    """
    ki = pl.program_id(2)
    nk = pl.num_programs(2)

    @pl.when(ki == 0)
    def _init():
        mx_ref[...] = jnp.full_like(mx_ref, -jnp.inf)
        mn_ref[...] = jnp.full_like(mn_ref, jnp.inf)

    # Keep the accumulators in registers across the statically-unrolled k loop
    # (32 vregs at tm=tn=128 f32); read/write scratch only once per grid step.
    mx = mx_ref[...]
    mn = mn_ref[...]

    # Rank-1 updates: p[m, n] = x[m, k] * W^T[k, n].  Pure elementwise
    # mul/max/min on (tm, tn) tiles -> VPU only, no XLU reduction, no 3-D
    # broadcast product.  tk is a compile-time constant (<=128) -> static
    # unroll with static slices.
    for s in range(tk):
        xcol = x_ref[:, s:s + 1].astype(compute_dtype)   # (tm, 1)
        wrow = wt_ref[s:s + 1, :].astype(compute_dtype)  # (1,  tn)
        p = xcol * wrow                                   # (tm, tn)
        mx = jnp.maximum(mx, p)
        mn = jnp.minimum(mn, p)

    mx_ref[...] = mx
    mn_ref[...] = mn

    @pl.when(ki == nk - 1)
    def _finalize():
        out = (mx.astype(jnp.float32) + mn.astype(jnp.float32)
               + b_ref[...].astype(jnp.float32))
        o_ref[...] = out.astype(o_ref.dtype)


@functools.partial(jax.jit,
                   static_argnames=("relu_in", "tm", "tn", "tk", "compute_dtype"))
def mam_fully_connected(x, weight, bias=None, *, relu_in=False,
                        tm=128, tn=128, tk=128, compute_dtype=jnp.float32):
    """Pallas implementation of FullyConnected.forward (eval mode, splits=1).

    x      : (..., in_features)
    weight : (out_features, in_features)   -- PyTorch Linear layout
    bias   : (out_features,) or None
    compute_dtype : jnp.float32 (exact, default) or jnp.bfloat16 (v6e/v7x VPU
                    fast path; changes max/min tie-breaking vs f32).
    """
    if relu_in:
        x = jnp.maximum(x, 0.0)

    orig_shape = x.shape
    K = orig_shape[-1]
    N, K_w = weight.shape
    assert K_w == K, "weight must be (out_features, in_features)"

    x_flat = x.reshape(-1, K)
    M = x_flat.shape[0]

    # ---- tile selection ---------------------------------------------------
    # M tile: multiple of 8 sublanes, capped by the problem size.
    tm = min(tm, _round_up(M, 8))
    tm = _round_up(tm, 8)
    Mp = _round_up(M, tm)

    # N tile: lane-dense multiple of 128 (keeps 2*tm*tn f32 accumulators at
    # ~32 vregs for the default tm=tn=128).
    tn = max(128, (tn // 128) * 128)
    Np = _round_up(N, tn)

    # K tile: 128 (static unroll depth in the kernel); K is edge-padded.
    tk = 128
    Kp = _round_up(K, tk)

    # ---- padding (lifts divisibility restrictions) -------------------------
    # M: zero rows (rows are independent; sliced off afterwards).
    if Mp != M:
        x_flat = jnp.pad(x_flat, ((0, Mp - M), (0, 0)))
    # K: replicate the last column / last weight row ("edge" padding).
    # Duplicated products leave max and min unchanged -> exact equivalence.
    wt = weight.T  # (K, N): reduction axis on sublanes, output axis on lanes
    if Kp != K:
        x_flat = jnp.pad(x_flat, ((0, 0), (0, Kp - K)), mode="edge")
        wt = jnp.pad(wt, ((0, Kp - K), (0, 0)), mode="edge")
    # N: zero columns (garbage outputs in the pad region; sliced off).
    if Np != N:
        wt = jnp.pad(wt, ((0, 0), (0, Np - N)))
    if bias is None:
        b = jnp.zeros((Np,), dtype=jnp.float32)
    else:
        b = bias.astype(jnp.float32)
        if Np != N:
            b = jnp.pad(b, (0, Np - N))
    b2 = b.reshape(1, Np)

    grid = (Mp // tm, Np // tn, Kp // tk)

    kernel = functools.partial(mam_fc_kernel, tk=tk, compute_dtype=compute_dtype)
    out_flat = pl.pallas_call(
        kernel,
        out_shape=jax.ShapeDtypeStruct((Mp, Np), x.dtype),
        grid_spec=pltpu.PrefetchScalarGridSpec(
            num_scalar_prefetch=0,
            grid=grid,
            in_specs=[
                pl.BlockSpec((tm, tk), lambda i, j, k: (i, k)),  # activations
                pl.BlockSpec((tk, tn), lambda i, j, k: (k, j)),  # W^T, streamed
                pl.BlockSpec((1, tn), lambda i, j, k: (0, j)),   # bias
            ],
            out_specs=pl.BlockSpec((tm, tn), lambda i, j, k: (i, j)),
            scratch_shapes=[
                pltpu.VMEM((tm, tn), compute_dtype),   # running max
                pltpu.VMEM((tm, tn), compute_dtype),   # running min
            ],
        ),
        compiler_params=pltpu.CompilerParams(
            dimension_semantics=("parallel", "parallel", "arbitrary"),
            vmem_limit_bytes=_pick_vmem_limit(),
        ),
    )(x_flat, wt, b2)

    out_flat = out_flat[:M, :N]
    return out_flat.reshape(orig_shape[:-1] + (N,))


def ref_forward(x, weight, bias):
    """Pure-JAX reference of the MAM forward pass."""
    xf = x.reshape(-1, x.shape[-1]).astype(jnp.float32)
    wf = weight.astype(jnp.float32)
    prod = xf[:, None, :] * wf[None, :, :]        # (M, N, K)
    out = prod.max(axis=-1) + prod.min(axis=-1) + bias.astype(jnp.float32)[None, :]
    return out.reshape(x.shape[:-1] + (weight.shape[0],)).astype(x.dtype)


# TODO(synk): training-only paths of the module (weight/output dropout, vcon
# beta-blend with a dense F.linear term, store_args argmax/argmin counting,
# splits>1 partial-sum accumulation) are not implemented; this kernel covers
# the default eval-mode forward.

if __name__ == "__main__":
    # Small shapes consistent with the module: batch=2, seq=8, hidden (in)=256.
    batch, seq = 2, 8
    in_features, out_features = 256, 128

    key = jax.random.PRNGKey(0)
    kx, kw, kb = jax.random.split(key, 3)

    # Deterministic parameter init mirroring reset_parameters():
    # kaiming_uniform_(a=sqrt(5)) -> U(-1/sqrt(fan_in), 1/sqrt(fan_in)); bias same bound.
    bound = 1.0 / math.sqrt(in_features)
    weight = jax.random.uniform(kw, (out_features, in_features),
                                jnp.float32, -bound, bound)
    bias = jax.random.uniform(kb, (out_features,), jnp.float32, -bound, bound)
    x = jax.random.normal(kx, (batch, seq, in_features), jnp.float32)

    out = mam_fully_connected(x, weight, bias)
    out = jax.block_until_ready(out)
    expected = ref_forward(x, weight, bias)
    assert out.shape == (batch, seq, out_features)
    assert jnp.allclose(out, expected, rtol=1e-5, atol=1e-5), (
        f"max abs diff = {jnp.max(jnp.abs(out - expected))}")

    # Ragged shapes (non-multiples of 8 / 128) exercise the M/N/K padding paths.
    in2, out2 = 200, 64
    kx2, kw2, kb2 = jax.random.split(jax.random.PRNGKey(1), 3)
    bound2 = 1.0 / math.sqrt(in2)
    w2 = jax.random.uniform(kw2, (out2, in2), jnp.float32, -bound2, bound2)
    b2 = jax.random.uniform(kb2, (out2,), jnp.float32, -bound2, bound2)
    x2 = jax.random.normal(kx2, (3, 5, in2), jnp.float32)
    out2_val = jax.block_until_ready(mam_fully_connected(x2, w2, b2))
    exp2 = ref_forward(x2, w2, b2)
    assert out2_val.shape == (3, 5, out2)
    assert jnp.allclose(out2_val, exp2, rtol=1e-5, atol=1e-5), (
        f"max abs diff (ragged) = {jnp.max(jnp.abs(out2_val - exp2))}")

    print("KERNEL_OK")
</pallas_src>

<mosaic_0001>
module attributes {stable_mosaic.version = 11 : i64} {
  func.func @mam_fc_kernel(%arg0: i32, %arg1: i32, %arg2: i32, %arg3: memref<16x128xf32, #tpu.memory_space<vmem>>, %arg4: memref<128x128xf32, #tpu.memory_space<vmem>>, %arg5: memref<1x128xf32, #tpu.memory_space<vmem>>, %arg6: memref<16x128xf32, #tpu.memory_space<vmem>>, %arg7: memref<16x128xf32, #tpu.memory_space<vmem>>, %arg8: memref<16x128xf32, #tpu.memory_space<vmem>>) attributes {dimension_semantics = [#tpu.dimension_semantics<parallel>, #tpu.dimension_semantics<parallel>, #tpu.dimension_semantics<arbitrary>], iteration_bounds = array<i64: 1, 1, 2>, scalar_prefetch = 0 : i64, scratch_operands = 2 : i64, tpu.core_type = #tpu.core_type<tc>, window_params = [{transform_indices = @transform_0, window_bounds = array<i64: 16, 128>}, {transform_indices = @transform_1, window_bounds = array<i64: 128, 128>}, {transform_indices = @transform_2, window_bounds = array<i64: 1, 128>}, {transform_indices = @transform_3, window_bounds = array<i64: 16, 128>}]} {
    %c0_i32 = arith.constant 0 : i32
    %0 = arith.cmpi eq, %arg2, %c0_i32 : i32
    %1 = arith.extui %0 : i1 to i32
    %c0_i32_0 = arith.constant 0 : i32
    %2 = arith.cmpi ne, %1, %c0_i32_0 : i32
    scf.if %2 {
      %cst = arith.constant 0xFF800000 : f32
      %906 = vector.broadcast %cst : f32 to vector<16x128xf32>
      %c0_394 = arith.constant 0 : index
      %c0_395 = arith.constant 0 : index
      %907 = vector.load %arg7[%c0_394, %c0_395] : memref<16x128xf32, #tpu.memory_space<vmem>>, vector<16x128xf32>
      tpu.vector_store %arg7[%c0_394, %c0_395], %906 {strides = array<i32>} : memref<16x128xf32, #tpu.memory_space<vmem>>, vector<16x128xf32>,
      %cst_396 = arith.constant 0x7F800000 : f32
      %908 = vector.broadcast %cst_396 : f32 to vector<16x128xf32>
      %c0_397 = arith.constant 0 : index
      %c0_398 = arith.constant 0 : index
      %909 = vector.load %arg8[%c0_397, %c0_398] : memref<16x128xf32, #tpu.memory_space<vmem>>, vector<16x128xf32>
      tpu.vector_store %arg8[%c0_397, %c0_398], %908 {strides = array<i32>} : memref<16x128xf32, #tpu.memory_space<vmem>>, vector<16x128xf32>,
    } else {
    }
    %c0 = arith.constant 0 : index
    %c0_1 = arith.constant 0 : index
    %3 = vector.load %arg7[%c0, %c0_1] : memref<16x128xf32, #tpu.memory_space<vmem>>, vector<16x128xf32>
    %c0_2 = arith.constant 0 : index
    %c0_3 = arith.constant 0 : index
    %4 = vector.load %arg8[%c0_2, %c0_3] : memref<16x128xf32, #tpu.memory_space<vmem>>, vector<16x128xf32>
    %c0_4 = arith.constant 0 : index
    %c0_5 = arith.constant 0 : index
    %5 = vector.load %arg3[%c0_4, %c0_5] : memref<16x128xf32, #tpu.memory_space<vmem>>, vector<16x1xf32>
    %c0_6 = arith.constant 0 : index
    %c0_7 = arith.constant 0 : index
    %6 = vector.load %arg4[%c0_6, %c0_7] : memref<128x128xf32, #tpu.memory_space<vmem>>, vector<1x128xf32>
    %7 = vector.broadcast %5 : vector<16x1xf32> to vector<16x128xf32>
    %8 = vector.broadcast %6 : vector<1x128xf32> to vector<16x128xf32>
    %9 = arith.mulf %7, %8 : vector<16x128xf32>
    %10 = arith.maximumf %3, %9 : vector<16x128xf32>
    %11 = arith.minimumf %4, %9 : vector<16x128xf32>
    %c0_8 = arith.constant 0 : index
    %c1 = arith.constant 1 : index
    %12 = vector.load %arg3[%c0_8, %c1] : memref<16x128xf32, #tpu.memory_space<vmem>>, vector<16x1xf32>
    %c1_9 = arith.constant 1 : index
    %c0_10 = arith.constant 0 : index
    %13 = vector.load %arg4[%c1_9, %c0_10] : memref<128x128xf32, #tpu.memory_space<vmem>>, vector<1x128xf32>
    %14 = vector.broadcast %12 : vector<16x1xf32> to vector<16x128xf32>
    %15 = vector.broadcast %13 : vector<1x128xf32> to vector<16x128xf32>
    %16 = arith.mulf %14, %15 : vector<16x128xf32>
    %17 = arith.maximumf %10, %16 : vector<16x128xf32>
    %18 = arith.minimumf %11, %16 : vector<16x128xf32>
    %c0_11 = arith.constant 0 : index
    %c2 = arith.constant 2 : index
    %19 = vector.load %arg3[%c0_11, %c2] : memref<16x128xf32, #tpu.memory_space<vmem>>, vector<16x1xf32>
    %c2_12 = arith.constant 2 : index
    %c0_13 = arith.constant 0 : index
    %20 = vector.load %arg4[%c2_12, %c0_13] : memref<128x128xf32, #tpu.memory_space<vmem>>, vector<1x128xf32>
    %21 = vector.broadcast %19 : vector<16x1xf32> to vector<16x128xf32>
    %22 = vector.broadcast %20 : vector<1x128xf32> to vector<16x128xf32>
    %23 = arith.mulf %21, %22 : vector<16x128xf32>
    %24 = arith.maximumf %17, %23 : vector<16x128xf32>
    %25 = arith.minimumf %18, %23 : vector<16x128xf32>
    %c0_14 = arith.constant 0 : index
    %c3 = arith.constant 3 : index
    %26 = vector.load %arg3[%c0_14, %c3] : memref<16x128xf32, #tpu.memory_space<vmem>>, vector<16x1xf32>
    %c3_15 = arith.constant 3 : index
    %c0_16 = arith.constant 0 : index
    %27 = vector.load %arg4[%c3_15, %c0_16] : memref<128x128xf32, #tpu.memory_space<vmem>>, vector<1x128xf32>
    %28 = vector.broadcast %26 : vector<16x1xf32> to vector<16x128xf32>
    %29 = vector.broadcast %27 : vector<1x128xf32> to vector<16x128xf32>
    %30 = arith.mulf %28, %29 : vector<16x128xf32>
    %31 = arith.maximumf %24, %30 : vector<16x128xf32>
    %32 = arith.minimumf %25, %30 : vector<16x128xf32>
    %c0_17 = arith.constant 0 : index
    %c4 = arith.constant 4 : index
    %33 = vector.load %arg3[%c0_17, %c4] : memref<16x128xf32, #tpu.memory_space<vmem>>, vector<16x1xf32>
    %c4_18 = arith.constant 4 : index
    %c0_19 = arith.constant 0 : index
    %34 = vector.load %arg4[%c4_18, %c0_19] : memref<128x128xf32, #tpu.memory_space<vmem>>, vector<1x128xf32>
    %35 = vector.broadcast %33 : vector<16x1xf32> to vector<16x128xf32>
    %36 = vector.broadcast %34 : vector<1x128xf32> to vector<16x128xf32>
    %37 = arith.mulf %35, %36 : vector<16x128xf32>
    %38 = arith.maximumf %31, %37 : vector<16x128xf32>
    %39 = arith.minimumf %32, %37 : vector<16x128xf32>
    %c0_20 = arith.constant 0 : index
    %c5 = arith.constant 5 : index
    %40 = vector.load %arg3[%c0_20, %c5] : memref<16x128xf32, #tpu.memory_space<vmem>>, vector<16x1xf32>
    %c5_21 = arith.constant 5 : index
    %c0_22 = arith.constant 0 : index
    %41 = vector.load %arg4[%c5_21, %c0_22] : memref<128x128xf32, #tpu.memory_space<vmem>>, vector<1x128xf32>
    %42 = vector.broadcast %40 : vector<16x1xf32> to vector<16x128xf32>
    %43 = vector.broadcast %41 : vector<1x128xf32> to vector<16x128xf32>
    %44 = arith.mulf %42, %43 : vector<16x128xf32>
    %45 = arith.maximumf %38, %44 : vector<16x128xf32>
    %46 = arith.minimumf %39, %44 : vector<16x128xf32>
    %c0_23 = arith.constant 0 : index
    %c6 = arith.constant 6 : index
    %47 = vector.load %arg3[%c0_23, %c6] : memref<16x128xf32, #tpu.memory_space<vmem>>, vector<16x1xf32>
    %c6_24 = arith.constant 6 : index
    %c0_25 = arith.constant 0 : index
    %48 = vector.load %arg4[%c6_24, %c0_25] : memref<128x128xf32, #tpu.memory_space<vmem>>, vector<1x128xf32>
    %49 = vector.broadcast %47 : vector<16x1xf32> to vector<16x128xf32>
    %50 = vector.broadcast %48 : vector<1x128xf32> to vector<16x128xf32>
    %51 = arith.mulf %49, %50 : vector<16x128xf32>
    %52 = arith.maximumf %45, %51 : vector<16x128xf32>
    %53 = arith.minimumf %46, %51 : vector<16x128xf32>
    %c0_26 = arith.constant 0 : index
    %c7 = arith.constant 7 : index
    %54 = vector.load %arg3[%c0_26, %c7] : memref<16x128xf32, #tpu.memory_space<vmem>>, vector<16x1xf32>
    %c7_27 = arith.constant 7 : index
    %c0_28 = arith.constant 0 : index
    %55 = vector.load %arg4[%c7_27, %c0_28] : memref<128x128xf32, #tpu.memory_space<vmem>>, vector<1x128xf32>
    %56 = vector.broadcast %54 : vector<16x1xf32> to vector<16x128xf32>
    %57 = vector.broadcast %55 : vector<1x128xf32> to vector<16x128xf32>
    %58 = arith.mulf %56, %57 : vector<16x128xf32>
    %59 = arith.maximumf %52, %58 : vector<16x128xf32>
    %60 = arith.minimumf %53, %58 : vector<16x128xf32>
    %c0_29 = arith.constant 0 : index
    %c8 = arith.constant 8 : index
    %61 = vector.load %arg3[%c0_29, %c8] : memref<16x128xf32, #tpu.memory_space<vmem>>, vector<16x1xf32>
    %c8_30 = arith.constant 8 : index
    %c0_31 = arith.constant 0 : index
    %62 = vector.load %arg4[%c8_30, %c0_31] : memref<128x128xf32, #tpu.memory_space<vmem>>, vector<1x128xf32>
    %63 = vector.broadcast %61 : vector<16x1xf32> to vector<16x128xf32>
    %64 = vector.broadcast %62 : vector<1x128xf32> to vector<16x128xf32>
    %65 = arith.mulf %63, %64 : vector<16x128xf32>
    %66 = arith.maximumf %59, %65 : vector<16x128xf32>
    %67 = arith.minimumf %60, %65 : vector<16x128xf32>
    %c0_32 = arith.constant 0 : index
    %c9 = arith.constant 9 : index
    %68 = vector.load %arg3[%c0_32, %c9] : memref<16x128xf32, #tpu.memory_space<vmem>>, vector<16x1xf32>
    %c9_33 = arith.constant 9 : index
    %c0_34 = arith.constant 0 : index
    %69 = vector.load %arg4[%c9_33, %c0_34] : memref<128x128xf32, #tpu.memory_space<vmem>>, vector<1x128xf32>
    %70 = vector.broadcast %68 : vector<16x1xf32> to vector<16x128xf32>
    %71 = vector.broadcast %69 : vector<1x128xf32> to vector<16x128xf32>
    %72 = arith.mulf %70, %71 : vector<16x128xf32>
    %73 = arith.maximumf %66, %72 : vector<16x128xf32>
    %74 = arith.minimumf %67, %72 : vector<16x128xf32>
    %c0_35 = arith.constant 0 : index
    %c10 = arith.constant 10 : index
    %75 = vector.load %arg3[%c0_35, %c10] : memref<16x128xf32, #tpu.memory_space<vmem>>, vector<16x1xf32>
    %c10_36 = arith.constant 10 : index
    %c0_37 = arith.constant 0 : index
    %76 = vector.load %arg4[%c10_36, %c0_37] : memref<128x128xf32, #tpu.memory_space<vmem>>, vector<1x128xf32>
    %77 = vector.broadcast %75 : vector<16x1xf32> to vector<16x128xf32>
    %78 = vector.broadcast %76 : vector<1x128xf32> to vector<16x128xf32>
    %79 = arith.mulf %77, %78 : vector<16x128xf32>
    %80 = arith.maximumf %73, %79 : vector<16x128xf32>
    %81 = arith.minimumf %74, %79 : vector<16x128xf32>
    %c0_38 = arith.constant 0 : index
    %c11 = arith.constant 11 : index
    %82 = vector.load %arg3[%c0_38, %c11] : memref<16x128xf32, #tpu.memory_space<vmem>>, vector<16x1xf32>
    %c11_39 = arith.constant 11 : index
    %c0_40 = arith.constant 0 : index
    %83 = vector.load %arg4[%c11_39, %c0_40] : memref<128x128xf32, #tpu.memory_space<vmem>>, vector<1x128xf32>
    %84 = vector.broadcast %82 : vector<16x1xf32> to vector<16x128xf32>
    %85 = vector.broadcast %83 : vector<1x128xf32> to vector<16x128xf32>
    %86 = arith.mulf %84, %85 : vector<16x128xf32>
    %87 = arith.maximumf %80, %86 : vector<16x128xf32>
    %88 = arith.minimumf %81, %86 : vector<16x128xf32>
    %c0_41 = arith.constant 0 : index
    %c12 = arith.constant 12 : index
    %89 = vector.load %arg3[%c0_41, %c12] : memref<16x128xf32, #tpu.memory_space<vmem>>, vector<16x1xf32>
    %c12_42 = arith.constant 12 : index
    %c0_43 = arith.constant 0 : index
    %90 = vector.load %arg4[%c12_42, %c0_43] : memref<128x128xf32, #tpu.memory_space<vmem>>, vector<1x128xf32>
    %91 = vector.broadcast %89 : vector<16x1xf32> to vector<16x128xf32>
    %92 = vector.broadcast %90 : vector<1x128xf32> to vector<16x128xf32>
    %93 = arith.mulf %91, %92 : vector<16x128xf32>
    %94 = arith.maximumf %87, %93 : vector<16x128xf32>
    %95 = arith.minimumf %88, %93 : vector<16x128xf32>
    %c0_44 = arith.constant 0 : index
    %c13 = arith.constant 13 : index
    %96 = vector.load %arg3[%c0_44, %c13] : memref<16x128xf32, #tpu.memory_space<vmem>>, vector<16x1xf32>
    %c13_45 = arith.constant 13 : index
    %c0_46 = arith.constant 0 : index
    %97 = vector.load %arg4[%c13_45, %c0_46] : memref<128x128xf32, #tpu.memory_space<vmem>>, vector<1x128xf32>
    %98 = vector.broadcast %96 : vector<16x1xf32> to vector<16x128xf32>
    %99 = vector.broadcast %97 : vector<1x128xf32> to vector<16x128xf32>
    %100 = arith.mulf %98, %99 : vector<16x128xf32>
    %101 = arith.maximumf %94, %100 : vector<16x128xf32>
    %102 = arith.minimumf %95, %100 : vector<16x128xf32>
    %c0_47 = arith.constant 0 : index
    %c14 = arith.constant 14 : index
    %103 = vector.load %arg3[%c0_47, %c14] : memref<16x128xf32, #tpu.memory_space<vmem>>, vector<16x1xf32>
    %c14_48 = arith.constant 14 : index
    %c0_49 = arith.constant 0 : index
    %104 = vector.load %arg4[%c14_48, %c0_49] : memref<128x128xf32, #tpu.memory_space<vmem>>, vector<1x128xf32>
    %105 = vector.broadcast %103 : vector<16x1xf32> to vector<16x128xf32>
    %106 = vector.broadcast %104 : vector<1x128xf32> to vector<16x128xf32>
    %107 = arith.mulf %105, %106 : vector<16x128xf32>
    %108 = arith.maximumf %101, %107 : vector<16x128xf32>
    %109 = arith.minimumf %102, %107 : vector<16x128xf32>
    %c0_50 = arith.constant 0 : index
    %c15 = arith.constant 15 : index
    %110 = vector.load %arg3[%c0_50, %c15] : memref<16x128xf32, #tpu.memory_space<vmem>>, vector<16x1xf32>
    %c15_51 = arith.constant 15 : index
    %c0_52 = arith.constant 0 : index
    %111 = vector.load %arg4[%c15_51, %c0_52] : memref<128x128xf32, #tpu.memory_space<vmem>>, vector<1x128xf32>
    %112 = vector.broadcast %110 : vector<16x1xf32> to vector<16x128xf32>
    %113 = vector.broadcast %111 : vector<1x128xf32> to vector<16x128xf32>
    %114 = arith.mulf %112, %113 : vector<16x128xf32>
    %115 = arith.maximumf %108, %114 : vector<16x128xf32>
    %116 = arith.minimumf %109, %114 : vector<16x128xf32>
    %c0_53 = arith.constant 0 : index
    %c16 = arith.constant 16 : index
    %117 = vector.load %arg3[%c0_53, %c16] : memref<16x128xf32, #tpu.memory_space<vmem>>, vector<16x1xf32>
    %c16_54 = arith.constant 16 : index
    %c0_55 = arith.constant 0 : index
    %118 = vector.load %arg4[%c16_54, %c0_55] : memref<128x128xf32, #tpu.memory_space<vmem>>, vector<1x128xf32>
    %119 = vector.broadcast %117 : vector<16x1xf32> to vector<16x128xf32>
    %120 = vector.broadcast %118 : vector<1x128xf32> to vector<16x128xf32>
    %121 = arith.mulf %119, %120 : vector<16x128xf32>
    %122 = arith.maximumf %115, %121 : vector<16x128xf32>
    %123 = arith.minimumf %116, %121 : vector<16x128xf32>
    %c0_56 = arith.constant 0 : index
    %c17 = arith.constant 17 : index
    %124 = vector.load %arg3[%c0_56, %c17] : memref<16x128xf32, #tpu.memory_space<vmem>>, vector<16x1xf32>
    %c17_57 = arith.constant 17 : index
    %c0_58 = arith.constant 0 : index
    %125 = vector.load %arg4[%c17_57, %c0_58] : memref<128x128xf32, #tpu.memory_space<vmem>>, vector<1x128xf32>
    %126 = vector.broadcast %124 : vector<16x1xf32> to vector<16x128xf32>
    %127 = vector.broadcast %125 : vector<1x128xf32> to vector<16x128xf32>
    %128 = arith.mulf %126, %127 : vector<16x128xf32>
    %129 = arith.maximumf %122, %128 : vector<16x128xf32>
    %130 = arith.minimumf %123, %128 : vector<16x128xf32>
    %c0_59 = arith.constant 0 : index
    %c18 = arith.constant 18 : index
    %131 = vector.load %arg3[%c0_59, %c18] : memref<16x128xf32, #tpu.memory_space<vmem>>, vector<16x1xf32>
    %c18_60 = arith.constant 18 : index
    %c0_61 = arith.constant 0 : index
    %132 = vector.load %arg4[%c18_60, %c0_61] : memref<128x128xf32, #tpu.memory_space<vmem>>, vector<1x128xf32>
    %133 = vector.broadcast %131 : vector<16x1xf32> to vector<16x128xf32>
    %134 = vector.broadcast %132 : vector<1x128xf32> to vector<16x128xf32>
    %135 = arith.mulf %133, %134 : vector<16x128xf32>
    %136 = arith.maximumf %129, %135 : vector<16x128xf32>
    %137 = arith.minimumf %130, %135 : vector<16x128xf32>
    %c0_62 = arith.constant 0 : index
    %c19 = arith.constant 19 : index
    %138 = vector.load %arg3[%c0_62, %c19] : memref<16x128xf32, #tpu.memory_space<vmem>>, vector<16x1xf32>
    %c19_63 = arith.constant 19 : index
    %c0_64 = arith.constant 0 : index
    %139 = vector.load %arg4[%c19_63, %c0_64] : memref<128x128xf32, #tpu.memory_space<vmem>>, vector<1x128xf32>
    %140 = vector.broadcast %138 : vector<16x1xf32> to vector<16x128xf32>
    %141 = vector.broadcast %139 : vector<1x128xf32> to vector<16x128xf32>
    %142 = arith.mulf %140, %141 : vector<16x128xf32>
    %143 = arith.maximumf %136, %142 : vector<16x128xf32>
    %144 = arith.minimumf %137, %142 : vector<16x128xf32>
    %c0_65 = arith.constant 0 : index
    %c20 = arith.constant 20 : index
    %145 = vector.load %arg3[%c0_65, %c20] : memref<16x128xf32, #tpu.memory_space<vmem>>, vector<16x1xf32>
    %c20_66 = arith.constant 20 : index
    %c0_67 = arith.constant 0 : index
    %146 = vector.load %arg4[%c20_66, %c0_67] : memref<128x128xf32, #tpu.memory_space<vmem>>, vector<1x128xf32>
    %147 = vector.broadcast %145 : vector<16x1xf32> to vector<16x128xf32>
    %148 = vector.broadcast %146 : vector<1x128xf32> to vector<16x128xf32>
    %149 = arith.mulf %147, %148 : vector<16x128xf32>
    %150 = arith.maximumf %143, %149 : vector<16x128xf32>
    %151 = arith.minimumf %144, %149 : vector<16x128xf32>
    %c0_68 = arith.constant 0 : index
    %c21 = arith.constant 21 : index
    %152 = vector.load %arg3[%c0_68, %c21] : memref<16x128xf32, #tpu.memory_space<vmem>>, vector<16x1xf32>
    %c21_69 = arith.constant 21 : index
    %c0_70 = arith.constant 0 : index
    %153 = vector.load %arg4[%c21_69, %c0_70] : memref<128x128xf32, #tpu.memory_space<vmem>>, vector<1x128xf32>
    %154 = vector.broadcast %152 : vector<16x1xf32> to vector<16x128xf32>
    %155 = vector.broadcast %153 : vector<1x128xf32> to vector<16x128xf32>
    %156 = arith.mulf %154, %155 : vector<16x128xf32>
    %157 = arith.maximumf %150, %156 : vector<16x128xf32>
    %158 = arith.minimumf %151, %156 : vector<16x128xf32>
    %c0_71 = arith.constant 0 : index
    %c22 = arith.constant 22 : index
    %159 = vector.load %arg3[%c0_71, %c22] : memref<16x128xf32, #tpu.memory_space<vmem>>, vector<16x1xf32>
    %c22_72 = arith.constant 22 : index
    %c0_73 = arith.constant 0 : index
    %160 = vector.load %arg4[%c22_72, %c0_73] : memref<128x128xf32, #tpu.memory_space<vmem>>, vector<1x128xf32>
    %161 = vector.broadcast %159 : vector<16x1xf32> to vector<16x128xf32>
    %162 = vector.broadcast %160 : vector<1x128xf32> to vector<16x128xf32>
    %163 = arith.mulf %161, %162 : vector<16x128xf32>
    %164 = arith.maximumf %157, %163 : vector<16x128xf32>
    %165 = arith.minimumf %158, %163 : vector<16x128xf32>
    %c0_74 = arith.constant 0 : index
    %c23 = arith.constant 23 : index
    %166 = vector.load %arg3[%c0_74, %c23] : memref<16x128xf32, #tpu.memory_space<vmem>>, vector<16x1xf32>
    %c23_75 = arith.constant 23 : index
    %c0_76 = arith.constant 0 : index
    %167 = vector.load %arg4[%c23_75, %c0_76] : memref<128x128xf32, #tpu.memory_space<vmem>>, vector<1x128xf32>
    %168 = vector.broadcast %166 : vector<16x1xf32> to vector<16x128xf32>
    %169 = vector.broadcast %167 : vector<1x128xf32> to vector<16x128xf32>
    %170 = arith.mulf %168, %169 : vector<16x128xf32>
    %171 = arith.maximumf %164, %170 : vector<16x128xf32>
    %172 = arith.minimumf %165, %170 : vector<16x128xf32>
    %c0_77 = arith.constant 0 : index
    %c24 = arith.constant 24 : index
    %173 = vector.load %arg3[%c0_77, %c24] : memref<16x128xf32, #tpu.memory_space<vmem>>, vector<16x1xf32>
    %c24_78 = arith.constant 24 : index
    %c0_79 = arith.constant 0 : index
    %174 = vector.load %arg4[%c24_78, %c0_79] : memref<128x128xf32, #tpu.memory_space<vmem>>, vector<1x128xf32>
    %175 = vector.broadcast %173 : vector<16x1xf32> to vector<16x128xf32>
    %176 = vector.broadcast %174 : vector<1x128xf32> to vector<16x128xf32>
    %177 = arith.mulf %175, %176 : vector<16x128xf32>
    %178 = arith.maximumf %171, %177 : vector<16x128xf32>
    %179 = arith.minimumf %172, %177 : vector<16x128xf32>
    %c0_80 = arith.constant 0 : index
    %c25 = arith.constant 25 : index
    %180 = vector.load %arg3[%c0_80, %c25] : memref<16x128xf32, #tpu.memory_space<vmem>>, vector<16x1xf32>
    %c25_81 = arith.constant 25 : index
    %c0_82 = arith.constant 0 : index
    %181 = vector.load %arg4[%c25_81, %c0_82] : memref<128x128xf32, #tpu.memory_space<vmem>>, vector<1x128xf32>
    %182 = vector.broadcast %180 : vector<16x1xf32> to vector<16x128xf32>
    %183 = vector.broadcast %181 : vector<1x128xf32> to vector<16x128xf32>
    %184 = arith.mulf %182, %183 : vector<16x128xf32>
    %185 = arith.maximumf %178, %184 : vector<16x128xf32>
    %186 = arith.minimumf %179, %184 : vector<16x128xf32>
    %c0_83 = arith.constant 0 : index
    %c26 = arith.constant 26 : index
    %187 = vector.load %arg3[%c0_83, %c26] : memref<16x128xf32, #tpu.memory_space<vmem>>, vector<16x1xf32>
    %c26_84 = arith.constant 26 : index
    %c0_85 = arith.constant 0 : index
    %188 = vector.load %arg4[%c26_84, %c0_85] : memref<128x128xf32, #tpu.memory_space<vmem>>, vector<1x128xf32>
    %189 = vector.broadcast %187 : vector<16x1xf32> to vector<16x128xf32>
    %190 = vector.broadcast %188 : vector<1x128xf32> to vector<16x128xf32>
    %191 = arith.mulf %189, %190 : vector<16x128xf32>
    %192 = arith.maximumf %185, %191 : vector<16x128xf32>
    %193 = arith.minimumf %186, %191 : vector<16x128xf32>
    %c0_86 = arith.constant 0 : index
    %c27 = arith.constant 27 : index
    %194 = vector.load %arg3[%c0_86, %c27] : memref<16x128xf32, #tpu.memory_space<vmem>>, vector<16x1xf32>
    %c27_87 = arith.constant 27 : index
    %c0_88 = arith.constant 0 : index
    %195 = vector.load %arg4[%c27_87, %c0_88] : memref<128x128xf32, #tpu.memory_space<vmem>>, vector<1x128xf32>
    %196 = vector.broadcast %194 : vector<16x1xf32> to vector<16x128xf32>
    %197 = vector.broadcast %195 : vector<1x128xf32> to vector<16x128xf32>
    %198 = arith.mulf %196, %197 : vector<16x128xf32>
    %199 = arith.maximumf %192, %198 : vector<16x128xf32>
    %200 = arith.minimumf %193, %198 : vector<16x128xf32>
    %c0_89 = arith.constant 0 : index
    %c28 = arith.constant 28 : index
    %201 = vector.load %arg3[%c0_89, %c28] : memref<16x128xf32, #tpu.memory_space<vmem>>, vector<16x1xf32>
    %c28_90 = arith.constant 28 : index
    %c0_91 = arith.constant 0 : index
    %202 = vector.load %arg4[%c28_90, %c0_91] : memref<128x128xf32, #tpu.memory_space<vmem>>, vector<1x128xf32>
    %203 = vector.broadcast %201 : vector<16x1xf32> to vector<16x128xf32>
    %204 = vector.broadcast %202 : vector<1x128xf32> to vector<16x128xf32>
    %205 = arith.mulf %203, %204 : vector<16x128xf32>
    %206 = arith.maximumf %199, %205 : vector<16x128xf32>
    %207 = arith.minimumf %200, %205 : vector<16x128xf32>
    %c0_92 = arith.constant 0 : index
    %c29 = arith.constant 29 : index
    %208 = vector.load %arg3[%c0_92, %c29] : memref<16x128xf32, #tpu.memory_space<vmem>>, vector<16x1xf32>
    %c29_93 = arith.constant 29 : index
    %c0_94 = arith.constant 0 : index
    %209 = vector.load %arg4[%c29_93, %c0_94] : memref<128x128xf32, #tpu.memory_space<vmem>>, vector<1x128xf32>
    %210 = vector.broadcast %208 : vector<16x1xf32> to vector<16x128xf32>
    %211 = vector.broadcast %209 : vector<1x128xf32> to vector<16x128xf32>
    %212 = arith.mulf %210, %211 : vector<16x128xf32>
    %213 = arith.maximumf %206, %212 : vector<16x128xf32>
    %214 = arith.minimumf %207, %212 : vector<16x128xf32>
    %c0_95 = arith.constant 0 : index
    %c30 = arith.constant 30 : index
    %215 = vector.load %arg3[%c0_95, %c30] : memref<16x128xf32, #tpu.memory_space<vmem>>, vector<16x1xf32>
    %c30_96 = arith.constant 30 : index
    %c0_97 = arith.constant 0 : index
    %216 = vector.load %arg4[%c30_96, %c0_97] : memref<128x128xf32, #tpu.memory_space<vmem>>, vector<1x128xf32>
    %217 = vector.broadcast %215 : vector<16x1xf32> to vector<16x128xf32>
    %218 = vector.broadcast %216 : vector<1x128xf32> to vector<16x128xf32>
    %219 = arith.mulf %217, %218 : vector<16x128xf32>
    %220 = arith.maximumf %213, %219 : vector<16x128xf32>
    %221 = arith.minimumf %214, %219 : vector<16x128xf32>
    %c0_98 = arith.constant 0 : index
    %c31 = arith.constant 31 : index
    %222 = vector.load %arg3[%c0_98, %c31] : memref<16x128xf32, #tpu.memory_space<vmem>>, vector<16x1xf32>
    %c31_99 = arith.constant 31 : index
    %c0_100 = arith.constant 0 : index
    %223 = vector.load %arg4[%c31_99, %c0_100] : memref<128x128xf32, #tpu.memory_space<vmem>>, vector<1x128xf32>
    %224 = vector.broadcast %222 : vector<16x1xf32> to vector<16x128xf32>
    %225 = vector.broadcast %223 : vector<1x128xf32> to vector<16x128xf32>
    %226 = arith.mulf %224, %225 : vector<16x128xf32>
    %227 = arith.maximumf %220, %226 : vector<16x128xf32>
    %228 = arith.minimumf %221, %226 : vector<16x128xf32>
    %c0_101 = arith.constant 0 : index
    %c32 = arith.constant 32 : index
    %229 = vector.load %arg3[%c0_101, %c32] : memref<16x128xf32, #tpu.memory_space<vmem>>, vector<16x1xf32>
    %c32_102 = arith.constant 32 : index
    %c0_103 = arith.constant 0 : index
    %230 = vector.load %arg4[%c32_102, %c0_103] : memref<128x128xf32, #tpu.memory_space<vmem>>, vector<1x128xf32>
    %231 = vector.broadcast %229 : vector<16x1xf32> to vector<16x128xf32>
    %232 = vector.broadcast %230 : vector<1x128xf32> to vector<16x128xf32>
    %233 = arith.mulf %231, %232 : vector<16x128xf32>
    %234 = arith.maximumf %227, %233 : vector<16x128xf32>
    %235 = arith.minimumf %228, %233 : vector<16x128xf32>
    %c0_104 = arith.constant 0 : index
    %c33 = arith.constant 33 : index
    %236 = vector.load %arg3[%c0_104, %c33] : memref<16x128xf32, #tpu.memory_space<vmem>>, vector<16x1xf32>
    %c33_105 = arith.constant 33 : index
    %c0_106 = arith.constant 0 : index
    %237 = vector.load %arg4[%c33_105, %c0_106] : memref<128x128xf32, #tpu.memory_space<vmem>>, vector<1x128xf32>
    %238 = vector.broadcast %236 : vector<16x1xf32> to vector<16x128xf32>
    %239 = vector.broadcast %237 : vector<1x128xf32> to vector<16x128xf32>
    %240 = arith.mulf %238, %239 : vector<16x128xf32>
    %241 = arith.maximumf %234, %240 : vector<16x128xf32>
    %242 = arith.minimumf %235, %240 : vector<16x128xf32>
    %c0_107 = arith.constant 0 : index
    %c34 = arith.constant 34 : index
    %243 = vector.load %arg3[%c0_107, %c34] : memref<16x128xf32, #tpu.memory_space<vmem>>, vector<16x1xf32>
    %c34_108 = arith.constant 34 : index
    %c0_109 = arith.constant 0 : index
    %244 = vector.load %arg4[%c34_108, %c0_109] : memref<128x128xf32, #tpu.memory_space<vmem>>, vector<1x128xf32>
    %245 = vector.broadcast %243 : vector<16x1xf32> to vector<16x128xf32>
    %246 = vector.broadcast %244 : vector<1x128xf32> to vector<16x128xf32>
    %247 = arith.mulf %245, %246 : vector<16x128xf32>
    %248 = arith.maximumf %241, %247 : vector<16x128xf32>
    %249 = arith.minimumf %242, %247 : vector<16x128xf32>
    %c0_110 = arith.constant 0 : index
    %c35 = arith.constant 35 : index
    %250 = vector.load %arg3[%c0_110, %c35] : memref<16x128xf32, #tpu.memory_space<vmem>>, vector<16x1xf32>
    %c35_111 = arith.constant 35 : index
    %c0_112 = arith.constant 0 : index
    %251 = vector.load %arg4[%c35_111, %c0_112] : memref<128x128xf32, #tpu.memory_space<vmem>>, vector<1x128xf32>
    %252 = vector.broadcast %250 : vector<16x1xf32> to vector<16x128xf32>
    %253 = vector.broadcast %251 : vector<1x128xf32> to vector<16x128xf32>
    %254 = arith.mulf %252, %253 : vector<16x128xf32>
    %255 = arith.maximumf %248, %254 : vector<16x128xf32>
    %256 = arith.minimumf %249, %254 : vector<16x128xf32>
    %c0_113 = arith.constant 0 : index
    %c36 = arith.constant 36 : index
    %257 = vector.load %arg3[%c0_113, %c36] : memref<16x128xf32, #tpu.memory_space<vmem>>, vector<16x1xf32>
    %c36_114 = arith.constant 36 : index
    %c0_115 = arith.constant 0 : index
    %258 = vector.load %arg4[%c36_114, %c0_115] : memref<128x128xf32, #tpu.memory_space<vmem>>, vector<1x128xf32>
    %259 = vector.broadcast %257 : vector<16x1xf32> to vector<16x128xf32>
    %260 = vector.broadcast %258 : vector<1x128xf32> to vector<16x128xf32>
    %261 = arith.mulf %259, %260 : vector<16x128xf32>
    %262 = arith.maximumf %255, %261 : vector<16x128xf32>
    %263 = arith.minimumf %256, %261 : vector<16x128xf32>
    %c0_116 = arith.constant 0 : index
    %c37 = arith.constant 37 : index
    %264 = vector.load %arg3[%c0_116, %c37] : memref<16x128xf32, #tpu.memory_space<vmem>>, vector<16x1xf32>
    %c37_117 = arith.constant 37 : index
    %c0_118 = arith.constant 0 : index
    %265 = vector.load %arg4[%c37_117, %c0_118] : memref<128x128xf32, #tpu.memory_space<vmem>>, vector<1x128xf32>
    %266 = vector.broadcast %264 : vector<16x1xf32> to vector<16x128xf32>
    %267 = vector.broadcast %265 : vector<1x128xf32> to vector<16x128xf32>
    %268 = arith.mulf %266, %267 : vector<16x128xf32>
    %269 = arith.maximumf %262, %268 : vector<16x128xf32>
    %270 = arith.minimumf %263, %268 : vector<16x128xf32>
    %c0_119 = arith.constant 0 : index
    %c38 = arith.constant 38 : index
    %271 = vector.load %arg3[%c0_119, %c38] : memref<16x128xf32, #tpu.memory_space<vmem>>, vector<16x1xf32>
    %c38_120 = arith.constant 38 : index
    %c0_121 = arith.constant 0 : index
    %272 = vector.load %arg4[%c38_120, %c0_121] : memref<128x128xf32, #tpu.memory_space<vmem>>, vector<1x128xf32>
    %273 = vector.broadcast %271 : vector<16x1xf32> to vector<16x128xf32>
    %274 = vector.broadcast %272 : vector<1x128xf32> to vector<16x128xf32>
    %275 = arith.mulf %273, %274 : vector<16x128xf32>
    %276 = arith.maximumf %269, %275 : vector<16x128xf32>
    %277 = arith.minimumf %270, %275 : vector<16x128xf32>
    %c0_122 = arith.constant 0 : index
    %c39 = arith.constant 39 : index
    %278 = vector.load %arg3[%c0_122, %c39] : memref<16x128xf32, #tpu.memory_space<vmem>>, vector<16x1xf32>
    %c39_123 = arith.constant 39 : index
    %c0_124 = arith.constant 0 : index
    %279 = vector.load %arg4[%c39_123, %c0_124] : memref<128x128xf32, #tpu.memory_space<vmem>>, vector<1x128xf32>
    %280 = vector.broadcast %278 : vector<16x1xf32> to vector<16x128xf32>
    %281 = vector.broadcast %279 : vector<1x128xf32> to vector<16x128xf32>
    %282 = arith.mulf %280, %281 : vector<16x128xf32>
    %283 = arith.maximumf %276, %282 : vector<16x128xf32>
    %284 = arith.minimumf %277, %282 : vector<16x128xf32>
    %c0_125 = arith.constant 0 : index
    %c40 = arith.constant 40 : index
    %285 = vector.load %arg3[%c0_125, %c40] : memref<16x128xf32, #tpu.memory_space<vmem>>, vector<16x1xf32>
    %c40_126 = arith.constant 40 : index
    %c0_127 = arith.constant 0 : index
    %286 = vector.load %arg4[%c40_126, %c0_127] : memref<128x128xf32, #tpu.memory_space<vmem>>, vector<1x128xf32>
    %287 = vector.broadcast %285 : vector<16x1xf32> to vector<16x128xf32>
    %288 = vector.broadcast %286 : vector<1x128xf32> to vector<16x128xf32>
    %289 = arith.mulf %287, %288 : vector<16x128xf32>
    %290 = arith.maximumf %283, %289 : vector<16x128xf32>
    %291 = arith.minimumf %284, %289 : vector<16x128xf32>
    %c0_128 = arith.constant 0 : index
    %c41 = arith.constant 41 : index
    %292 = vector.load %arg3[%c0_128, %c41] : memref<16x128xf32, #tpu.memory_space<vmem>>, vector<16x1xf32>
    %c41_129 = arith.constant 41 : index
    %c0_130 = arith.constant 0 : index
    %293 = vector.load %arg4[%c41_129, %c0_130] : memref<128x128xf32, #tpu.memory_space<vmem>>, vector<1x128xf32>
    %294 = vector.broadcast %292 : vector<16x1xf32> to vector<16x128xf32>
    %295 = vector.broadcast %293 : vector<1x128xf32> to vector<16x128xf32>
    %296 = arith.mulf %294, %295 : vector<16x128xf32>
    %297 = arith.maximumf %290, %296 : vector<16x128xf32>
    %298 = arith.minimumf %291, %296 : vector<16x128xf32>
    %c0_131 = arith.constant 0 : index
    %c42 = arith.constant 42 : index
    %299 = vector.load %arg3[%c0_131, %c42] : memref<16x128xf32, #tpu.memory_space<vmem>>, vector<16x1xf32>
    %c42_132 = arith.constant 42 : index
    %c0_133 = arith.constant 0 : index
    %300 = vector.load %arg4[%c42_132, %c0_133] : memref<128x128xf32, #tpu.memory_space<vmem>>, vector<1x128xf32>
    %301 = vector.broadcast %299 : vector<16x1xf32> to vector<16x128xf32>
    %302 = vector.broadcast %300 : vector<1x128xf32> to vector<16x128xf32>
    %303 = arith.mulf %301, %302 : vector<16x128xf32>
    %304 = arith.maximumf %297, %303 : vector<16x128xf32>
    %305 = arith.minimumf %298, %303 : vector<16x128xf32>
    %c0_134 = arith.constant 0 : index
    %c43 = arith.constant 43 : index
    %306 = vector.load %arg3[%c0_134, %c43] : memref<16x128xf32, #tpu.memory_space<vmem>>, vector<16x1xf32>
    %c43_135 = arith.constant 43 : index
    %c0_136 = arith.constant 0 : index
    %307 = vector.load %arg4[%c43_135, %c0_136] : memref<128x128xf32, #tpu.memory_space<vmem>>, vector<1x128xf32>
    %308 = vector.broadcast %306 : vector<16x1xf32> to vector<16x128xf32>
    %309 = vector.broadcast %307 : vector<1x128xf32> to vector<16x128xf32>
    %310 = arith.mulf %308, %309 : vector<16x128xf32>
    %311 = arith.maximumf %304, %310 : vector<16x128xf32>
    %312 = arith.minimumf %305, %310 : vector<16x128xf32>
    %c0_137 = arith.constant 0 : index
    %c44 = arith.constant 44 : index
    %313 = vector.load %arg3[%c0_137, %c44] : memref<16x128xf32, #tpu.memory_space<vmem>>, vector<16x1xf32>
    %c44_138 = arith.constant 44 : index
    %c0_139 = arith.constant 0 : index
    %314 = vector.load %arg4[%c44_138, %c0_139] : memref<128x128xf32, #tpu.memory_space<vmem>>, vector<1x128xf32>
    %315 = vector.broadcast %313 : vector<16x1xf32> to vector<16x128xf32>
    %316 = vector.broadcast %314 : vector<1x128xf32> to vector<16x128xf32>
    %317 = arith.mulf %315, %316 : vector<16x128xf32>
    %318 = arith.maximumf %311, %317 : vector<16x128xf32>
    %319 = arith.minimumf %312, %317 : vector<16x128xf32>
    %c0_140 = arith.constant 0 : index
    %c45 = arith.constant 45 : index
    %320 = vector.load %arg3[%c0_140, %c45] : memref<16x128xf32, #tpu.memory_space<vmem>>, vector<16x1xf32>
    %c45_141 = arith.constant 45 : index
    %c0_142 = arith.constant 0 : index
    %321 = vector.load %arg4[%c45_141, %c0_142] : memref<128x128xf32, #tpu.memory_space<vmem>>, vector<1x128xf32>
    %322 = vector.broadcast %320 : vector<16x1xf32> to vector<16x128xf32>
    %323 = vector.broadcast %321 : vector<1x128xf32> to vector<16x128xf32>
    %324 = arith.mulf %322, %323 : vector<16x128xf32>
    %325 = arith.maximumf %318, %324 : vector<16x128xf32>
    %326 = arith.minimumf %319, %324 : vector<16x128xf32>
    %c0_143 = arith.constant 0 : index
    %c46 = arith.constant 46 : index
    %327 = vector.load %arg3[%c0_143, %c46] : memref<16x128xf32, #tpu.memory_space<vmem>>, vector<16x1xf32>
    %c46_144 = arith.constant 46 : index
    %c0_145 = arith.constant 0 : index
    %328 = vector.load %arg4[%c46_144, %c0_145] : memref<128x128xf32, #tpu.memory_space<vmem>>, vector<1x128xf32>
    %329 = vector.broadcast %327 : vector<16x1xf32> to vector<16x128xf32>
    %330 = vector.broadcast %328 : vector<1x128xf32> to vector<16x128xf32>
    %331 = arith.mulf %329, %330 : vector<16x128xf32>
    %332 = arith.maximumf %325, %331 : vector<16x128xf32>
    %333 = arith.minimumf %326, %331 : vector<16x128xf32>
    %c0_146 = arith.constant 0 : index
    %c47 = arith.constant 47 : index
    %334 = vector.load %arg3[%c0_146, %c47] : memref<16x128xf32, #tpu.memory_space<vmem>>, vector<16x1xf32>
    %c47_147 = arith.constant 47 : index
    %c0_148 = arith.constant 0 : index
    %335 = vector.load %arg4[%c47_147, %c0_148] : memref<128x128xf32, #tpu.memory_space<vmem>>, vector<1x128xf32>
    %336 = vector.broadcast %334 : vector<16x1xf32> to vector<16x128xf32>
    %337 = vector.broadcast %335 : vector<1x128xf32> to vector<16x128xf32>
    %338 = arith.mulf %336, %337 : vector<16x128xf32>
    %339 = arith.maximumf %332, %338 : vector<16x128xf32>
    %340 = arith.minimumf %333, %338 : vector<16x128xf32>
    %c0_149 = arith.constant 0 : index
    %c48 = arith.constant 48 : index
    %341 = vector.load %arg3[%c0_149, %c48] : memref<16x128xf32, #tpu.memory_space<vmem>>, vector<16x1xf32>
    %c48_150 = arith.constant 48 : index
    %c0_151 = arith.constant 0 : index
    %342 = vector.load %arg4[%c48_150, %c0_151] : memref<128x128xf32, #tpu.memory_space<vmem>>, vector<1x128xf32>
    %343 = vector.broadcast %341 : vector<16x1xf32> to vector<16x128xf32>
    %344 = vector.broadcast %342 : vector<1x128xf32> to vector<16x128xf32>
    %345 = arith.mulf %343, %344 : vector<16x128xf32>
    %346 = arith.maximumf %339, %345 : vector<16x128xf32>
    %347 = arith.minimumf %340, %345 : vector<16x128xf32>
    %c0_152 = arith.constant 0 : index
    %c49 = arith.constant 49 : index
    %348 = vector.load %arg3[%c0_152, %c49] : memref<16x128xf32, #tpu.memory_space<vmem>>, vector<16x1xf32>
    %c49_153 = arith.constant 49 : index
    %c0_154 = arith.constant 0 : index
    %349 = vector.load %arg4[%c49_153, %c0_154] : memref<128x128xf32, #tpu.memory_space<vmem>>, vector<1x128xf32>
    %350 = vector.broadcast %348 : vector<16x1xf32> to vector<16x128xf32>
    %351 = vector.broadcast %349 : vector<1x128xf32> to vector<16x128xf32>
    %352 = arith.mulf %350, %351 : vector<16x128xf32>
    %353 = arith.maximumf %346, %352 : vector<16x128xf32>
    %354 = arith.minimumf %347, %352 : vector<16x128xf32>
    %c0_155 = arith.constant 0 : index
    %c50 = arith.constant 50 : index
    %355 = vector.load %arg3[%c0_155, %c50] : memref<16x128xf32, #tpu.memory_space<vmem>>, vector<16x1xf32>
    %c50_156 = arith.constant 50 : index
    %c0_157 = arith.constant 0 : index
    %356 = vector.load %arg4[%c50_156, %c0_157] : memref<128x128xf32, #tpu.memory_space<vmem>>, vector<1x128xf32>
    %357 = vector.broadcast %355 : vector<16x1xf32> to vector<16x128xf32>
    %358 = vector.broadcast %356 : vector<1x128xf32> to vector<16x128xf32>
    %359 = arith.mulf %357, %358 : vector<16x128xf32>
    %360 = arith.maximumf %353, %359 : vector<16x128xf32>
    %361 = arith.minimumf %354, %359 : vector<16x128xf32>
    %c0_158 = arith.constant 0 : index
    %c51 = arith.constant 51 : index
    %362 = vector.load %arg3[%c0_158, %c51] : memref<16x128xf32, #tpu.memory_space<vmem>>, vector<16x1xf32>
    %c51_159 = arith.constant 51 : index
    %c0_160 = arith.constant 0 : index
    %363 = vector.load %arg4[%c51_159, %c0_160] : memref<128x128xf32, #tpu.memory_space<vmem>>, vector<1x128xf32>
    %364 = vector.broadcast %362 : vector<16x1xf32> to vector<16x128xf32>
    %365 = vector.broadcast %363 : vector<1x128xf32> to vector<16x128xf32>
    %366 = arith.mulf %364, %365 : vector<16x128xf32>
    %367 = arith.maximumf %360, %366 : vector<16x128xf32>
    %368 = arith.minimumf %361, %366 : vector<16x128xf32>
    %c0_161 = arith.constant 0 : index
    %c52 = arith.constant 52 : index
    %369 = vector.load %arg3[%c0_161, %c52] : memref<16x128xf32, #tpu.memory_space<vmem>>, vector<16x1xf32>
    %c52_162 = arith.constant 52 : index
    %c0_163 = arith.constant 0 : index
    %370 = vector.load %arg4[%c52_162, %c0_163] : memref<128x128xf32, #tpu.memory_space<vmem>>, vector<1x128xf32>
    %371 = vector.broadcast %369 : vector<16x1xf32> to vector<16x128xf32>
    %372 = vector.broadcast %370 : vector<1x128xf32> to vector<16x128xf32>
    %373 = arith.mulf %371, %372 : vector<16x128xf32>
    %374 = arith.maximumf %367, %373 : vector<16x128xf32>
    %375 = arith.minimumf %368, %373 : vector<16x128xf32>
    %c0_164 = arith.constant 0 : index
    %c53 = arith.constant 53 : index
    %376 = vector.load %arg3[%c0_164, %c53] : memref<16x128xf32, #tpu.memory_space<vmem>>, vector<16x1xf32>
    %c53_165 = arith.constant 53 : index
    %c0_166 = arith.constant 0 : index
    %377 = vector.load %arg4[%c53_165, %c0_166] : memref<128x128xf32, #tpu.memory_space<vmem>>, vector<1x128xf32>
    %378 = vector.broadcast %376 : vector<16x1xf32> to vector<16x128xf32>
    %379 = vector.broadcast %377 : vector<1x128xf32> to vector<16x128xf32>
    %380 = arith.mulf %378, %379 : vector<16x128xf32>
    %381 = arith.maximumf %374, %380 : vector<16x128xf32>
    %382 = arith.minimumf %375, %380 : vector<16x128xf32>
    %c0_167 = arith.constant 0 : index
    %c54 = arith.constant 54 : index
    %383 = vector.load %arg3[%c0_167, %c54] : memref<16x128xf32, #tpu.memory_space<vmem>>, vector<16x1xf32>
    %c54_168 = arith.constant 54 : index
    %c0_169 = arith.constant 0 : index
    %384 = vector.load %arg4[%c54_168, %c0_169] : memref<128x128xf32, #tpu.memory_space<vmem>>, vector<1x128xf32>
    %385 = vector.broadcast %383 : vector<16x1xf32> to vector<16x128xf32>
    %386 = vector.broadcast %384 : vector<1x128xf32> to vector<16x128xf32>
    %387 = arith.mulf %385, %386 : vector<16x128xf32>
    %388 = arith.maximumf %381, %387 : vector<16x128xf32>
    %389 = arith.minimumf %382, %387 : vector<16x128xf32>
    %c0_170 = arith.constant 0 : index
    %c55 = arith.constant 55 : index
    %390 = vector.load %arg3[%c0_170, %c55] : memref<16x128xf32, #tpu.memory_space<vmem>>, vector<16x1xf32>
    %c55_171 = arith.constant 55 : index
    %c0_172 = arith.constant 0 : index
    %391 = vector.load %arg4[%c55_171, %c0_172] : memref<128x128xf32, #tpu.memory_space<vmem>>, vector<1x128xf32>
    %392 = vector.broadcast %390 : vector<16x1xf32> to vector<16x128xf32>
    %393 = vector.broadcast %391 : vector<1x128xf32> to vector<16x128xf32>
    %394 = arith.mulf %392, %393 : vector<16x128xf32>
    %395 = arith.maximumf %388, %394 : vector<16x128xf32>
    %396 = arith.minimumf %389, %394 : vector<16x128xf32>
    %c0_173 = arith.constant 0 : index
    %c56 = arith.constant 56 : index
    %397 = vector.load %arg3[%c0_173, %c56] : memref<16x128xf32, #tpu.memory_space<vmem>>, vector<16x1xf32>
    %c56_174 = arith.constant 56 : index
    %c0_175 = arith.constant 0 : index
    %398 = vector.load %arg4[%c56_174, %c0_175] : memref<128x128xf32, #tpu.memory_space<vmem>>, vector<1x128xf32>
    %399 = vector.broadcast %397 : vector<16x1xf32> to vector<16x128xf32>
    %400 = vector.broadcast %398 : vector<1x128xf32> to vector<16x128xf32>
    %401 = arith.mulf %399, %400 : vector<16x128xf32>
    %402 = arith.maximumf %395, %401 : vector<16x128xf32>
    %403 = arith.minimumf %396, %401 : vector<16x128xf32>
    %c0_176 = arith.constant 0 : index
    %c57 = arith.constant 57 : index
    %404 = vector.load %arg3[%c0_176, %c57] : memref<16x128xf32, #tpu.memory_space<vmem>>, vector<16x1xf32>
    %c57_177 = arith.constant 57 : index
    %c0_178 = arith.constant 0 : index
    %405 = vector.load %arg4[%c57_177, %c0_178] : memref<128x128xf32, #tpu.memory_space<vmem>>, vector<1x128xf32>
    %406 = vector.broadcast %404 : vector<16x1xf32> to vector<16x128xf32>
    %407 = vector.broadcast %405 : vector<1x128xf32> to vector<16x128xf32>
    %408 = arith.mulf %406, %407 : vector<16x128xf32>
    %409 = arith.maximumf %402, %408 : vector<16x128xf32>
    %410 = arith.minimumf %403, %408 : vector<16x128xf32>
    %c0_179 = arith.constant 0 : index
    %c58 = arith.constant 58 : index
    %411 = vector.load %arg3[%c0_179, %c58] : memref<16x128xf32, #tpu.memory_space<vmem>>, vector<16x1xf32>
    %c58_180 = arith.constant 58 : index
    %c0_181 = arith.constant 0 : index
    %412 = vector.load %arg4[%c58_180, %c0_181] : memref<128x128xf32, #tpu.memory_space<vmem>>, vector<1x128xf32>
    %413 = vector.broadcast %411 : vector<16x1xf32> to vector<16x128xf32>
    %414 = vector.broadcast %412 : vector<1x128xf32> to vector<16x128xf32>
    %415 = arith.mulf %413, %414 : vector<16x128xf32>
    %416 = arith.maximumf %409, %415 : vector<16x128xf32>
    %417 = arith.minimumf %410, %415 : vector<16x128xf32>
    %c0_182 = arith.constant 0 : index
    %c59 = arith.constant 59 : index
    %418 = vector.load %arg3[%c0_182, %c59] : memref<16x128xf32, #tpu.memory_space<vmem>>, vector<16x1xf32>
    %c59_183 = arith.constant 59 : index
    %c0_184 = arith.constant 0 : index
    %419 = vector.load %arg4[%c59_183, %c0_184] : memref<128x128xf32, #tpu.memory_space<vmem>>, vector<1x128xf32>
    %420 = vector.broadcast %418 : vector<16x1xf32> to vector<16x128xf32>
    %421 = vector.broadcast %419 : vector<1x128xf32> to vector<16x128xf32>
    %422 = arith.mulf %420, %421 : vector<16x128xf32>
    %423 = arith.maximumf %416, %422 : vector<16x128xf32>
    %424 = arith.minimumf %417, %422 : vector<16x128xf32>
    %c0_185 = arith.constant 0 : index
    %c60 = arith.constant 60 : index
    %425 = vector.load %arg3[%c0_185, %c60] : memref<16x128xf32, #tpu.memory_space<vmem>>, vector<16x1xf32>
    %c60_186 = arith.constant 60 : index
    %c0_187 = arith.constant 0 : index
    %426 = vector.load %arg4[%c60_186, %c0_187] : memref<128x128xf32, #tpu.memory_space<vmem>>, vector<1x128xf32>
    %427 = vector.broadcast %425 : vector<16x1xf32> to vector<16x128xf32>
    %428 = vector.broadcast %426 : vector<1x128xf32> to vector<16x128xf32>
    %429 = arith.mulf %427, %428 : vector<16x128xf32>
    %430 = arith.maximumf %423, %429 : vector<16x128xf32>
    %431 = arith.minimumf %424, %429 : vector<16x128xf32>
    %c0_188 = arith.constant 0 : index
    %c61 = arith.constant 61 : index
    %432 = vector.load %arg3[%c0_188, %c61] : memref<16x128xf32, #tpu.memory_space<vmem>>, vector<16x1xf32>
    %c61_189 = arith.constant 61 : index
    %c0_190 = arith.constant 0 : index
    %433 = vector.load %arg4[%c61_189, %c0_190] : memref<128x128xf32, #tpu.memory_space<vmem>>, vector<1x128xf32>
    %434 = vector.broadcast %432 : vector<16x1xf32> to vector<16x128xf32>
    %435 = vector.broadcast %433 : vector<1x128xf32> to vector<16x128xf32>
    %436 = arith.mulf %434, %435 : vector<16x128xf32>
    %437 = arith.maximumf %430, %436 : vector<16x128xf32>
    %438 = arith.minimumf %431, %436 : vector<16x128xf32>
    %c0_191 = arith.constant 0 : index
    %c62 = arith.constant 62 : index
    %439 = vector.load %arg3[%c0_191, %c62] : memref<16x128xf32, #tpu.memory_space<vmem>>, vector<16x1xf32>
    %c62_192 = arith.constant 62 : index
    %c0_193 = arith.constant 0 : index
    %440 = vector.load %arg4[%c62_192, %c0_193] : memref<128x128xf32, #tpu.memory_space<vmem>>, vector<1x128xf32>
    %441 = vector.broadcast %439 : vector<16x1xf32> to vector<16x128xf32>
    %442 = vector.broadcast %440 : vector<1x128xf32> to vector<16x128xf32>
    %443 = arith.mulf %441, %442 : vector<16x128xf32>
    %444 = arith.maximumf %437, %443 : vector<16x128xf32>
    %445 = arith.minimumf %438, %443 : vector<16x128xf32>
    %c0_194 = arith.constant 0 : index
    %c63 = arith.constant 63 : index
    %446 = vector.load %arg3[%c0_194, %c63] : memref<16x128xf32, #tpu.memory_space<vmem>>, vector<16x1xf32>
    %c63_195 = arith.constant 63 : index
    %c0_196 = arith.constant 0 : index
    %447 = vector.load %arg4[%c63_195, %c0_196] : memref<128x128xf32, #tpu.memory_space<vmem>>, vector<1x128xf32>
    %448 = vector.broadcast %446 : vector<16x1xf32> to vector<16x128xf32>
    %449 = vector.broadcast %447 : vector<1x128xf32> to vector<16x128xf32>
    %450 = arith.mulf %448, %449 : vector<16x128xf32>
    %451 = arith.maximumf %444, %450 : vector<16x128xf32>
    %452 = arith.minimumf %445, %450 : vector<16x128xf32>
    %c0_197 = arith.constant 0 : index
    %c64 = arith.constant 64 : index
    %453 = vector.load %arg3[%c0_197, %c64] : memref<16x128xf32, #tpu.memory_space<vmem>>, vector<16x1xf32>
    %c64_198 = arith.constant 64 : index
    %c0_199 = arith.constant 0 : index
    %454 = vector.load %arg4[%c64_198, %c0_199] : memref<128x128xf32, #tpu.memory_space<vmem>>, vector<1x128xf32>
    %455 = vector.broadcast %453 : vector<16x1xf32> to vector<16x128xf32>
    %456 = vector.broadcast %454 : vector<1x128xf32> to vector<16x128xf32>
    %457 = arith.mulf %455, %456 : vector<16x128xf32>
    %458 = arith.maximumf %451, %457 : vector<16x128xf32>
    %459 = arith.minimumf %452, %457 : vector<16x128xf32>
    %c0_200 = arith.constant 0 : index
    %c65 = arith.constant 65 : index
    %460 = vector.load %arg3[%c0_200, %c65] : memref<16x128xf32, #tpu.memory_space<vmem>>, vector<16x1xf32>
    %c65_201 = arith.constant 65 : index
    %c0_202 = arith.constant 0 : index
    %461 = vector.load %arg4[%c65_201, %c0_202] : memref<128x128xf32, #tpu.memory_space<vmem>>, vector<1x128xf32>
    %462 = vector.broadcast %460 : vector<16x1xf32> to vector<16x128xf32>
    %463 = vector.broadcast %461 : vector<1x128xf32> to vector<16x128xf32>
    %464 = arith.mulf %462, %463 : vector<16x128xf32>
    %465 = arith.maximumf %458, %464 : vector<16x128xf32>
    %466 = arith.minimumf %459, %464 : vector<16x128xf32>
    %c0_203 = arith.constant 0 : index
    %c66 = arith.constant 66 : index
    %467 = vector.load %arg3[%c0_203, %c66] : memref<16x128xf32, #tpu.memory_space<vmem>>, vector<16x1xf32>
    %c66_204 = arith.constant 66 : index
    %c0_205 = arith.constant 0 : index
    %468 = vector.load %arg4[%c66_204, %c0_205] : memref<128x128xf32, #tpu.memory_space<vmem>>, vector<1x128xf32>
    %469 = vector.broadcast %467 : vector<16x1xf32> to vector<16x128xf32>
    %470 = vector.broadcast %468 : vector<1x128xf32> to vector<16x128xf32>
    %471 = arith.mulf %469, %470 : vector<16x128xf32>
    %472 = arith.maximumf %465, %471 : vector<16x128xf32>
    %473 = arith.minimumf %466, %471 : vector<16x128xf32>
    %c0_206 = arith.constant 0 : index
    %c67 = arith.constant 67 : index
    %474 = vector.load %arg3[%c0_206, %c67] : memref<16x128xf32, #tpu.memory_space<vmem>>, vector<16x1xf32>
    %c67_207 = arith.constant 67 : index
    %c0_208 = arith.constant 0 : index
    %475 = vector.load %arg4[%c67_207, %c0_208] : memref<128x128xf32, #tpu.memory_space<vmem>>, vector<1x128xf32>
    %476 = vector.broadcast %474 : vector<16x1xf32> to vector<16x128xf32>
    %477 = vector.broadcast %475 : vector<1x128xf32> to vector<16x128xf32>
    %478 = arith.mulf %476, %477 : vector<16x128xf32>
    %479 = arith.maximumf %472, %478 : vector<16x128xf32>
    %480 = arith.minimumf %473, %478 : vector<16x128xf32>
    %c0_209 = arith.constant 0 : index
    %c68 = arith.constant 68 : index
    %481 = vector.load %arg3[%c0_209, %c68] : memref<16x128xf32, #tpu.memory_space<vmem>>, vector<16x1xf32>
    %c68_210 = arith.constant 68 : index
    %c0_211 = arith.constant 0 : index
    %482 = vector.load %arg4[%c68_210, %c0_211] : memref<128x128xf32, #tpu.memory_space<vmem>>, vector<1x128xf32>
    %483 = vector.broadcast %481 : vector<16x1xf32> to vector<16x128xf32>
    %484 = vector.broadcast %482 : vector<1x128xf32> to vector<16x128xf32>
    %485 = arith.mulf %483, %484 : vector<16x128xf32>
    %486 = arith.maximumf %479, %485 : vector<16x128xf32>
    %487 = arith.minimumf %480, %485 : vector<16x128xf32>
    %c0_212 = arith.constant 0 : index
    %c69 = arith.constant 69 : index
    %488 = vector.load %arg3[%c0_212, %c69] : memref<16x128xf32, #tpu.memory_space<vmem>>, vector<16x1xf32>
    %c69_213 = arith.constant 69 : index
    %c0_214 = arith.constant 0 : index
    %489 = vector.load %arg4[%c69_213, %c0_214] : memref<128x128xf32, #tpu.memory_space<vmem>>, vector<1x128xf32>
    %490 = vector.broadcast %488 : vector<16x1xf32> to vector<16x128xf32>
    %491 = vector.broadcast %489 : vector<1x128xf32> to vector<16x128xf32>
    %492 = arith.mulf %490, %491 : vector<16x128xf32>
    %493 = arith.maximumf %486, %492 : vector<16x128xf32>
    %494 = arith.minimumf %487, %492 : vector<16x128xf32>
    %c0_215 = arith.constant 0 : index
    %c70 = arith.constant 70 : index
    %495 = vector.load %arg3[%c0_215, %c70] : memref<16x128xf32, #tpu.memory_space<vmem>>, vector<16x1xf32>
    %c70_216 = arith.constant 70 : index
    %c0_217 = arith.constant 0 : index
    %496 = vector.load %arg4[%c70_216, %c0_217] : memref<128x128xf32, #tpu.memory_space<vmem>>, vector<1x128xf32>
    %497 = vector.broadcast %495 : vector<16x1xf32> to vector<16x128xf32>
    %498 = vector.broadcast %496 : vector<1x128xf32> to vector<16x128xf32>
    %499 = arith.mulf %497, %498 : vector<16x128xf32>
    %500 = arith.maximumf %493, %499 : vector<16x128xf32>
    %501 = arith.minimumf %494, %499 : vector<16x128xf32>
    %c0_218 = arith.constant 0 : index
    %c71 = arith.constant 71 : index
    %502 = vector.load %arg3[%c0_218, %c71] : memref<16x128xf32, #tpu.memory_space<vmem>>, vector<16x1xf32>
    %c71_219 = arith.constant 71 : index
    %c0_220 = arith.constant 0 : index
    %503 = vector.load %arg4[%c71_219, %c0_220] : memref<128x128xf32, #tpu.memory_space<vmem>>, vector<1x128xf32>
    %504 = vector.broadcast %502 : vector<16x1xf32> to vector<16x128xf32>
    %505 = vector.broadcast %503 : vector<1x128xf32> to vector<16x128xf32>
    %506 = arith.mulf %504, %505 : vector<16x128xf32>
    %507 = arith.maximumf %500, %506 : vector<16x128xf32>
    %508 = arith.minimumf %501, %506 : vector<16x128xf32>
    %c0_221 = arith.constant 0 : index
    %c72 = arith.constant 72 : index
    %509 = vector.load %arg3[%c0_221, %c72] : memref<16x128xf32, #tpu.memory_space<vmem>>, vector<16x1xf32>
    %c72_222 = arith.constant 72 : index
    %c0_223 = arith.constant 0 : index
    %510 = vector.load %arg4[%c72_222, %c0_223] : memref<128x128xf32, #tpu.memory_space<vmem>>, vector<1x128xf32>
    %511 = vector.broadcast %509 : vector<16x1xf32> to vector<16x128xf32>
    %512 = vector.broadcast %510 : vector<1x128xf32> to vector<16x128xf32>
    %513 = arith.mulf %511, %512 : vector<16x128xf32>
    %514 = arith.maximumf %507, %513 : vector<16x128xf32>
    %515 = arith.minimumf %508, %513 : vector<16x128xf32>
    %c0_224 = arith.constant 0 : index
    %c73 = arith.constant 73 : index
    %516 = vector.load %arg3[%c0_224, %c73] : memref<16x128xf32, #tpu.memory_space<vmem>>, vector<16x1xf32>
    %c73_225 = arith.constant 73 : index
    %c0_226 = arith.constant 0 : index
    %517 = vector.load %arg4[%c73_225, %c0_226] : memref<128x128xf32, #tpu.memory_space<vmem>>, vector<1x128xf32>
    %518 = vector.broadcast %516 : vector<16x1xf32> to vector<16x128xf32>
    %519 = vector.broadcast %517 : vector<1x128xf32> to vector<16x128xf32>
    %520 = arith.mulf %518, %519 : vector<16x128xf32>
    %521 = arith.maximumf %514, %520 : vector<16x128xf32>
    %522 = arith.minimumf %515, %520 : vector<16x128xf32>
    %c0_227 = arith.constant 0 : index
    %c74 = arith.constant 74 : index
    %523 = vector.load %arg3[%c0_227, %c74] : memref<16x128xf32, #tpu.memory_space<vmem>>, vector<16x1xf32>
    %c74_228 = arith.constant 74 : index
    %c0_229 = arith.constant 0 : index
    %524 = vector.load %arg4[%c74_228, %c0_229] : memref<128x128xf32, #tpu.memory_space<vmem>>, vector<1x128xf32>
    %525 = vector.broadcast %523 : vector<16x1xf32> to vector<16x128xf32>
    %526 = vector.broadcast %524 : vector<1x128xf32> to vector<16x128xf32>
    %527 = arith.mulf %525, %526 : vector<16x128xf32>
    %528 = arith.maximumf %521, %527 : vector<16x128xf32>
    %529 = arith.minimumf %522, %527 : vector<16x128xf32>
    %c0_230 = arith.constant 0 : index
    %c75 = arith.constant 75 : index
    %530 = vector.load %arg3[%c0_230, %c75] : memref<16x128xf32, #tpu.memory_space<vmem>>, vector<16x1xf32>
    %c75_231 = arith.constant 75 : index
    %c0_232 = arith.constant 0 : index
    %531 = vector.load %arg4[%c75_231, %c0_232] : memref<128x128xf32, #tpu.memory_space<vmem>>, vector<1x128xf32>
    %532 = vector.broadcast %530 : vector<16x1xf32> to vector<16x128xf32>
    %533 = vector.broadcast %531 : vector<1x128xf32> to vector<16x128xf32>
    %534 = arith.mulf %532, %533 : vector<16x128xf32>
    %535 = arith.maximumf %528, %534 : vector<16x128xf32>
    %536 = arith.minimumf %529, %534 : vector<16x128xf32>
    %c0_233 = arith.constant 0 : index
    %c76 = arith.constant 76 : index
    %537 = vector.load %arg3[%c0_233, %c76] : memref<16x128xf32, #tpu.memory_space<vmem>>, vector<16x1xf32>
    %c76_234 = arith.constant 76 : index
    %c0_235 = arith.constant 0 : index
    %538 = vector.load %arg4[%c76_234, %c0_235] : memref<128x128xf32, #tpu.memory_space<vmem>>, vector<1x128xf32>
    %539 = vector.broadcast %537 : vector<16x1xf32> to vector<16x128xf32>
    %540 = vector.broadcast %538 : vector<1x128xf32> to vector<16x128xf32>
    %541 = arith.mulf %539, %540 : vector<16x128xf32>
    %542 = arith.maximumf %535, %541 : vector<16x128xf32>
    %543 = arith.minimumf %536, %541 : vector<16x128xf32>
    %c0_236 = arith.constant 0 : index
    %c77 = arith.constant 77 : index
    %544 = vector.load %arg3[%c0_236, %c77] : memref<16x128xf32, #tpu.memory_space<vmem>>, vector<16x1xf32>
    %c77_237 = arith.constant 77 : index
    %c0_238 = arith.constant 0 : index
    %545 = vector.load %arg4[%c77_237, %c0_238] : memref<128x128xf32, #tpu.memory_space<vmem>>, vector<1x128xf32>
    %546 = vector.broadcast %544 : vector<16x1xf32> to vector<16x128xf32>
    %547 = vector.broadcast %545 : vector<1x128xf32> to vector<16x128xf32>
    %548 = arith.mulf %546, %547 : vector<16x128xf32>
    %549 = arith.maximumf %542, %548 : vector<16x128xf32>
    %550 = arith.minimumf %543, %548 : vector<16x128xf32>
    %c0_239 = arith.constant 0 : index
    %c78 = arith.constant 78 : index
    %551 = vector.load %arg3[%c0_239, %c78] : memref<16x128xf32, #tpu.memory_space<vmem>>, vector<16x1xf32>
    %c78_240 = arith.constant 78 : index
    %c0_241 = arith.constant 0 : index
    %552 = vector.load %arg4[%c78_240, %c0_241] : memref<128x128xf32, #tpu.memory_space<vmem>>, vector<1x128xf32>
    %553 = vector.broadcast %551 : vector<16x1xf32> to vector<16x128xf32>
    %554 = vector.broadcast %552 : vector<1x128xf32> to vector<16x128xf32>
    %555 = arith.mulf %553, %554 : vector<16x128xf32>
    %556 = arith.maximumf %549, %555 : vector<16x128xf32>
    %557 = arith.minimumf %550, %555 : vector<16x128xf32>
    %c0_242 = arith.constant 0 : index
    %c79 = arith.constant 79 : index
    %558 = vector.load %arg3[%c0_242, %c79] : memref<16x128xf32, #tpu.memory_space<vmem>>, vector<16x1xf32>
    %c79_243 = arith.constant 79 : index
    %c0_244 = arith.constant 0 : index
    %559 = vector.load %arg4[%c79_243, %c0_244] : memref<128x128xf32, #tpu.memory_space<vmem>>, vector<1x128xf32>
    %560 = vector.broadcast %558 : vector<16x1xf32> to vector<16x128xf32>
    %561 = vector.broadcast %559 : vector<1x128xf32> to vector<16x128xf32>
    %562 = arith.mulf %560, %561 : vector<16x128xf32>
    %563 = arith.maximumf %556, %562 : vector<16x128xf32>
    %564 = arith.minimumf %557, %562 : vector<16x128xf32>
    %c0_245 = arith.constant 0 : index
    %c80 = arith.constant 80 : index
    %565 = vector.load %arg3[%c0_245, %c80] : memref<16x128xf32, #tpu.memory_space<vmem>>, vector<16x1xf32>
    %c80_246 = arith.constant 80 : index
    %c0_247 = arith.constant 0 : index
    %566 = vector.load %arg4[%c80_246, %c0_247] : memref<128x128xf32, #tpu.memory_space<vmem>>, vector<1x128xf32>
    %567 = vector.broadcast %565 : vector<16x1xf32> to vector<16x128xf32>
    %568 = vector.broadcast %566 : vector<1x128xf32> to vector<16x128xf32>
    %569 = arith.mulf %567, %568 : vector<16x128xf32>
    %570 = arith.maximumf %563, %569 : vector<16x128xf32>
    %571 = arith.minimumf %564, %569 : vector<16x128xf32>
    %c0_248 = arith.constant 0 : index
    %c81 = arith.constant 81 : index
    %572 = vector.load %arg3[%c0_248, %c81] : memref<16x128xf32, #tpu.memory_space<vmem>>, vector<16x1xf32>
    %c81_249 = arith.constant 81 : index
    %c0_250 = arith.constant 0 : index
    %573 = vector.load %arg4[%c81_249, %c0_250] : memref<128x128xf32, #tpu.memory_space<vmem>>, vector<1x128xf32>
    %574 = vector.broadcast %572 : vector<16x1xf32> to vector<16x128xf32>
    %575 = vector.broadcast %573 : vector<1x128xf32> to vector<16x128xf32>
    %576 = arith.mulf %574, %575 : vector<16x128xf32>
    %577 = arith.maximumf %570, %576 : vector<16x128xf32>
    %578 = arith.minimumf %571, %576 : vector<16x128xf32>
    %c0_251 = arith.constant 0 : index
    %c82 = arith.constant 82 : index
    %579 = vector.load %arg3[%c0_251, %c82] : memref<16x128xf32, #tpu.memory_space<vmem>>, vector<16x1xf32>
    %c82_252 = arith.constant 82 : index
    %c0_253 = arith.constant 0 : index
    %580 = vector.load %arg4[%c82_252, %c0_253] : memref<128x128xf32, #tpu.memory_space<vmem>>, vector<1x128xf32>
    %581 = vector.broadcast %579 : vector<16x1xf32> to vector<16x128xf32>
    %582 = vector.broadcast %580 : vector<1x128xf32> to vector<16x128xf32>
    %583 = arith.mulf %581, %582 : vector<16x128xf32>
    %584 = arith.maximumf %577, %583 : vector<16x128xf32>
    %585 = arith.minimumf %578, %583 : vector<16x128xf32>
    %c0_254 = arith.constant 0 : index
    %c83 = arith.constant 83 : index
    %586 = vector.load %arg3[%c0_254, %c83] : memref<16x128xf32, #tpu.memory_space<vmem>>, vector<16x1xf32>
    %c83_255 = arith.constant 83 : index
    %c0_256 = arith.constant 0 : index
    %587 = vector.load %arg4[%c83_255, %c0_256] : memref<128x128xf32, #tpu.memory_space<vmem>>, vector<1x128xf32>
    %588 = vector.broadcast %586 : vector<16x1xf32> to vector<16x128xf32>
    %589 = vector.broadcast %587 : vector<1x128xf32> to vector<16x128xf32>
    %590 = arith.mulf %588, %589 : vector<16x128xf32>
    %591 = arith.maximumf %584, %590 : vector<16x128xf32>
    %592 = arith.minimumf %585, %590 : vector<16x128xf32>
    %c0_257 = arith.constant 0 : index
    %c84 = arith.constant 84 : index
    %593 = vector.load %arg3[%c0_257, %c84] : memref<16x128xf32, #tpu.memory_space<vmem>>, vector<16x1xf32>
    %c84_258 = arith.constant 84 : index
    %c0_259 = arith.constant 0 : index
    %594 = vector.load %arg4[%c84_258, %c0_259] : memref<128x128xf32, #tpu.memory_space<vmem>>, vector<1x128xf32>
    %595 = vector.broadcast %593 : vector<16x1xf32> to vector<16x128xf32>
    %596 = vector.broadcast %594 : vector<1x128xf32> to vector<16x128xf32>
    %597 = arith.mulf %595, %596 : vector<16x128xf32>
    %598 = arith.maximumf %591, %597 : vector<16x128xf32>
    %599 = arith.minimumf %592, %597 : vector<16x128xf32>
    %c0_260 = arith.constant 0 : index
    %c85 = arith.constant 85 : index
    %600 = vector.load %arg3[%c0_260, %c85] : memref<16x128xf32, #tpu.memory_space<vmem>>, vector<16x1xf32>
    %c85_261 = arith.constant 85 : index
    %c0_262 = arith.constant 0 : index
    %601 = vector.load %arg4[%c85_261, %c0_262] : memref<128x128xf32, #tpu.memory_space<vmem>>, vector<1x128xf32>
    %602 = vector.broadcast %600 : vector<16x1xf32> to vector<16x128xf32>
    %603 = vector.broadcast %601 : vector<1x128xf32> to vector<16x128xf32>
    %604 = arith.mulf %602, %603 : vector<16x128xf32>
    %605 = arith.maximumf %598, %604 : vector<16x128xf32>
    %606 = arith.minimumf %599, %604 : vector<16x128xf32>
    %c0_263 = arith.constant 0 : index
    %c86 = arith.constant 86 : index
    %607 = vector.load %arg3[%c0_263, %c86] : memref<16x128xf32, #tpu.memory_space<vmem>>, vector<16x1xf32>
    %c86_264 = arith.constant 86 : index
    %c0_265 = arith.constant 0 : index
    %608 = vector.load %arg4[%c86_264, %c0_265] : memref<128x128xf32, #tpu.memory_space<vmem>>, vector<1x128xf32>
    %609 = vector.broadcast %607 : vector<16x1xf32> to vector<16x128xf32>
    %610 = vector.broadcast %608 : vector<1x128xf32> to vector<16x128xf32>
    %611 = arith.mulf %609, %610 : vector<16x128xf32>
    %612 = arith.maximumf %605, %611 : vector<16x128xf32>
    %613 = arith.minimumf %606, %611 : vector<16x128xf32>
    %c0_266 = arith.constant 0 : index
    %c87 = arith.constant 87 : index
    %614 = vector.load %arg3[%c0_266, %c87] : memref<16x128xf32, #tpu.memory_space<vmem>>, vector<16x1xf32>
    %c87_267 = arith.constant 87 : index
    %c0_268 = arith.constant 0 : index
    %615 = vector.load %arg4[%c87_267, %c0_268] : memref<128x128xf32, #tpu.memory_space<vmem>>, vector<1x128xf32>
    %616 = vector.broadcast %614 : vector<16x1xf32> to vector<16x128xf32>
    %617 = vector.broadcast %615 : vector<1x128xf32> to vector<16x128xf32>
    %618 = arith.mulf %616, %617 : vector<16x128xf32>
    %619 = arith.maximumf %612, %618 : vector<16x128xf32>
    %620 = arith.minimumf %613, %618 : vector<16x128xf32>
    %c0_269 = arith.constant 0 : index
    %c88 = arith.constant 88 : index
    %621 = vector.load %arg3[%c0_269, %c88] : memref<16x128xf32, #tpu.memory_space<vmem>>, vector<16x1xf32>
    %c88_270 = arith.constant 88 : index
    %c0_271 = arith.constant 0 : index
    %622 = vector.load %arg4[%c88_270, %c0_271] : memref<128x128xf32, #tpu.memory_space<vmem>>, vector<1x128xf32>
    %623 = vector.broadcast %621 : vector<16x1xf32> to vector<16x128xf32>
    %624 = vector.broadcast %622 : vector<1x128xf32> to vector<16x128xf32>
    %625 = arith.mulf %623, %624 : vector<16x128xf32>
    %626 = arith.maximumf %619, %625 : vector<16x128xf32>
    %627 = arith.minimumf %620, %625 : vector<16x128xf32>
    %c0_272 = arith.constant 0 : index
    %c89 = arith.constant 89 : index
    %628 = vector.load %arg3[%c0_272, %c89] : memref<16x128xf32, #tpu.memory_space<vmem>>, vector<16x1xf32>
    %c89_273 = arith.constant 89 : index
    %c0_274 = arith.constant 0 : index
    %629 = vector.load %arg4[%c89_273, %c0_274] : memref<128x128xf32, #tpu.memory_space<vmem>>, vector<1x128xf32>
    %630 = vector.broadcast %628 : vector<16x1xf32> to vector<16x128xf32>
    %631 = vector.broadcast %629 : vector<1x128xf32> to vector<16x128xf32>
    %632 = arith.mulf %630, %631 : vector<16x128xf32>
    %633 = arith.maximumf %626, %632 : vector<16x128xf32>
    %634 = arith.minimumf %627, %632 : vector<16x128xf32>
    %c0_275 = arith.constant 0 : index
    %c90 = arith.constant 90 : index
    %635 = vector.load %arg3[%c0_275, %c90] : memref<16x128xf32, #tpu.memory_space<vmem>>, vector<16x1xf32>
    %c90_276 = arith.constant 90 : index
    %c0_277 = arith.constant 0 : index
    %636 = vector.load %arg4[%c90_276, %c0_277] : memref<128x128xf32, #tpu.memory_space<vmem>>, vector<1x128xf32>
    %637 = vector.broadcast %635 : vector<16x1xf32> to vector<16x128xf32>
    %638 = vector.broadcast %636 : vector<1x128xf32> to vector<16x128xf32>
    %639 = arith.mulf %637, %638 : vector<16x128xf32>
    %640 = arith.maximumf %633, %639 : vector<16x128xf32>
    %641 = arith.minimumf %634, %639 : vector<16x128xf32>
    %c0_278 = arith.constant 0 : index
    %c91 = arith.constant 91 : index
    %642 = vector.load %arg3[%c0_278, %c91] : memref<16x128xf32, #tpu.memory_space<vmem>>, vector<16x1xf32>
    %c91_279 = arith.constant 91 : index
    %c0_280 = arith.constant 0 : index
    %643 = vector.load %arg4[%c91_279, %c0_280] : memref<128x128xf32, #tpu.memory_space<vmem>>, vector<1x128xf32>
    %644 = vector.broadcast %642 : vector<16x1xf32> to vector<16x128xf32>
    %645 = vector.broadcast %643 : vector<1x128xf32> to vector<16x128xf32>
    %646 = arith.mulf %644, %645 : vector<16x128xf32>
    %647 = arith.maximumf %640, %646 : vector<16x128xf32>
    %648 = arith.minimumf %641, %646 : vector<16x128xf32>
    %c0_281 = arith.constant 0 : index
    %c92 = arith.constant 92 : index
    %649 = vector.load %arg3[%c0_281, %c92] : memref<16x128xf32, #tpu.memory_space<vmem>>, vector<16x1xf32>
    %c92_282 = arith.constant 92 : index
    %c0_283 = arith.constant 0 : index
    %650 = vector.load %arg4[%c92_282, %c0_283] : memref<128x128xf32, #tpu.memory_space<vmem>>, vector<1x128xf32>
    %651 = vector.broadcast %649 : vector<16x1xf32> to vector<16x128xf32>
    %652 = vector.broadcast %650 : vector<1x128xf32> to vector<16x128xf32>
    %653 = arith.mulf %651, %652 : vector<16x128xf32>
    %654 = arith.maximumf %647, %653 : vector<16x128xf32>
    %655 = arith.minimumf %648, %653 : vector<16x128xf32>
    %c0_284 = arith.constant 0 : index
    %c93 = arith.constant 93 : index
    %656 = vector.load %arg3[%c0_284, %c93] : memref<16x128xf32, #tpu.memory_space<vmem>>, vector<16x1xf32>
    %c93_285 = arith.constant 93 : index
    %c0_286 = arith.constant 0 : index
    %657 = vector.load %arg4[%c93_285, %c0_286] : memref<128x128xf32, #tpu.memory_space<vmem>>, vector<1x128xf32>
    %658 = vector.broadcast %656 : vector<16x1xf32> to vector<16x128xf32>
    %659 = vector.broadcast %657 : vector<1x128xf32> to vector<16x128xf32>
    %660 = arith.mulf %658, %659 : vector<16x128xf32>
    %661 = arith.maximumf %654, %660 : vector<16x128xf32>
    %662 = arith.minimumf %655, %660 : vector<16x128xf32>
    %c0_287 = arith.constant 0 : index
    %c94 = arith.constant 94 : index
    %663 = vector.load %arg3[%c0_287, %c94] : memref<16x128xf32, #tpu.memory_space<vmem>>, vector<16x1xf32>
    %c94_288 = arith.constant 94 : index
    %c0_289 = arith.constant 0 : index
    %664 = vector.load %arg4[%c94_288, %c0_289] : memref<128x128xf32, #tpu.memory_space<vmem>>, vector<1x128xf32>
    %665 = vector.broadcast %663 : vector<16x1xf32> to vector<16x128xf32>
    %666 = vector.broadcast %664 : vector<1x128xf32> to vector<16x128xf32>
    %667 = arith.mulf %665, %666 : vector<16x128xf32>
    %668 = arith.maximumf %661, %667 : vector<16x128xf32>
    %669 = arith.minimumf %662, %667 : vector<16x128xf32>
    %c0_290 = arith.constant 0 : index
    %c95 = arith.constant 95 : index
    %670 = vector.load %arg3[%c0_290, %c95] : memref<16x128xf32, #tpu.memory_space<vmem>>, vector<16x1xf32>
    %c95_291 = arith.constant 95 : index
    %c0_292 = arith.constant 0 : index
    %671 = vector.load %arg4[%c95_291, %c0_292] : memref<128x128xf32, #tpu.memory_space<vmem>>, vector<1x128xf32>
    %672 = vector.broadcast %670 : vector<16x1xf32> to vector<16x128xf32>
    %673 = vector.broadcast %671 : vector<1x128xf32> to vector<16x128xf32>
    %674 = arith.mulf %672, %673 : vector<16x128xf32>
    %675 = arith.maximumf %668, %674 : vector<16x128xf32>
    %676 = arith.minimumf %669, %674 : vector<16x128xf32>
    %c0_293 = arith.constant 0 : index
    %c96 = arith.constant 96 : index
    %677 = vector.load %arg3[%c0_293, %c96] : memref<16x128xf32, #tpu.memory_space<vmem>>, vector<16x1xf32>
    %c96_294 = arith.constant 96 : index
    %c0_295 = arith.constant 0 : index
    %678 = vector.load %arg4[%c96_294, %c0_295] : memref<128x128xf32, #tpu.memory_space<vmem>>, vector<1x128xf32>
    %679 = vector.broadcast %677 : vector<16x1xf32> to vector<16x128xf32>
    %680 = vector.broadcast %678 : vector<1x128xf32> to vector<16x128xf32>
    %681 = arith.mulf %679, %680 : vector<16x128xf32>
    %682 = arith.maximumf %675, %681 : vector<16x128xf32>
    %683 = arith.minimumf %676, %681 : vector<16x128xf32>
    %c0_296 = arith.constant 0 : index
    %c97 = arith.constant 97 : index
    %684 = vector.load %arg3[%c0_296, %c97] : memref<16x128xf32, #tpu.memory_space<vmem>>, vector<16x1xf32>
    %c97_297 = arith.constant 97 : index
    %c0_298 = arith.constant 0 : index
    %685 = vector.load %arg4[%c97_297, %c0_298] : memref<128x128xf32, #tpu.memory_space<vmem>>, vector<1x128xf32>
    %686 = vector.broadcast %684 : vector<16x1xf32> to vector<16x128xf32>
    %687 = vector.broadcast %685 : vector<1x128xf32> to vector<16x128xf32>
    %688 = arith.mulf %686, %687 : vector<16x128xf32>
    %689 = arith.maximumf %682, %688 : vector<16x128xf32>
    %690 = arith.minimumf %683, %688 : vector<16x128xf32>
    %c0_299 = arith.constant 0 : index
    %c98 = arith.constant 98 : index
    %691 = vector.load %arg3[%c0_299, %c98] : memref<16x128xf32, #tpu.memory_space<vmem>>, vector<16x1xf32>
    %c98_300 = arith.constant 98 : index
    %c0_301 = arith.constant 0 : index
    %692 = vector.load %arg4[%c98_300, %c0_301] : memref<128x128xf32, #tpu.memory_space<vmem>>, vector<1x128xf32>
    %693 = vector.broadcast %691 : vector<16x1xf32> to vector<16x128xf32>
    %694 = vector.broadcast %692 : vector<1x128xf32> to vector<16x128xf32>
    %695 = arith.mulf %693, %694 : vector<16x128xf32>
    %696 = arith.maximumf %689, %695 : vector<16x128xf32>
    %697 = arith.minimumf %690, %695 : vector<16x128xf32>
    %c0_302 = arith.constant 0 : index
    %c99 = arith.constant 99 : index
    %698 = vector.load %arg3[%c0_302, %c99] : memref<16x128xf32, #tpu.memory_space<vmem>>, vector<16x1xf32>
    %c99_303 = arith.constant 99 : index
    %c0_304 = arith.constant 0 : index
    %699 = vector.load %arg4[%c99_303, %c0_304] : memref<128x128xf32, #tpu.memory_space<vmem>>, vector<1x128xf32>
    %700 = vector.broadcast %698 : vector<16x1xf32> to vector<16x128xf32>
    %701 = vector.broadcast %699 : vector<1x128xf32> to vector<16x128xf32>
    %702 = arith.mulf %700, %701 : vector<16x128xf32>
    %703 = arith.maximumf %696, %702 : vector<16x128xf32>
    %704 = arith.minimumf %697, %702 : vector<16x128xf32>
    %c0_305 = arith.constant 0 : index
    %c100 = arith.constant 100 : index
    %705 = vector.load %arg3[%c0_305, %c100] : memref<16x128xf32, #tpu.memory_space<vmem>>, vector<16x1xf32>
    %c100_306 = arith.constant 100 : index
    %c0_307 = arith.constant 0 : index
    %706 = vector.load %arg4[%c100_306, %c0_307] : memref<128x128xf32, #tpu.memory_space<vmem>>, vector<1x128xf32>
    %707 = vector.broadcast %705 : vector<16x1xf32> to vector<16x128xf32>
    %708 = vector.broadcast %706 : vector<1x128xf32> to vector<16x128xf32>
    %709 = arith.mulf %707, %708 : vector<16x128xf32>
    %710 = arith.maximumf %703, %709 : vector<16x128xf32>
    %711 = arith.minimumf %704, %709 : vector<16x128xf32>
    %c0_308 = arith.constant 0 : index
    %c101 = arith.constant 101 : index
    %712 = vector.load %arg3[%c0_308, %c101] : memref<16x128xf32, #tpu.memory_space<vmem>>, vector<16x1xf32>
    %c101_309 = arith.constant 101 : index
    %c0_310 = arith.constant 0 : index
    %713 = vector.load %arg4[%c101_309, %c0_310] : memref<128x128xf32, #tpu.memory_space<vmem>>, vector<1x128xf32>
    %714 = vector.broadcast %712 : vector<16x1xf32> to vector<16x128xf32>
    %715 = vector.broadcast %713 : vector<1x128xf32> to vector<16x128xf32>
    %716 = arith.mulf %714, %715 : vector<16x128xf32>
    %717 = arith.maximumf %710, %716 : vector<16x128xf32>
    %718 = arith.minimumf %711, %716 : vector<16x128xf32>
    %c0_311 = arith.constant 0 : index
    %c102 = arith.constant 102 : index
    %719 = vector.load %arg3[%c0_311, %c102] : memref<16x128xf32, #tpu.memory_space<vmem>>, vector<16x1xf32>
    %c102_312 = arith.constant 102 : index
    %c0_313 = arith.constant 0 : index
    %720 = vector.load %arg4[%c102_312, %c0_313] : memref<128x128xf32, #tpu.memory_space<vmem>>, vector<1x128xf32>
    %721 = vector.broadcast %719 : vector<16x1xf32> to vector<16x128xf32>
    %722 = vector.broadcast %720 : vector<1x128xf32> to vector<16x128xf32>
    %723 = arith.mulf %721, %722 : vector<16x128xf32>
    %724 = arith.maximumf %717, %723 : vector<16x128xf32>
    %725 = arith.minimumf %718, %723 : vector<16x128xf32>
    %c0_314 = arith.constant 0 : index
    %c103 = arith.constant 103 : index
    %726 = vector.load %arg3[%c0_314, %c103] : memref<16x128xf32, #tpu.memory_space<vmem>>, vector<16x1xf32>
    %c103_315 = arith.constant 103 : index
    %c0_316 = arith.constant 0 : index
    %727 = vector.load %arg4[%c103_315, %c0_316] : memref<128x128xf32, #tpu.memory_space<vmem>>, vector<1x128xf32>
    %728 = vector.broadcast %726 : vector<16x1xf32> to vector<16x128xf32>
    %729 = vector.broadcast %727 : vector<1x128xf32> to vector<16x128xf32>
    %730 = arith.mulf %728, %729 : vector<16x128xf32>
    %731 = arith.maximumf %724, %730 : vector<16x128xf32>
    %732 = arith.minimumf %725, %730 : vector<16x128xf32>
    %c0_317 = arith.constant 0 : index
    %c104 = arith.constant 104 : index
    %733 = vector.load %arg3[%c0_317, %c104] : memref<16x128xf32, #tpu.memory_space<vmem>>, vector<16x1xf32>
    %c104_318 = arith.constant 104 : index
    %c0_319 = arith.constant 0 : index
    %734 = vector.load %arg4[%c104_318, %c0_319] : memref<128x128xf32, #tpu.memory_space<vmem>>, vector<1x128xf32>
    %735 = vector.broadcast %733 : vector<16x1xf32> to vector<16x128xf32>
    %736 = vector.broadcast %734 : vector<1x128xf32> to vector<16x128xf32>
    %737 = arith.mulf %735, %736 : vector<16x128xf32>
    %738 = arith.maximumf %731, %737 : vector<16x128xf32>
    %739 = arith.minimumf %732, %737 : vector<16x128xf32>
    %c0_320 = arith.constant 0 : index
    %c105 = arith.constant 105 : index
    %740 = vector.load %arg3[%c0_320, %c105] : memref<16x128xf32, #tpu.memory_space<vmem>>, vector<16x1xf32>
    %c105_321 = arith.constant 105 : index
    %c0_322 = arith.constant 0 : index
    %741 = vector.load %arg4[%c105_321, %c0_322] : memref<128x128xf32, #tpu.memory_space<vmem>>, vector<1x128xf32>
    %742 = vector.broadcast %740 : vector<16x1xf32> to vector<16x128xf32>
    %743 = vector.broadcast %741 : vector<1x128xf32> to vector<16x128xf32>
    %744 = arith.mulf %742, %743 : vector<16x128xf32>
    %745 = arith.maximumf %738, %744 : vector<16x128xf32>
    %746 = arith.minimumf %739, %744 : vector<16x128xf32>
    %c0_323 = arith.constant 0 : index
    %c106 = arith.constant 106 : index
    %747 = vector.load %arg3[%c0_323, %c106] : memref<16x128xf32, #tpu.memory_space<vmem>>, vector<16x1xf32>
    %c106_324 = arith.constant 106 : index
    %c0_325 = arith.constant 0 : index
    %748 = vector.load %arg4[%c106_324, %c0_325] : memref<128x128xf32, #tpu.memory_space<vmem>>, vector<1x128xf32>
    %749 = vector.broadcast %747 : vector<16x1xf32> to vector<16x128xf32>
    %750 = vector.broadcast %748 : vector<1x128xf32> to vector<16x128xf32>
    %751 = arith.mulf %749, %750 : vector<16x128xf32>
    %752 = arith.maximumf %745, %751 : vector<16x128xf32>
    %753 = arith.minimumf %746, %751 : vector<16x128xf32>
    %c0_326 = arith.constant 0 : index
    %c107 = arith.constant 107 : index
    %754 = vector.load %arg3[%c0_326, %c107] : memref<16x128xf32, #tpu.memory_space<vmem>>, vector<16x1xf32>
    %c107_327 = arith.constant 107 : index
    %c0_328 = arith.constant 0 : index
    %755 = vector.load %arg4[%c107_327, %c0_328] : memref<128x128xf32, #tpu.memory_space<vmem>>, vector<1x128xf32>
    %756 = vector.broadcast %754 : vector<16x1xf32> to vector<16x128xf32>
    %757 = vector.broadcast %755 : vector<1x128xf32> to vector<16x128xf32>
    %758 = arith.mulf %756, %757 : vector<16x128xf32>
    %759 = arith.maximumf %752, %758 : vector<16x128xf32>
    %760 = arith.minimumf %753, %758 : vector<16x128xf32>
    %c0_329 = arith.constant 0 : index
    %c108 = arith.constant 108 : index
    %761 = vector.load %arg3[%c0_329, %c108] : memref<16x128xf32, #tpu.memory_space<vmem>>, vector<16x1xf32>
    %c108_330 = arith.constant 108 : index
    %c0_331 = arith.constant 0 : index
    %762 = vector.load %arg4[%c108_330, %c0_331] : memref<128x128xf32, #tpu.memory_space<vmem>>, vector<1x128xf32>
    %763 = vector.broadcast %761 : vector<16x1xf32> to vector<16x128xf32>
    %764 = vector.broadcast %762 : vector<1x128xf32> to vector<16x128xf32>
    %765 = arith.mulf %763, %764 : vector<16x128xf32>
    %766 = arith.maximumf %759, %765 : vector<16x128xf32>
    %767 = arith.minimumf %760, %765 : vector<16x128xf32>
    %c0_332 = arith.constant 0 : index
    %c109 = arith.constant 109 : index
    %768 = vector.load %arg3[%c0_332, %c109] : memref<16x128xf32, #tpu.memory_space<vmem>>, vector<16x1xf32>
    %c109_333 = arith.constant 109 : index
    %c0_334 = arith.constant 0 : index
    %769 = vector.load %arg4[%c109_333, %c0_334] : memref<128x128xf32, #tpu.memory_space<vmem>>, vector<1x128xf32>
    %770 = vector.broadcast %768 : vector<16x1xf32> to vector<16x128xf32>
    %771 = vector.broadcast %769 : vector<1x128xf32> to vector<16x128xf32>
    %772 = arith.mulf %770, %771 : vector<16x128xf32>
    %773 = arith.maximumf %766, %772 : vector<16x128xf32>
    %774 = arith.minimumf %767, %772 : vector<16x128xf32>
    %c0_335 = arith.constant 0 : index
    %c110 = arith.constant 110 : index
    %775 = vector.load %arg3[%c0_335, %c110] : memref<16x128xf32, #tpu.memory_space<vmem>>, vector<16x1xf32>
    %c110_336 = arith.constant 110 : index
    %c0_337 = arith.constant 0 : index
    %776 = vector.load %arg4[%c110_336, %c0_337] : memref<128x128xf32, #tpu.memory_space<vmem>>, vector<1x128xf32>
    %777 = vector.broadcast %775 : vector<16x1xf32> to vector<16x128xf32>
    %778 = vector.broadcast %776 : vector<1x128xf32> to vector<16x128xf32>
    %779 = arith.mulf %777, %778 : vector<16x128xf32>
    %780 = arith.maximumf %773, %779 : vector<16x128xf32>
    %781 = arith.minimumf %774, %779 : vector<16x128xf32>
    %c0_338 = arith.constant 0 : index
    %c111 = arith.constant 111 : index
    %782 = vector.load %arg3[%c0_338, %c111] : memref<16x128xf32, #tpu.memory_space<vmem>>, vector<16x1xf32>
    %c111_339 = arith.constant 111 : index
    %c0_340 = arith.constant 0 : index
    %783 = vector.load %arg4[%c111_339, %c0_340] : memref<128x128xf32, #tpu.memory_space<vmem>>, vector<1x128xf32>
    %784 = vector.broadcast %782 : vector<16x1xf32> to vector<16x128xf32>
    %785 = vector.broadcast %783 : vector<1x128xf32> to vector<16x128xf32>
    %786 = arith.mulf %784, %785 : vector<16x128xf32>
    %787 = arith.maximumf %780, %786 : vector<16x128xf32>
    %788 = arith.minimumf %781, %786 : vector<16x128xf32>
    %c0_341 = arith.constant 0 : index
    %c112 = arith.constant 112 : index
    %789 = vector.load %arg3[%c0_341, %c112] : memref<16x128xf32, #tpu.memory_space<vmem>>, vector<16x1xf32>
    %c112_342 = arith.constant 112 : index
    %c0_343 = arith.constant 0 : index
    %790 = vector.load %arg4[%c112_342, %c0_343] : memref<128x128xf32, #tpu.memory_space<vmem>>, vector<1x128xf32>
    %791 = vector.broadcast %789 : vector<16x1xf32> to vector<16x128xf32>
    %792 = vector.broadcast %790 : vector<1x128xf32> to vector<16x128xf32>
    %793 = arith.mulf %791, %792 : vector<16x128xf32>
    %794 = arith.maximumf %787, %793 : vector<16x128xf32>
    %795 = arith.minimumf %788, %793 : vector<16x128xf32>
    %c0_344 = arith.constant 0 : index
    %c113 = arith.constant 113 : index
    %796 = vector.load %arg3[%c0_344, %c113] : memref<16x128xf32, #tpu.memory_space<vmem>>, vector<16x1xf32>
    %c113_345 = arith.constant 113 : index
    %c0_346 = arith.constant 0 : index
    %797 = vector.load %arg4[%c113_345, %c0_346] : memref<128x128xf32, #tpu.memory_space<vmem>>, vector<1x128xf32>
    %798 = vector.broadcast %796 : vector<16x1xf32> to vector<16x128xf32>
    %799 = vector.broadcast %797 : vector<1x128xf32> to vector<16x128xf32>
    %800 = arith.mulf %798, %799 : vector<16x128xf32>
    %801 = arith.maximumf %794, %800 : vector<16x128xf32>
    %802 = arith.minimumf %795, %800 : vector<16x128xf32>
    %c0_347 = arith.constant 0 : index
    %c114 = arith.constant 114 : index
    %803 = vector.load %arg3[%c0_347, %c114] : memref<16x128xf32, #tpu.memory_space<vmem>>, vector<16x1xf32>
    %c114_348 = arith.constant 114 : index
    %c0_349 = arith.constant 0 : index
    %804 = vector.load %arg4[%c114_348, %c0_349] : memref<128x128xf32, #tpu.memory_space<vmem>>, vector<1x128xf32>
    %805 = vector.broadcast %803 : vector<16x1xf32> to vector<16x128xf32>
    %806 = vector.broadcast %804 : vector<1x128xf32> to vector<16x128xf32>
    %807 = arith.mulf %805, %806 : vector<16x128xf32>
    %808 = arith.maximumf %801, %807 : vector<16x128xf32>
    %809 = arith.minimumf %802, %807 : vector<16x128xf32>
    %c0_350 = arith.constant 0 : index
    %c115 = arith.constant 115 : index
    %810 = vector.load %arg3[%c0_350, %c115] : memref<16x128xf32, #tpu.memory_space<vmem>>, vector<16x1xf32>
    %c115_351 = arith.constant 115 : index
    %c0_352 = arith.constant 0 : index
    %811 = vector.load %arg4[%c115_351, %c0_352] : memref<128x128xf32, #tpu.memory_space<vmem>>, vector<1x128xf32>
    %812 = vector.broadcast %810 : vector<16x1xf32> to vector<16x128xf32>
    %813 = vector.broadcast %811 : vector<1x128xf32> to vector<16x128xf32>
    %814 = arith.mulf %812, %813 : vector<16x128xf32>
    %815 = arith.maximumf %808, %814 : vector<16x128xf32>
    %816 = arith.minimumf %809, %814 : vector<16x128xf32>
    %c0_353 = arith.constant 0 : index
    %c116 = arith.constant 116 : index
    %817 = vector.load %arg3[%c0_353, %c116] : memref<16x128xf32, #tpu.memory_space<vmem>>, vector<16x1xf32>
    %c116_354 = arith.constant 116 : index
    %c0_355 = arith.constant 0 : index
    %818 = vector.load %arg4[%c116_354, %c0_355] : memref<128x128xf32, #tpu.memory_space<vmem>>, vector<1x128xf32>
    %819 = vector.broadcast %817 : vector<16x1xf32> to vector<16x128xf32>
    %820 = vector.broadcast %818 : vector<1x128xf32> to vector<16x128xf32>
    %821 = arith.mulf %819, %820 : vector<16x128xf32>
    %822 = arith.maximumf %815, %821 : vector<16x128xf32>
    %823 = arith.minimumf %816, %821 : vector<16x128xf32>
    %c0_356 = arith.constant 0 : index
    %c117 = arith.constant 117 : index
    %824 = vector.load %arg3[%c0_356, %c117] : memref<16x128xf32, #tpu.memory_space<vmem>>, vector<16x1xf32>
    %c117_357 = arith.constant 117 : index
    %c0_358 = arith.constant 0 : index
    %825 = vector.load %arg4[%c117_357, %c0_358] : memref<128x128xf32, #tpu.memory_space<vmem>>, vector<1x128xf32>
    %826 = vector.broadcast %824 : vector<16x1xf32> to vector<16x128xf32>
    %827 = vector.broadcast %825 : vector<1x128xf32> to vector<16x128xf32>
    %828 = arith.mulf %826, %827 : vector<16x128xf32>
    %829 = arith.maximumf %822, %828 : vector<16x128xf32>
    %830 = arith.minimumf %823, %828 : vector<16x128xf32>
    %c0_359 = arith.constant 0 : index
    %c118 = arith.constant 118 : index
    %831 = vector.load %arg3[%c0_359, %c118] : memref<16x128xf32, #tpu.memory_space<vmem>>, vector<16x1xf32>
    %c118_360 = arith.constant 118 : index
    %c0_361 = arith.constant 0 : index
    %832 = vector.load %arg4[%c118_360, %c0_361] : memref<128x128xf32, #tpu.memory_space<vmem>>, vector<1x128xf32>
    %833 = vector.broadcast %831 : vector<16x1xf32> to vector<16x128xf32>
    %834 = vector.broadcast %832 : vector<1x128xf32> to vector<16x128xf32>
    %835 = arith.mulf %833, %834 : vector<16x128xf32>
    %836 = arith.maximumf %829, %835 : vector<16x128xf32>
    %837 = arith.minimumf %830, %835 : vector<16x128xf32>
    %c0_362 = arith.constant 0 : index
    %c119 = arith.constant 119 : index
    %838 = vector.load %arg3[%c0_362, %c119] : memref<16x128xf32, #tpu.memory_space<vmem>>, vector<16x1xf32>
    %c119_363 = arith.constant 119 : index
    %c0_364 = arith.constant 0 : index
    %839 = vector.load %arg4[%c119_363, %c0_364] : memref<128x128xf32, #tpu.memory_space<vmem>>, vector<1x128xf32>
    %840 = vector.broadcast %838 : vector<16x1xf32> to vector<16x128xf32>
    %841 = vector.broadcast %839 : vector<1x128xf32> to vector<16x128xf32>
    %842 = arith.mulf %840, %841 : vector<16x128xf32>
    %843 = arith.maximumf %836, %842 : vector<16x128xf32>
    %844 = arith.minimumf %837, %842 : vector<16x128xf32>
    %c0_365 = arith.constant 0 : index
    %c120 = arith.constant 120 : index
    %845 = vector.load %arg3[%c0_365, %c120] : memref<16x128xf32, #tpu.memory_space<vmem>>, vector<16x1xf32>
    %c120_366 = arith.constant 120 : index
    %c0_367 = arith.constant 0 : index
    %846 = vector.load %arg4[%c120_366, %c0_367] : memref<128x128xf32, #tpu.memory_space<vmem>>, vector<1x128xf32>
    %847 = vector.broadcast %845 : vector<16x1xf32> to vector<16x128xf32>
    %848 = vector.broadcast %846 : vector<1x128xf32> to vector<16x128xf32>
    %849 = arith.mulf %847, %848 : vector<16x128xf32>
    %850 = arith.maximumf %843, %849 : vector<16x128xf32>
    %851 = arith.minimumf %844, %849 : vector<16x128xf32>
    %c0_368 = arith.constant 0 : index
    %c121 = arith.constant 121 : index
    %852 = vector.load %arg3[%c0_368, %c121] : memref<16x128xf32, #tpu.memory_space<vmem>>, vector<16x1xf32>
    %c121_369 = arith.constant 121 : index
    %c0_370 = arith.constant 0 : index
    %853 = vector.load %arg4[%c121_369, %c0_370] : memref<128x128xf32, #tpu.memory_space<vmem>>, vector<1x128xf32>
    %854 = vector.broadcast %852 : vector<16x1xf32> to vector<16x128xf32>
    %855 = vector.broadcast %853 : vector<1x128xf32> to vector<16x128xf32>
    %856 = arith.mulf %854, %855 : vector<16x128xf32>
    %857 = arith.maximumf %850, %856 : vector<16x128xf32>
    %858 = arith.minimumf %851, %856 : vector<16x128xf32>
    %c0_371 = arith.constant 0 : index
    %c122 = arith.constant 122 : index
    %859 = vector.load %arg3[%c0_371, %c122] : memref<16x128xf32, #tpu.memory_space<vmem>>, vector<16x1xf32>
    %c122_372 = arith.constant 122 : index
    %c0_373 = arith.constant 0 : index
    %860 = vector.load %arg4[%c122_372, %c0_373] : memref<128x128xf32, #tpu.memory_space<vmem>>, vector<1x128xf32>
    %861 = vector.broadcast %859 : vector<16x1xf32> to vector<16x128xf32>
    %862 = vector.broadcast %860 : vector<1x128xf32> to vector<16x128xf32>
    %863 = arith.mulf %861, %862 : vector<16x128xf32>
    %864 = arith.maximumf %857, %863 : vector<16x128xf32>
    %865 = arith.minimumf %858, %863 : vector<16x128xf32>
    %c0_374 = arith.constant 0 : index
    %c123 = arith.constant 123 : index
    %866 = vector.load %arg3[%c0_374, %c123] : memref<16x128xf32, #tpu.memory_space<vmem>>, vector<16x1xf32>
    %c123_375 = arith.constant 123 : index
    %c0_376 = arith.constant 0 : index
    %867 = vector.load %arg4[%c123_375, %c0_376] : memref<128x128xf32, #tpu.memory_space<vmem>>, vector<1x128xf32>
    %868 = vector.broadcast %866 : vector<16x1xf32> to vector<16x128xf32>
    %869 = vector.broadcast %867 : vector<1x128xf32> to vector<16x128xf32>
    %870 = arith.mulf %868, %869 : vector<16x128xf32>
    %871 = arith.maximumf %864, %870 : vector<16x128xf32>
    %872 = arith.minimumf %865, %870 : vector<16x128xf32>
    %c0_377 = arith.constant 0 : index
    %c124 = arith.constant 124 : index
    %873 = vector.load %arg3[%c0_377, %c124] : memref<16x128xf32, #tpu.memory_space<vmem>>, vector<16x1xf32>
    %c124_378 = arith.constant 124 : index
    %c0_379 = arith.constant 0 : index
    %874 = vector.load %arg4[%c124_378, %c0_379] : memref<128x128xf32, #tpu.memory_space<vmem>>, vector<1x128xf32>
    %875 = vector.broadcast %873 : vector<16x1xf32> to vector<16x128xf32>
    %876 = vector.broadcast %874 : vector<1x128xf32> to vector<16x128xf32>
    %877 = arith.mulf %875, %876 : vector<16x128xf32>
    %878 = arith.maximumf %871, %877 : vector<16x128xf32>
    %879 = arith.minimumf %872, %877 : vector<16x128xf32>
    %c0_380 = arith.constant 0 : index
    %c125 = arith.constant 125 : index
    %880 = vector.load %arg3[%c0_380, %c125] : memref<16x128xf32, #tpu.memory_space<vmem>>, vector<16x1xf32>
    %c125_381 = arith.constant 125 : index
    %c0_382 = arith.constant 0 : index
    %881 = vector.load %arg4[%c125_381, %c0_382] : memref<128x128xf32, #tpu.memory_space<vmem>>, vector<1x128xf32>
    %882 = vector.broadcast %880 : vector<16x1xf32> to vector<16x128xf32>
    %883 = vector.broadcast %881 : vector<1x128xf32> to vector<16x128xf32>
    %884 = arith.mulf %882, %883 : vector<16x128xf32>
    %885 = arith.maximumf %878, %884 : vector<16x128xf32>
    %886 = arith.minimumf %879, %884 : vector<16x128xf32>
    %c0_383 = arith.constant 0 : index
    %c126 = arith.constant 126 : index
    %887 = vector.load %arg3[%c0_383, %c126] : memref<16x128xf32, #tpu.memory_space<vmem>>, vector<16x1xf32>
    %c126_384 = arith.constant 126 : index
    %c0_385 = arith.constant 0 : index
    %888 = vector.load %arg4[%c126_384, %c0_385] : memref<128x128xf32, #tpu.memory_space<vmem>>, vector<1x128xf32>
    %889 = vector.broadcast %887 : vector<16x1xf32> to vector<16x128xf32>
    %890 = vector.broadcast %888 : vector<1x128xf32> to vector<16x128xf32>
    %891 = arith.mulf %889, %890 : vector<16x128xf32>
    %892 = arith.maximumf %885, %891 : vector<16x128xf32>
    %893 = arith.minimumf %886, %891 : vector<16x128xf32>
    %c0_386 = arith.constant 0 : index
    %c127 = arith.constant 127 : index
    %894 = vector.load %arg3[%c0_386, %c127] : memref<16x128xf32, #tpu.memory_space<vmem>>, vector<16x1xf32>
    %c127_387 = arith.constant 127 : index
    %c0_388 = arith.constant 0 : index
    %895 = vector.load %arg4[%c127_387, %c0_388] : memref<128x128xf32, #tpu.memory_space<vmem>>, vector<1x128xf32>
    %896 = vector.broadcast %894 : vector<16x1xf32> to vector<16x128xf32>
    %897 = vector.broadcast %895 : vector<1x128xf32> to vector<16x128xf32>
    %898 = arith.mulf %896, %897 : vector<16x128xf32>
    %899 = arith.maximumf %892, %898 : vector<16x128xf32>
    %900 = arith.minimumf %893, %898 : vector<16x128xf32>
    %c0_389 = arith.constant 0 : index
    %c0_390 = arith.constant 0 : index
    %901 = vector.load %arg7[%c0_389, %c0_390] : memref<16x128xf32, #tpu.memory_space<vmem>>, vector<16x128xf32>
    tpu.vector_store %arg7[%c0_389, %c0_390], %899 {strides = array<i32>} : memref<16x128xf32, #tpu.memory_space<vmem>>, vector<16x128xf32>,
    %c0_391 = arith.constant 0 : index
    %c0_392 = arith.constant 0 : index
    %902 = vector.load %arg8[%c0_391, %c0_392] : memref<16x128xf32, #tpu.memory_space<vmem>>, vector<16x128xf32>
    tpu.vector_store %arg8[%c0_391, %c0_392], %900 {strides = array<i32>} : memref<16x128xf32, #tpu.memory_space<vmem>>, vector<16x128xf32>,
    %c1_i32 = arith.constant 1 : i32
    %903 = arith.cmpi eq, %arg2, %c1_i32 : i32
    %904 = arith.extui %903 : i1 to i32
    %c0_i32_393 = arith.constant 0 : i32
    %905 = arith.cmpi ne, %904, %c0_i32_393 : i32
    scf.if %905 {
      %906 = arith.addf %899, %900 : vector<16x128xf32>
      %c0_394 = arith.constant 0 : index
      %c0_395 = arith.constant 0 : index
      %907 = vector.load %arg5[%c0_394, %c0_395] : memref<1x128xf32, #tpu.memory_space<vmem>>, vector<1x128xf32>
      %908 = vector.broadcast %907 : vector<1x128xf32> to vector<16x128xf32>
      %909 = arith.addf %906, %908 : vector<16x128xf32>
      %c0_396 = arith.constant 0 : index
      %c0_397 = arith.constant 0 : index
      %910 = vector.load %arg6[%c0_396, %c0_397] : memref<16x128xf32, #tpu.memory_space<vmem>>, vector<16x128xf32>
      tpu.vector_store %arg6[%c0_396, %c0_397], %909 {strides = array<i32>} : memref<16x128xf32, #tpu.memory_space<vmem>>, vector<16x128xf32>,
    } else {
    }
    return
  }
  func.func @transform_0(%arg0: i32, %arg1: i32, %arg2: i32) -> (i32, i32) {
    %c0_i32 = arith.constant 0 : i32
    return %arg0, %arg2 : i32, i32
  }
  func.func @transform_1(%arg0: i32, %arg1: i32, %arg2: i32) -> (i32, i32) {
    %c0_i32 = arith.constant 0 : i32
    return %arg2, %arg1 : i32, i32
  }
  func.func @transform_2(%arg0: i32, %arg1: i32, %arg2: i32) -> (i32, i32) {
    %c0_i32 = arith.constant 0 : i32
    %c0_i32_0 = arith.constant 0 : i32
    return %c0_i32, %arg1 : i32, i32
  }
  func.func @transform_3(%arg0: i32, %arg1: i32, %arg2: i32) -> (i32, i32) {
    %c0_i32 = arith.constant 0 : i32
    return %arg0, %arg1 : i32, i32
  }
}

</mosaic_0001>

<llo_original>
// kernel: mam_fully_connected.1
$region0: #{mam_fully_connected.1}
  #allocation0 [shape = 'u32[]', space=smem, size = 0x4, offset = 0x4, fixed_abs, tag = 'smem constant byte address 0x4 - core index']
  #allocation1 [shape = 'u32[144,128]{1,0:T(1,128)}', space=vmem, size = 0x12000, scoped, tag = 'internal scratch']
  #allocation2 [shape = 'f32[16,128]{1,0:T(8,128)}', space=vmem, size = 0x2000, scoped, tag = 'scratch operand']
  #allocation3 [shape = 'f32[16,128]{1,0:T(8,128)}', space=vmem, size = 0x2000, scoped, tag = 'scratch operand']
  %s0 = inlined_call_operand.vmem [shape: f32[16,256], index: 0, kind: input, shape index: {}]
  %s1 = inlined_call_operand.vmem [shape: f32[256,128], index: 1, kind: input, shape index: {}]
  %s2 = inlined_call_operand.vmem [shape: f32[1,128], index: 2, kind: input, shape index: {}]
  %s3 = inlined_call_operand.hbm [shape: f32[16,128], index: 3, kind: output, shape index: {}]
  %s4 = sld [smem:[#allocation0]]
  $region91: #{mam_fully_connected.1} parent=0
    _
  %s6 = ssub.s32 1, %s4
  %s7 = scalar_select 0, %s6, %s4
  $region1: #{mam_fully_connected.1} parent=0
    #allocation4 [shape = 'u8[16384]{0}', space=vmem, size = 0x4000, scoped, tag = 'input window, operand 0']
    #allocation5 [shape = 'u8[8192]{0}', space=vmem, size = 0x2000, scoped, tag = 'output window, operand 0, single buffered']
    #allocation6 [shape = 's32[2]{0}', space=sflag, size = 0x8, scoped, tag = 'scoped memory for mam_fully_connected.1']
    %8 = vsyncpa [#allocation6], 0
    loop: start=0, step=1, limit=4
    $region2: #{mam_fully_connected.1} parent=1 // loop_pre_header
      _
    $region3: #{mam_fully_connected.1} parent=1 // loop_header
      %s10 = sphi 0, %s14
      %p11 = scmp.ge.s32.totalorder %s10, 4
      %s17 = sphi 0, %s36
      %s18 = sphi 0, %s32
      %s19 = sphi 0, %s28
      %s20 = sphi 0, %s17
      %s21 = sphi 0, %s18
      %s22 = sphi 0, %s19
      %s23 = sphi 0, %s20
      %s24 = sphi 0, %s21
      %s25 = sphi 0, %s22
      %s41 = sphi 0, %s43
      %s44 = sphi 0, %s41
      %s45 = sphi 0, %s44
      %s61 = sphi 0, %s45
      %s69 = sphi 0, %s71
      %s72 = sphi 0, %s69
      %s73 = sphi 0, %s72
      %s89 = sphi 0, %s73
      %s95 = sphi 0, %s97
      %s98 = sphi 0, %s95
      %s99 = sphi 0, %s98
      %s115 = sphi 0, %s99
      %s123 = sphi 0, %s125
      %s126 = sphi 0, %s123
      %s127 = sphi 0, %s126
      %s143 = sphi 0, %s127
    $region4: #{mam_fully_connected.1} parent=1 // loop_header_branch
      %13 = sbr.rel (%p11) target = $region8
    $region5: #{mam_fully_connected.1} parent=1 // loop_body
      %s15 = ssub.s32 %s10, 1
      %s16 = ssub.s32 %s10, 2
      %s26 = sadd.s32 1, %s19
      %p27 = scmp.ge.s32.totalorder %s26, 2
      %s28 = scalar_select %p27, 0, %s26
      %s29 = sadd.s32 1, %s18
      %s30 = scalar_select %p27, %s29, %s18
      %p31 = scmp.ge.s32.totalorder %s30, 1
      %s32 = scalar_select %p31, 0, %s30
      %s33 = sadd.s32 1, %s17
      %s34 = scalar_select %p31, %s33, %s17
      %p35 = scmp.ge.s32.totalorder %s34, 1
      %s36 = scalar_select %p35, 0, %s34
      %s37 = ssub.s32 %s17, %s36
      %s38 = ssub.s32 %s19, %s28
      %s39 = sor.u32 %s37, %s38
      %p40 = scmp.eq.s32.totalorder %s39, 0
      %s42 = sadd.s32 %s41, 1
      %s43 = scalar_select %p40, %s41, %s42
      %p46 = pneg %p40
      %p47 = scmp.eq.s32.totalorder %s10, 1
      %p48 = por %p46, %p47
      %p49 = scmp.ne.s32.totalorder %s41, %s44
      %p50 = scmp.eq.s32.totalorder %s10, 0
      %p51 = por %p49, %p50
      %p52 = scmp.ne.s32.totalorder %s41, %s44
      %p53 = scmp.eq.s32.totalorder %s15, 1
      %p54 = por %p52, %p53
      %p55 = scmp.ne.s32.totalorder %s44, %s45
      %p56 = scmp.eq.s32.totalorder %s15, 0
      %p57 = por %p55, %p56
      %p58 = scmp.ne.s32.totalorder %s44, %s45
      %p59 = scmp.eq.s32.totalorder %s16, 1
      %p60 = por %p58, %p59
      %p62 = scmp.ne.s32.totalorder %s45, %s61
      %p63 = scmp.eq.s32.totalorder %s16, 0
      %p64 = por %p62, %p63
      %s65 = ssub.s32 %s19, %s28
      %s66 = ssub.s32 %s18, %s32
      %s67 = sor.u32 %s65, %s66
      %p68 = scmp.eq.s32.totalorder %s67, 0
      %s70 = sadd.s32 %s69, 1
      %s71 = scalar_select %p68, %s69, %s70
      %p74 = pneg %p68
      %p75 = scmp.eq.s32.totalorder %s10, 1
      %p76 = por %p74, %p75
      %p77 = scmp.ne.s32.totalorder %s69, %s72
      %p78 = scmp.eq.s32.totalorder %s10, 0
      %p79 = por %p77, %p78
      %p80 = scmp.ne.s32.totalorder %s69, %s72
      %p81 = scmp.eq.s32.totalorder %s15, 1
      %p82 = por %p80, %p81
      %p83 = scmp.ne.s32.totalorder %s72, %s73
      %p84 = scmp.eq.s32.totalorder %s15, 0
      %p85 = por %p83, %p84
      %p86 = scmp.ne.s32.totalorder %s72, %s73
      %p87 = scmp.eq.s32.totalorder %s16, 1
      %p88 = por %p86, %p87
      %p90 = scmp.ne.s32.totalorder %s73, %s89
      %p91 = scmp.eq.s32.totalorder %s16, 0
      %p92 = por %p90, %p91
      %s93 = ssub.s32 %s18, %s32
      %p94 = scmp.eq.s32.totalorder %s93, 0
      %s96 = sadd.s32 %s95, 1
      %s97 = scalar_select %p94, %s95, %s96
      %p100 = pneg %p94
      %p101 = scmp.eq.s32.totalorder %s10, 1
      %p102 = por %p100, %p101
      %p103 = scmp.ne.s32.totalorder %s95, %s98
      %p104 = scmp.eq.s32.totalorder %s10, 0
      %p105 = por %p103, %p104
      %p106 = scmp.ne.s32.totalorder %s95, %s98
      %p107 = scmp.eq.s32.totalorder %s15, 1
      %p108 = por %p106, %p107
      %p109 = scmp.ne.s32.totalorder %s98, %s99
      %p110 = scmp.eq.s32.totalorder %s15, 0
      %p111 = por %p109, %p110
      %p112 = scmp.ne.s32.totalorder %s98, %s99
      %p113 = scmp.eq.s32.totalorder %s16, 1
      %p114 = por %p112, %p113
      %p116 = scmp.ne.s32.totalorder %s99, %s115
      %p117 = scmp.eq.s32.totalorder %s16, 0
      %p118 = por %p116, %p117
      %s119 = ssub.s32 %s17, %s36
      %s120 = ssub.s32 %s18, %s32
      %s121 = sor.u32 %s119, %s120
      %p122 = scmp.eq.s32.totalorder %s121, 0
      %s124 = sadd.s32 %s123, 1
      %s125 = scalar_select %p122, %s123, %s124
      %p128 = pneg %p122
      %p129 = scmp.eq.s32.totalorder %s10, 1
      %p130 = por %p128, %p129
      %p131 = scmp.ne.s32.totalorder %s123, %s126
      %p132 = scmp.eq.s32.totalorder %s10, 0
      %p133 = por %p131, %p132
      %p134 = scmp.ne.s32.totalorder %s123, %s126
      %p135 = scmp.eq.s32.totalorder %s15, 1
      %p136 = por %p134, %p135
      %p137 = scmp.ne.s32.totalorder %s126, %s127
      %p138 = scmp.eq.s32.totalorder %s15, 0
      %p139 = por %p137, %p138
      %p140 = scmp.ne.s32.totalorder %s126, %s127
      %p141 = scmp.eq.s32.totalorder %s16, 1
      %p142 = por %p140, %p141
      %p144 = scmp.ne.s32.totalorder %s127, %s143
      %p145 = scmp.eq.s32.totalorder %s16, 0
      %p146 = por %p144, %p145
      %p147 = scmp.le.s32.totalorder 1, %s10
      %p148 = scmp.lt.s32.totalorder %s10, 3
      %p149 = pnand %p147, %p148
      %p150 = pneg %p149
      // Predicated region
      $region9: #{mam_fully_connected.1} parent=5 // pred_check
        _
      $region10: #{mam_fully_connected.1} parent=5 // pred_check_branch
        %152 = sbr.rel (%p149) target = $region12
      $region11: #{mam_fully_connected.1} parent=5 // pred_region
        %s153 = ssub.s32 %s10, 1
        // Predicated region
        $region13: #{mam_fully_connected.1} parent=11 // pred_check
          %p154 = pneg %p111
        $region14: #{mam_fully_connected.1} parent=11 // pred_check_branch
          %156 = sbr.rel (%p154) target = $region16
        $region15: #{mam_fully_connected.1} parent=11 // pred_region
          %p157 = scmp.lt.s32.totalorder %s21, 0
          %s158 = scalar_select %p157, %s21, 0
          %s159 = scalar_lea.vmem %s2, %s158
        $region16: #{mam_fully_connected.1} parent=11 // pred_fallthru
          _
      $region12: #{mam_fully_connected.1} parent=5 // pred_fallthru
        _
      %p160 = scmp.lt.s32.totalorder %s10, 2
      // Predicated region
      $region17: #{mam_fully_connected.1} parent=5 // pred_check
        %p161 = pneg %p160
      $region18: #{mam_fully_connected.1} parent=5 // pred_check_branch
        %163 = sbr.rel (%p161) target = $region20
      $region19: #{mam_fully_connected.1} parent=5 // pred_region
        // Predicated region
        $region21: #{mam_fully_connected.1} parent=19 // pred_check
          %p164 = pneg %p51
        $region22: #{mam_fully_connected.1} parent=19 // pred_check_branch
          %166 = sbr.rel (%p164) target = $region24
        $region23: #{mam_fully_connected.1} parent=19 // pred_region
          %s167 = sand.u32 %s41, 1
          %s168 = sand.u32 %s41, 1
          %s169 = smul.addr %s168, 16
          %s170 = scalar_lea.vmem [#allocation4], %s169
          %s171 = smul.u32 2, %s17
          %s172 = smul.addr %s171, 2
          %s173 = sadd.s32 %s19, %s172
          %s174 = smul.addr %s173, 8
          %s175 = scalar_lea.vmem %s0, %s174
          // Predicated region
          $region25: #{mam_fully_connected.1} parent=23 // pred_check
            _
          $region26: #{mam_fully_connected.1} parent=23 // pred_check_branch
            %177 = sbr.rel (0) target = $region28
          $region27: #{mam_fully_connected.1} parent=23 // pred_region
            // Predicated region
            $region29: #{mam_fully_connected.1} parent=27 // pred_check
              _
            $region30: #{mam_fully_connected.1} parent=27 // pred_check_branch
              %179 = sbr.rel (0) target = $region32
            $region31: #{mam_fully_connected.1} parent=27 // pred_region
              // Predicated region
              $region44: #{mam_fully_connected.1} parent=31 // pred_check
                _
              $region45: #{mam_fully_connected.1} parent=31 // pred_check_branch
                %196 = sbr.rel (0) target = $region47
              $region46: #{mam_fully_connected.1} parent=31 // pred_region
                loop: start=0, step=1, limit=1
                $region48: #{mam_fully_connected.1} parent=46 // loop_pre_header
                  _
                $region49: #{mam_fully_connected.1} parent=46 // loop_header
                  %s198 = sphi 0, %s202
                  %p199 = scmp.ge.s32.totalorder %s198, 1
                  %s203 = sphi %s175, %s175
                  %s204 = sphi %s170, %s170
                $region50: #{mam_fully_connected.1} parent=46 // loop_header_branch
                  %201 = sbr.rel (%p199) target = $region54
                $region51: #{mam_fully_connected.1} parent=46 // loop_body
                  %v205 = vld [vmem:[%s203] sm:$0xff]
                  %206 = vst [vmem:[%s204] sm:$0xff] %v205
                  %v207 = vld [vmem:[%s203 + $0x10] sm:$0xff]
                  %208 = vst [vmem:[%s204 + $0x8] sm:$0xff] %v207
                $region52: #{mam_fully_connected.1} parent=46 // loop_footer
                  %s202 = sadd.s32 1, %s198
                $region53: #{mam_fully_connected.1} parent=46 // loop_footer_branch
                  %197 = sbr.rel target = $region49
                $region54: #{mam_fully_connected.1} parent=46 // loop_exit
                  _
              $region47: #{mam_fully_connected.1} parent=31 // pred_fallthru
                _
              // Predicated region
              $region55: #{mam_fully_connected.1} parent=31 // pred_check
                _
              $region56: #{mam_fully_connected.1} parent=31 // pred_check_branch
                %210 = sbr.rel target = $region58
              $region57: #{mam_fully_connected.1} parent=31 // pred_region
                _
              $region58: #{mam_fully_connected.1} parent=31 // pred_fallthru
                _
            $region32: #{mam_fully_connected.1} parent=27 // pred_fallthru
              _
            // Predicated region
            $region33: #{mam_fully_connected.1} parent=27 // pred_check
              _
            $region34: #{mam_fully_connected.1} parent=27 // pred_check_branch
              %181 = sbr.rel target = $region36
            $region35: #{mam_fully_connected.1} parent=27 // pred_region
              loop: start=0, step=1, limit=1
              $region37: #{mam_fully_connected.1} parent=35 // loop_pre_header
                _
              $region38: #{mam_fully_connected.1} parent=35 // loop_header
                %s184 = sphi 0, %s188
                %p185 = scmp.ge.s32.totalorder %s184, 1
                %s189 = sphi %s175, %s175
                %s190 = sphi %s170, %s170
              $region39: #{mam_fully_connected.1} parent=35 // loop_header_branch
                %187 = sbr.rel (%p185) target = $region43
              $region40: #{mam_fully_connected.1} parent=35 // loop_body
                %v191 = vld [vmem:[%s189] sm:$0xff]
                %192 = vst [vmem:[%s190] sm:$0xff] %v191
                %v193 = vld [vmem:[%s189 + $0x10] sm:$0xff]
                %194 = vst [vmem:[%s190 + $0x8] sm:$0xff] %v193
              $region41: #{mam_fully_connected.1} parent=35 // loop_footer
                %s188 = sadd.s32 1, %s184
              $region42: #{mam_fully_connected.1} parent=35 // loop_footer_branch
                %183 = sbr.rel target = $region38
              $region43: #{mam_fully_connected.1} parent=35 // loop_exit
                _
            $region36: #{mam_fully_connected.1} parent=27 // pred_fallthru
              _
          $region28: #{mam_fully_connected.1} parent=23 // pred_fallthru
            _
          %211 = vnop
        $region24: #{mam_fully_connected.1} parent=19 // pred_fallthru
          _
        // Predicated region
        $region59: #{mam_fully_connected.1} parent=19 // pred_check
          %p212 = pneg %p79
        $region60: #{mam_fully_connected.1} parent=19 // pred_check_branch
          %214 = sbr.rel (%p212) target = $region62
        $region61: #{mam_fully_connected.1} parent=19 // pred_region
          %s215 = smul.u32 16, %s19
          %p216 = scmp.lt.s32.totalorder %s215, 31
          %s217 = scalar_select %p216, %s215, 31
          %p218 = scmp.lt.s32.totalorder %s18, 0
          %s219 = scalar_select %p218, %s18, 0
          %s220 = sadd.s32 %s219, %s217
          %s221 = smul.addr %s220, 8
          %s222 = scalar_lea.vmem %s1, %s221
          %s223 = smul.u32 16, %s19
        $region62: #{mam_fully_connected.1} parent=19 // pred_fallthru
          _
      $region20: #{mam_fully_connected.1} parent=5 // pred_fallthru
        _
      %p224 = scmp.le.s32.totalorder 1, %s10
      %p225 = scmp.lt.s32.totalorder %s10, 3
      %p226 = pnand %p224, %p225
      %p227 = pneg %p226
      // Predicated region
      $region63: #{mam_fully_connected.1} parent=5 // pred_check
        _
      $region64: #{mam_fully_connected.1} parent=5 // pred_check_branch
        %229 = sbr.rel (%p226) target = $region66
      $region65: #{mam_fully_connected.1} parent=5 // pred_region
        %s230 = ssub.s32 %s10, 1
        %s231 = sand.u32 %s44, 1
        %s232 = sand.u32 %s44, 1
        %s233 = smul.addr %s232, 16
        %s234 = scalar_lea.vmem [#allocation4], %s233
        // Predicated region
        $region67: #{mam_fully_connected.1} parent=65 // pred_check
          %p235 = pneg %p57
        $region68: #{mam_fully_connected.1} parent=65 // pred_check_branch
          %237 = sbr.rel (%p235) target = $region70
        $region69: #{mam_fully_connected.1} parent=65 // pred_region
          _
        $region70: #{mam_fully_connected.1} parent=65 // pred_fallthru
          _
        %s238 = sand.u32 %s44, 1
        %s239 = sand.u32 %s44, 1
        %s240 = smul.addr %s239, 16
        %s241 = scalar_lea.vmem [#allocation4], %s240
        %p242 = pneg %p57
        %p243 = pneg %p54
        %s244 = smul.u32 16, %s22
        %p245 = scmp.lt.s32.totalorder %s244, 31
        %s246 = scalar_select %p245, %s244, 31
        %p247 = scmp.lt.s32.totalorder %s21, 0
        %s248 = scalar_select %p247, %s21, 0
        %s249 = sadd.s32 %s248, %s246
        %s250 = smul.addr %s249, 8
        %s251 = scalar_lea.vmem %s1, %s250
        %p252 = pneg %p85
        %p253 = pneg %p82
        %p254 = scmp.lt.s32.totalorder %s21, 0
        %s255 = scalar_select %p254, %s21, 0
        %s256 = scalar_lea.vmem %s2, %s255
        %p257 = pneg %p111
        %p258 = pneg %p108
        %p259 = pneg %p139
        %p260 = pneg %p136
        %s261 = smul.u32 2, %s20
        %s262 = smul.u32 16, %s22
        %p263 = scmp.lt.s32.totalorder %s262, 31
        %s264 = scalar_select %p263, %s262, 31
        %p265 = scmp.lt.s32.totalorder %s21, 0
        %s266 = scalar_select %p265, %s21, 0
        %s267 = sadd.s32 %s266, %s264
        %s268 = smul.addr %s267, 8
        %s269 = scalar_lea.vmem %s1, %s268
        %s270 = smul.u32 16, %s22
        %p271 = scmp.lt.s32.totalorder %s21, 0
        %s272 = scalar_select %p271, %s21, 0
        %s273 = scalar_lea.vmem %s2, %s272
        %s274 = smul.u32 2, %s20
        %p275 = scmp.eq.s32.totalorder %s22, 0
        // Predicated region
        $region71: #{mam_fully_connected.1} parent=65 // pred_check
          %p276 = pneg %p275
        $region72: #{mam_fully_connected.1} parent=65 // pred_check_branch
          %278 = sbr.rel (%p276) target = $region74
        $region73: #{mam_fully_connected.1} parent=65 // pred_region
          %279 = vst [vmem:[#allocation2] sm:$0xff] -inf
          %280 = vst [vmem:[#allocation2 + $0x8] sm:$0xff] -inf
          %281 = vst [vmem:[#allocation3] sm:$0xff] inf
          %282 = vst [vmem:[#allocation3 + $0x8] sm:$0xff] inf
        $region74: #{mam_fully_connected.1} parent=65 // pred_fallthru
          _
        %v283 = vld [vmem:[#allocation2] sm:$0xff]
        %v284 = vld [vmem:[#allocation2 + $0x8] sm:$0xff]
        %v285 = vld [vmem:[#allocation3] sm:$0xff]
        %v286 = vld [vmem:[#allocation3 + $0x8] sm:$0xff]
        %v287 = vld [vmem:[%s234] sm:$0xff]
        %v288 = vld [vmem:[%s234 + $0x8] sm:$0xff]
        %v289 = vld [vmem:[%s269] sm:$0x1]
        %291 = vset.pattern.permute.xlu0 0
        %292 = vperm.xlu0 %291, %v287
        %v293 = vpop.permute.xlu0 %292
        %296 = vset.pattern.permute.xlu0 0
        %297 = vperm.xlu0 %296, %v288
        %v298 = vpop.permute.xlu0 %297
        %v300 = vlaneseq
        %v301 = vshrl.u32 %v300, 7
        %v302 = vsub.s32 0, %v301
        %v303 = vrot.slane %v289, %v302
        %v304 = vmul.f32 %v293, %v303
        %v305 = vmul.f32 %v298, %v303
        %v306 = vmax.f32 %v283, %v304
        %v307 = vmax.f32 %v284, %v305
        %v308 = vmin.f32 %v285, %v304
        %v309 = vmin.f32 %v286, %v305
        %v310 = vld [vmem:[%s269 + $0x1] sm:$0x1]
        %311 = vset.pattern.permute.xlu0 1
        %312 = vperm.xlu0 %311, %v287
        %v313 = vpop.permute.xlu0 %312
        %315 = vset.pattern.permute.xlu0 1
        %316 = vperm.xlu0 %315, %v288
        %v317 = vpop.permute.xlu0 %316
        %v319 = vlaneseq
        %v320 = vshrl.u32 %v319, 7
        %v321 = vsub.s32 0, %v320
        %v322 = vrot.slane %v310, %v321
        %v323 = vmul.f32 %v313, %v322
        %v324 = vmul.f32 %v317, %v322
        %v325 = vmax.f32 %v306, %v323
        %v326 = vmax.f32 %v307, %v324
        %v327 = vmin.f32 %v308, %v323
        %v328 = vmin.f32 %v309, %v324
        %v329 = vld [vmem:[%s269 + $0x2] sm:$0x1]
        %330 = vset.pattern.permute.xlu0 2
        %331 = vperm.xlu0 %330, %v287
        %v332 = vpop.permute.xlu0 %331
        %334 = vset.pattern.permute.xlu0 2
        %335 = vperm.xlu0 %334, %v288
        %v336 = vpop.permute.xlu0 %335
        %v338 = vlaneseq
        %v339 = vshrl.u32 %v338, 7
        %v340 = vsub.s32 0, %v339
        %v341 = vrot.slane %v329, %v340
        %v342 = vmul.f32 %v332, %v341
        %v343 = vmul.f32 %v336, %v341
        %v344 = vmax.f32 %v325, %v342
        %v345 = vmax.f32 %v326, %v343
        %v346 = vmin.f32 %v327, %v342
        %v347 = vmin.f32 %v328, %v343
        %v348 = vld [vmem:[%s269 + $0x3] sm:$0x1]
        %349 = vset.pattern.permute.xlu0 3
        %350 = vperm.xlu0 %349, %v287
        %v351 = vpop.permute.xlu0 %350
        %353 = vset.pattern.permute.xlu0 3
        %354 = vperm.xlu0 %353, %v288
        %v355 = vpop.permute.xlu0 %354
        %v357 = vlaneseq
        %v358 = vshrl.u32 %v357, 7
        %v359 = vsub.s32 0, %v358
        %v360 = vrot.slane %v348, %v359
        %v361 = vmul.f32 %v351, %v360
        %v362 = vmul.f32 %v355, %v360
        %v363 = vmax.f32 %v344, %v361
        %v364 = vmax.f32 %v345, %v362
        %v365 = vmin.f32 %v346, %v361
        %v366 = vmin.f32 %v347, %v362
        %v367 = vld [vmem:[%s269 + $0x4] sm:$0x1]
        %368 = vset.pattern.permute.xlu0 4
        %369 = vperm.xlu0 %368, %v287
        %v370 = vpop.permute.xlu0 %369
        %372 = vset.pattern.permute.xlu0 4
        %373 = vperm.xlu0 %372, %v288
        %v374 = vpop.permute.xlu0 %373
        %v376 = vlaneseq
        %v377 = vshrl.u32 %v376, 7
        %v378 = vsub.s32 0, %v377
        %v379 = vrot.slane %v367, %v378
        %v380 = vmul.f32 %v370, %v379
        %v381 = vmul.f32 %v374, %v379
        %v382 = vmax.f32 %v363, %v380
        %v383 = vmax.f32 %v364, %v381
        %v384 = vmin.f32 %v365, %v380
        %v385 = vmin.f32 %v366, %v381
        %v386 = vld [vmem:[%s269 + $0x5] sm:$0x1]
        %387 = vset.pattern.permute.xlu0 5
        %388 = vperm.xlu0 %387, %v287
        %v389 = vpop.permute.xlu0 %388
        %391 = vset.pattern.permute.xlu0 5
        %392 = vperm.xlu0 %391, %v288
        %v393 = vpop.permute.xlu0 %392
        %v395 = vlaneseq
        %v396 = vshrl.u32 %v395, 7
        %v397 = vsub.s32 0, %v396
        %v398 = vrot.slane %v386, %v397
        %v399 = vmul.f32 %v389, %v398
        %v400 = vmul.f32 %v393, %v398
        %v401 = vmax.f32 %v382, %v399
        %v402 = vmax.f32 %v383, %v400
        %v403 = vmin.f32 %v384, %v399
        %v404 = vmin.f32 %v385, %v400
        %v405 = vld [vmem:[%s269 + $0x6] sm:$0x1]
        %406 = vset.pattern.permute.xlu0 6
        %407 = vperm.xlu0 %406, %v287
        %v408 = vpop.permute.xlu0 %407
        %410 = vset.pattern.permute.xlu0 6
        %411 = vperm.xlu0 %410, %v288
        %v412 = vpop.permute.xlu0 %411
        %v414 = vlaneseq
        %v415 = vshrl.u32 %v414, 7
        %v416 = vsub.s32 0, %v415
        %v417 = vrot.slane %v405, %v416
        %v418 = vmul.f32 %v408, %v417
        %v419 = vmul.f32 %v412, %v417
        %v420 = vmax.f32 %v401, %v418
        %v421 = vmax.f32 %v402, %v419
        %v422 = vmin.f32 %v403, %v418
        %v423 = vmin.f32 %v404, %v419
        %v424 = vld [vmem:[%s269 + $0x7] sm:$0x1]
        %425 = vset.pattern.permute.xlu0 7
        %426 = vperm.xlu0 %425, %v287
        %v427 = vpop.permute.xlu0 %426
        %429 = vset.pattern.permute.xlu0 7
        %430 = vperm.xlu0 %429, %v288
        %v431 = vpop.permute.xlu0 %430
        %v433 = vlaneseq
        %v434 = vshrl.u32 %v433, 7
        %v435 = vsub.s32 0, %v434
        %v436 = vrot.slane %v424, %v435
        %v437 = vmul.f32 %v427, %v436
        %v438 = vmul.f32 %v431, %v436
        %v439 = vmax.f32 %v420, %v437
        %v440 = vmax.f32 %v421, %v438
        %v441 = vmin.f32 %v422, %v437
        %v442 = vmin.f32 %v423, %v438
        %v443 = vld [vmem:[%s269 + $0x8] sm:$0x1]
        %444 = vset.pattern.permute.xlu0 8
        %445 = vperm.xlu0 %444, %v287
        %v446 = vpop.permute.xlu0 %445
        %448 = vset.pattern.permute.xlu0 8
        %449 = vperm.xlu0 %448, %v288
        %v450 = vpop.permute.xlu0 %449
        %v452 = vlaneseq
        %v453 = vshrl.u32 %v452, 7
        %v454 = vsub.s32 0, %v453
        %v455 = vrot.slane %v443, %v454
        %v456 = vmul.f32 %v446, %v455
        %v457 = vmul.f32 %v450, %v455
        %v458 = vmax.f32 %v439, %v456
        %v459 = vmax.f32 %v440, %v457
        %v460 = vmin.f32 %v441, %v456
        %v461 = vmin.f32 %v442, %v457
        %v462 = vld [vmem:[%s269 + $0x9] sm:$0x1]
        %463 = vset.pattern.permute.xlu0 9
        %464 = vperm.xlu0 %463, %v287
        %v465 = vpop.permute.xlu0 %464
        %467 = vset.pattern.permute.xlu0 9
        %468 = vperm.xlu0 %467, %v288
        %v469 = vpop.permute.xlu0 %468
        %v471 = vlaneseq
        %v472 = vshrl.u32 %v471, 7
        %v473 = vsub.s32 0, %v472
        %v474 = vrot.slane %v462, %v473
        %v475 = vmul.f32 %v465, %v474
        %v476 = vmul.f32 %v469, %v474
        %v477 = vmax.f32 %v458, %v475
        %v478 = vmax.f32 %v459, %v476
        %v479 = vmin.f32 %v460, %v475
        %v480 = vmin.f32 %v461, %v476
        %v481 = vld [vmem:[%s269 + $0xa] sm:$0x1]
        %482 = vset.pattern.permute.xlu0 10
        %483 = vperm.xlu0 %482, %v287
        %v484 = vpop.permute.xlu0 %483
        %486 = vset.pattern.permute.xlu0 10
        %487 = vperm.xlu0 %486, %v288
        %v488 = vpop.permute.xlu0 %487
        %v490 = vlaneseq
        %v491 = vshrl.u32 %v490, 7
        %v492 = vsub.s32 0, %v491
        %v493 = vrot.slane %v481, %v492
        %v494 = vmul.f32 %v484, %v493
        %v495 = vmul.f32 %v488, %v493
        %v496 = vmax.f32 %v477, %v494
        %v497 = vmax.f32 %v478, %v495
        %v498 = vmin.f32 %v479, %v494
        %v499 = vmin.f32 %v480, %v495
        %v500 = vld [vmem:[%s269 + $0xb] sm:$0x1]
        %501 = vset.pattern.permute.xlu0 11
        %502 = vperm.xlu0 %501, %v287
        %v503 = vpop.permute.xlu0 %502
        %505 = vset.pattern.permute.xlu0 11
        %506 = vperm.xlu0 %505, %v288
        %v507 = vpop.permute.xlu0 %506
        %v509 = vlaneseq
        %v510 = vshrl.u32 %v509, 7
        %v511 = vsub.s32 0, %v510
        %v512 = vrot.slane %v500, %v511
        %v513 = vmul.f32 %v503, %v512
        %v514 = vmul.f32 %v507, %v512
        %v515 = vmax.f32 %v496, %v513
        %v516 = vmax.f32 %v497, %v514
        %v517 = vmin.f32 %v498, %v513
        %v518 = vmin.f32 %v499, %v514
        %v519 = vld [vmem:[%s269 + $0xc] sm:$0x1]
        %520 = vset.pattern.permute.xlu0 12
        %521 = vperm.xlu0 %520, %v287
        %v522 = vpop.permute.xlu0 %521
        %524 = vset.pattern.permute.xlu0 12
        %525 = vperm.xlu0 %524, %v288
        %v526 = vpop.permute.xlu0 %525
        %v528 = vlaneseq
        %v529 = vshrl.u32 %v528, 7
        %v530 = vsub.s32 0, %v529
        %v531 = vrot.slane %v519, %v530
        %v532 = vmul.f32 %v522, %v531
        %v533 = vmul.f32 %v526, %v531
        %v534 = vmax.f32 %v515, %v532
        %v535 = vmax.f32 %v516, %v533
        %v536 = vmin.f32 %v517, %v532
        %v537 = vmin.f32 %v518, %v533
        %v538 = vld [vmem:[%s269 + $0xd] sm:$0x1]
        %539 = vset.pattern.permute.xlu0 13
        %540 = vperm.xlu0 %539, %v287
        %v541 = vpop.permute.xlu0 %540
        %543 = vset.pattern.permute.xlu0 13
        %544 = vperm.xlu0 %543, %v288
        %v545 = vpop.permute.xlu0 %544
        %v547 = vlaneseq
        %v548 = vshrl.u32 %v547, 7
        %v549 = vsub.s32 0, %v548
        %v550 = vrot.slane %v538, %v549
        %v551 = vmul.f32 %v541, %v550
        %v552 = vmul.f32 %v545, %v550
        %v553 = vmax.f32 %v534, %v551
        %v554 = vmax.f32 %v535, %v552
        %v555 = vmin.f32 %v536, %v551
        %v556 = vmin.f32 %v537, %v552
        %v557 = vld [vmem:[%s269 + $0xe] sm:$0x1]
        %558 = vset.pattern.permute.xlu0 14
        %559 = vperm.xlu0 %558, %v287
        %v560 = vpop.permute.xlu0 %559
        %562 = vset.pattern.permute.xlu0 14
        %563 = vperm.xlu0 %562, %v288
        %v564 = vpop.permute.xlu0 %563
        %v566 = vlaneseq
        %v567 = vshrl.u32 %v566, 7
        %v568 = vsub.s32 0, %v567
        %v569 = vrot.slane %v557, %v568
        %v570 = vmul.f32 %v560, %v569
        %v571 = vmul.f32 %v564, %v569
        %v572 = vmax.f32 %v553, %v570
        %v573 = vmax.f32 %v554, %v571
        %v574 = vmin.f32 %v555, %v570
        %v575 = vmin.f32 %v556, %v571
        %v576 = vld [vmem:[%s269 + $0xf] sm:$0x1]
        %577 = vset.pattern.permute.xlu0 15
        %578 = vperm.xlu0 %577, %v287
        %v579 = vpop.permute.xlu0 %578
        %581 = vset.pattern.permute.xlu0 15
        %582 = vperm.xlu0 %581, %v288
        %v583 = vpop.permute.xlu0 %582
        %v585 = vlaneseq
        %v586 = vshrl.u32 %v585, 7
        %v587 = vsub.s32 0, %v586
        %v588 = vrot.slane %v576, %v587
        %v589 = vmul.f32 %v579, %v588
        %v590 = vmul.f32 %v583, %v588
        %v591 = vmax.f32 %v572, %v589
        %v592 = vmax.f32 %v573, %v590
        %v593 = vmin.f32 %v574, %v589
        %v594 = vmin.f32 %v575, %v590
        %v595 = vld [vmem:[%s269 + $0x10] sm:$0x1]
        %596 = vset.pattern.permute.xlu0 16
        %597 = vperm.xlu0 %596, %v287
        %v598 = vpop.permute.xlu0 %597
        %600 = vset.pattern.permute.xlu0 16
        %601 = vperm.xlu0 %600, %v288
        %v602 = vpop.permute.xlu0 %601
        %v604 = vlaneseq
        %v605 = vshrl.u32 %v604, 7
        %v606 = vsub.s32 0, %v605
        %v607 = vrot.slane %v595, %v606
        %v608 = vmul.f32 %v598, %v607
        %v609 = vmul.f32 %v602, %v607
        %v610 = vmax.f32 %v591, %v608
        %v611 = vmax.f32 %v592, %v609
        %v612 = vmin.f32 %v593, %v608
        %v613 = vmin.f32 %v594, %v609
        %v614 = vld [vmem:[%s269 + $0x11] sm:$0x1]
        %615 = vset.pattern.permute.xlu0 17
        %616 = vperm.xlu0 %615, %v287
        %v617 = vpop.permute.xlu0 %616
        %619 = vset.pattern.permute.xlu0 17
        %620 = vperm.xlu0 %619, %v288
        %v621 = vpop.permute.xlu0 %620
        %v623 = vlaneseq
        %v624 = vshrl.u32 %v623, 7
        %v625 = vsub.s32 0, %v624
        %v626 = vrot.slane %v614, %v625
        %v627 = vmul.f32 %v617, %v626
        %v628 = vmul.f32 %v621, %v626
        %v629 = vmax.f32 %v610, %v627
        %v630 = vmax.f32 %v611, %v628
        %v631 = vmin.f32 %v612, %v627
        %v632 = vmin.f32 %v613, %v628
        %v633 = vld [vmem:[%s269 + $0x12] sm:$0x1]
        %634 = vset.pattern.permute.xlu0 18
        %635 = vperm.xlu0 %634, %v287
        %v636 = vpop.permute.xlu0 %635
        %638 = vset.pattern.permute.xlu0 18
        %639 = vperm.xlu0 %638, %v288
        %v640 = vpop.permute.xlu0 %639
        %v642 = vlaneseq
        %v643 = vshrl.u32 %v642, 7
        %v644 = vsub.s32 0, %v643
        %v645 = vrot.slane %v633, %v644
        %v646 = vmul.f32 %v636, %v645
        %v647 = vmul.f32 %v640, %v645
        %v648 = vmax.f32 %v629, %v646
        %v649 = vmax.f32 %v630, %v647
        %v650 = vmin.f32 %v631, %v646
        %v651 = vmin.f32 %v632, %v647
        %v652 = vld [vmem:[%s269 + $0x13] sm:$0x1]
        %653 = vset.pattern.permute.xlu0 19
        %654 = vperm.xlu0 %653, %v287
        %v655 = vpop.permute.xlu0 %654
        %657 = vset.pattern.permute.xlu0 19
        %658 = vperm.xlu0 %657, %v288
        %v659 = vpop.permute.xlu0 %658
        %v661 = vlaneseq
        %v662 = vshrl.u32 %v661, 7
        %v663 = vsub.s32 0, %v662
        %v664 = vrot.slane %v652, %v663
        %v665 = vmul.f32 %v655, %v664
        %v666 = vmul.f32 %v659, %v664
        %v667 = vmax.f32 %v648, %v665
        %v668 = vmax.f32 %v649, %v666
        %v669 = vmin.f32 %v650, %v665
        %v670 = vmin.f32 %v651, %v666
        %v671 = vld [vmem:[%s269 + $0x14] sm:$0x1]
        %672 = vset.pattern.permute.xlu0 20
        %673 = vperm.xlu0 %672, %v287
        %v674 = vpop.permute.xlu0 %673
        %676 = vset.pattern.permute.xlu0 20
        %677 = vperm.xlu0 %676, %v288
        %v678 = vpop.permute.xlu0 %677
        %v680 = vlaneseq
        %v681 = vshrl.u32 %v680, 7
        %v682 = vsub.s32 0, %v681
        %v683 = vrot.slane %v671, %v682
        %v684 = vmul.f32 %v674, %v683
        %v685 = vmul.f32 %v678, %v683
        %v686 = vmax.f32 %v667, %v684
        %v687 = vmax.f32 %v668, %v685
        %v688 = vmin.f32 %v669, %v684
        %v689 = vmin.f32 %v670, %v685
        %v690 = vld [vmem:[%s269 + $0x15] sm:$0x1]
        %691 = vset.pattern.permute.xlu0 21
        %692 = vperm.xlu0 %691, %v287
        %v693 = vpop.permute.xlu0 %692
        %695 = vset.pattern.permute.xlu0 21
        %696 = vperm.xlu0 %695, %v288
        %v697 = vpop.permute.xlu0 %696
        %v699 = vlaneseq
        %v700 = vshrl.u32 %v699, 7
        %v701 = vsub.s32 0, %v700
        %v702 = vrot.slane %v690, %v701
        %v703 = vmul.f32 %v693, %v702
        %v704 = vmul.f32 %v697, %v702
        %v705 = vmax.f32 %v686, %v703
        %v706 = vmax.f32 %v687, %v704
        %v707 = vmin.f32 %v688, %v703
        %v708 = vmin.f32 %v689, %v704
        %v709 = vld [vmem:[%s269 + $0x16] sm:$0x1]
        %710 = vset.pattern.permute.xlu0 22
        %711 = vperm.xlu0 %710, %v287
        %v712 = vpop.permute.xlu0 %711
        %714 = vset.pattern.permute.xlu0 22
        %715 = vperm.xlu0 %714, %v288
        %v716 = vpop.permute.xlu0 %715
        %v718 = vlaneseq
        %v719 = vshrl.u32 %v718, 7
        %v720 = vsub.s32 0, %v719
        %v721 = vrot.slane %v709, %v720
        %v722 = vmul.f32 %v712, %v721
        %v723 = vmul.f32 %v716, %v721
        %v724 = vmax.f32 %v705, %v722
        %v725 = vmax.f32 %v706, %v723
        %v726 = vmin.f32 %v707, %v722
        %v727 = vmin.f32 %v708, %v723
        %v728 = vld [vmem:[%s269 + $0x17] sm:$0x1]
        %729 = vset.pattern.permute.xlu0 23
        %730 = vperm.xlu0 %729, %v287
        %v731 = vpop.permute.xlu0 %730
        %733 = vset.pattern.permute.xlu0 23
        %734 = vperm.xlu0 %733, %v288
        %v735 = vpop.permute.xlu0 %734
        %v737 = vlaneseq
        %v738 = vshrl.u32 %v737, 7
        %v739 = vsub.s32 0, %v738
        %v740 = vrot.slane %v728, %v739
        %v741 = vmul.f32 %v731, %v740
        %v742 = vmul.f32 %v735, %v740
        %v743 = vmax.f32 %v724, %v741
        %v744 = vmax.f32 %v725, %v742
        %v745 = vmin.f32 %v726, %v741
        %v746 = vmin.f32 %v727, %v742
        %v747 = vld [vmem:[%s269 + $0x18] sm:$0x1]
        %748 = vset.pattern.permute.xlu0 24
        %749 = vperm.xlu0 %748, %v287
        %v750 = vpop.permute.xlu0 %749
        %752 = vset.pattern.permute.xlu0 24
        %753 = vperm.xlu0 %752, %v288
        %v754 = vpop.permute.xlu0 %753
        %v756 = vlaneseq
        %v757 = vshrl.u32 %v756, 7
        %v758 = vsub.s32 0, %v757
        %v759 = vrot.slane %v747, %v758
        %v760 = vmul.f32 %v750, %v759
        %v761 = vmul.f32 %v754, %v759
        %v762 = vmax.f32 %v743, %v760
        %v763 = vmax.f32 %v744, %v761
        %v764 = vmin.f32 %v745, %v760
        %v765 = vmin.f32 %v746, %v761
        %v766 = vld [vmem:[%s269 + $0x19] sm:$0x1]
        %767 = vset.pattern.permute.xlu0 25
        %768 = vperm.xlu0 %767, %v287
        %v769 = vpop.permute.xlu0 %768
        %771 = vset.pattern.permute.xlu0 25
        %772 = vperm.xlu0 %771, %v288
        %v773 = vpop.permute.xlu0 %772
        %v775 = vlaneseq
        %v776 = vshrl.u32 %v775, 7
        %v777 = vsub.s32 0, %v776
        %v778 = vrot.slane %v766, %v777
        %v779 = vmul.f32 %v769, %v778
        %v780 = vmul.f32 %v773, %v778
        %v781 = vmax.f32 %v762, %v779
        %v782 = vmax.f32 %v763, %v780
        %v783 = vmin.f32 %v764, %v779
        %v784 = vmin.f32 %v765, %v780
        %v785 = vld [vmem:[%s269 + $0x1a] sm:$0x1]
        %786 = vset.pattern.permute.xlu0 26
        %787 = vperm.xlu0 %786, %v287
        %v788 = vpop.permute.xlu0 %787
        %790 = vset.pattern.permute.xlu0 26
        %791 = vperm.xlu0 %790, %v288
        %v792 = vpop.permute.xlu0 %791
        %v794 = vlaneseq
        %v795 = vshrl.u32 %v794, 7
        %v796 = vsub.s32 0, %v795
        %v797 = vrot.slane %v785, %v796
        %v798 = vmul.f32 %v788, %v797
        %v799 = vmul.f32 %v792, %v797
        %v800 = vmax.f32 %v781, %v798
        %v801 = vmax.f32 %v782, %v799
        %v802 = vmin.f32 %v783, %v798
        %v803 = vmin.f32 %v784, %v799
        %v804 = vld [vmem:[%s269 + $0x1b] sm:$0x1]
        %805 = vset.pattern.permute.xlu0 27
        %806 = vperm.xlu0 %805, %v287
        %v807 = vpop.permute.xlu0 %806
        %809 = vset.pattern.permute.xlu0 27
        %810 = vperm.xlu0 %809, %v288
        %v811 = vpop.permute.xlu0 %810
        %v813 = vlaneseq
        %v814 = vshrl.u32 %v813, 7
        %v815 = vsub.s32 0, %v814
        %v816 = vrot.slane %v804, %v815
        %v817 = vmul.f32 %v807, %v816
        %v818 = vmul.f32 %v811, %v816
        %v819 = vmax.f32 %v800, %v817
        %v820 = vmax.f32 %v801, %v818
        %v821 = vmin.f32 %v802, %v817
        %v822 = vmin.f32 %v803, %v818
        %v823 = vld [vmem:[%s269 + $0x1c] sm:$0x1]
        %824 = vset.pattern.permute.xlu0 28
        %825 = vperm.xlu0 %824, %v287
        %v826 = vpop.permute.xlu0 %825
        %828 = vset.pattern.permute.xlu0 28
        %829 = vperm.xlu0 %828, %v288
        %v830 = vpop.permute.xlu0 %829
        %v832 = vlaneseq
        %v833 = vshrl.u32 %v832, 7
        %v834 = vsub.s32 0, %v833
        %v835 = vrot.slane %v823, %v834
        %v836 = vmul.f32 %v826, %v835
        %v837 = vmul.f32 %v830, %v835
        %v838 = vmax.f32 %v819, %v836
        %v839 = vmax.f32 %v820, %v837
        %v840 = vmin.f32 %v821, %v836
        %v841 = vmin.f32 %v822, %v837
        %v842 = vld [vmem:[%s269 + $0x1d] sm:$0x1]
        %843 = vset.pattern.permute.xlu0 29
        %844 = vperm.xlu0 %843, %v287
        %v845 = vpop.permute.xlu0 %844
        %847 = vset.pattern.permute.xlu0 29
        %848 = vperm.xlu0 %847, %v288
        %v849 = vpop.permute.xlu0 %848
        %v851 = vlaneseq
        %v852 = vshrl.u32 %v851, 7
        %v853 = vsub.s32 0, %v852
        %v854 = vrot.slane %v842, %v853
        %v855 = vmul.f32 %v845, %v854
        %v856 = vmul.f32 %v849, %v854
        %v857 = vmax.f32 %v838, %v855
        %v858 = vmax.f32 %v839, %v856
        %v859 = vmin.f32 %v840, %v855
        %v860 = vmin.f32 %v841, %v856
        %v861 = vld [vmem:[%s269 + $0x1e] sm:$0x1]
        %862 = vset.pattern.permute.xlu0 30
        %863 = vperm.xlu0 %862, %v287
        %v864 = vpop.permute.xlu0 %863
        %866 = vset.pattern.permute.xlu0 30
        %867 = vperm.xlu0 %866, %v288
        %v868 = vpop.permute.xlu0 %867
        %v870 = vlaneseq
        %v871 = vshrl.u32 %v870, 7
        %v872 = vsub.s32 0, %v871
        %v873 = vrot.slane %v861, %v872
        %v874 = vmul.f32 %v864, %v873
        %v875 = vmul.f32 %v868, %v873
        %v876 = vmax.f32 %v857, %v874
        %v877 = vmax.f32 %v858, %v875
        %v878 = vmin.f32 %v859, %v874
        %v879 = vmin.f32 %v860, %v875
        %v880 = vld [vmem:[%s269 + $0x1f] sm:$0x1]
        %881 = vset.pattern.permute.xlu0 31
        %882 = vperm.xlu0 %881, %v287
        %v883 = vpop.permute.xlu0 %882
        %885 = vset.pattern.permute.xlu0 31
        %886 = vperm.xlu0 %885, %v288
        %v887 = vpop.permute.xlu0 %886
        %v889 = vlaneseq
        %v890 = vshrl.u32 %v889, 7
        %v891 = vsub.s32 0, %v890
        %v892 = vrot.slane %v880, %v891
        %v893 = vmul.f32 %v883, %v892
        %v894 = vmul.f32 %v887, %v892
        %v895 = vmax.f32 %v876, %v893
        %v896 = vmax.f32 %v877, %v894
        %v897 = vmin.f32 %v878, %v893
        %v898 = vmin.f32 %v879, %v894
        %v899 = vld [vmem:[%s269 + $0x20] sm:$0x1]
        %900 = vset.pattern.permute.xlu0 32
        %901 = vperm.xlu0 %900, %v287
        %v902 = vpop.permute.xlu0 %901
        %904 = vset.pattern.permute.xlu0 32
        %905 = vperm.xlu0 %904, %v288
        %v906 = vpop.permute.xlu0 %905
        %v908 = vlaneseq
        %v909 = vshrl.u32 %v908, 7
        %v910 = vsub.s32 0, %v909
        %v911 = vrot.slane %v899, %v910
        %v912 = vmul.f32 %v902, %v911
        %v913 = vmul.f32 %v906, %v911
        %v914 = vmax.f32 %v895, %v912
        %v915 = vmax.f32 %v896, %v913
        %v916 = vmin.f32 %v897, %v912
        %v917 = vmin.f32 %v898, %v913
        %v918 = vld [vmem:[%s269 + $0x21] sm:$0x1]
        %919 = vset.pattern.permute.xlu0 33
        %920 = vperm.xlu0 %919, %v287
        %v921 = vpop.permute.xlu0 %920
        %923 = vset.pattern.permute.xlu0 33
        %924 = vperm.xlu0 %923, %v288
        %v925 = vpop.permute.xlu0 %924
        %v927 = vlaneseq
        %v928 = vshrl.u32 %v927, 7
        %v929 = vsub.s32 0, %v928
        %v930 = vrot.slane %v918, %v929
        %v931 = vmul.f32 %v921, %v930
        %v932 = vmul.f32 %v925, %v930
        %v933 = vmax.f32 %v914, %v931
        %v934 = vmax.f32 %v915, %v932
        %v935 = vmin.f32 %v916, %v931
        %v936 = vmin.f32 %v917, %v932
        %v937 = vld [vmem:[%s269 + $0x22] sm:$0x1]
        %938 = vset.pattern.permute.xlu0 34
        %939 = vperm.xlu0 %938, %v287
        %v940 = vpop.permute.xlu0 %939
        %942 = vset.pattern.permute.xlu0 34
        %943 = vperm.xlu0 %942, %v288
        %v944 = vpop.permute.xlu0 %943
        %v946 = vlaneseq
        %v947 = vshrl.u32 %v946, 7
        %v948 = vsub.s32 0, %v947
        %v949 = vrot.slane %v937, %v948
        %v950 = vmul.f32 %v940, %v949
        %v951 = vmul.f32 %v944, %v949
        %v952 = vmax.f32 %v933, %v950
        %v953 = vmax.f32 %v934, %v951
        %v954 = vmin.f32 %v935, %v950
        %v955 = vmin.f32 %v936, %v951
        %v956 = vld [vmem:[%s269 + $0x23] sm:$0x1]
        %957 = vset.pattern.permute.xlu0 35
        %958 = vperm.xlu0 %957, %v287
        %v959 = vpop.permute.xlu0 %958
        %961 = vset.pattern.permute.xlu0 35
        %962 = vperm.xlu0 %961, %v288
        %v963 = vpop.permute.xlu0 %962
        %v965 = vlaneseq
        %v966 = vshrl.u32 %v965, 7
        %v967 = vsub.s32 0, %v966
        %v968 = vrot.slane %v956, %v967
        %v969 = vmul.f32 %v959, %v968
        %v970 = vmul.f32 %v963, %v968
        %v971 = vmax.f32 %v952, %v969
        %v972 = vmax.f32 %v953, %v970
        %v973 = vmin.f32 %v954, %v969
        %v974 = vmin.f32 %v955, %v970
        %v975 = vld [vmem:[%s269 + $0x24] sm:$0x1]
        %976 = vset.pattern.permute.xlu0 36
        %977 = vperm.xlu0 %976, %v287
        %v978 = vpop.permute.xlu0 %977
        %980 = vset.pattern.permute.xlu0 36
        %981 = vperm.xlu0 %980, %v288
        %v982 = vpop.permute.xlu0 %981
        %v984 = vlaneseq
        %v985 = vshrl.u32 %v984, 7
        %v986 = vsub.s32 0, %v985
        %v987 = vrot.slane %v975, %v986
        %v988 = vmul.f32 %v978, %v987
        %v989 = vmul.f32 %v982, %v987
        %v990 = vmax.f32 %v971, %v988
        %v991 = vmax.f32 %v972, %v989
        %v992 = vmin.f32 %v973, %v988
        %v993 = vmin.f32 %v974, %v989
        %v994 = vld [vmem:[%s269 + $0x25] sm:$0x1]
        %995 = vset.pattern.permute.xlu0 37
        %996 = vperm.xlu0 %995, %v287
        %v997 = vpop.permute.xlu0 %996
        %999 = vset.pattern.permute.xlu0 37
        %1000 = vperm.xlu0 %999, %v288
        %v1001 = vpop.permute.xlu0 %1000
        %v1003 = vlaneseq
        %v1004 = vshrl.u32 %v1003, 7
        %v1005 = vsub.s32 0, %v1004
        %v1006 = vrot.slane %v994, %v1005
        %v1007 = vmul.f32 %v997, %v1006
        %v1008 = vmul.f32 %v1001, %v1006
        %v1009 = vmax.f32 %v990, %v1007
        %v1010 = vmax.f32 %v991, %v1008
        %v1011 = vmin.f32 %v992, %v1007
        %v1012 = vmin.f32 %v993, %v1008
        %v1013 = vld [vmem:[%s269 + $0x26] sm:$0x1]
        %1014 = vset.pattern.permute.xlu0 38
        %1015 = vperm.xlu0 %1014, %v287
        %v1016 = vpop.permute.xlu0 %1015
        %1018 = vset.pattern.permute.xlu0 38
        %1019 = vperm.xlu0 %1018, %v288
        %v1020 = vpop.permute.xlu0 %1019
        %v1022 = vlaneseq
        %v1023 = vshrl.u32 %v1022, 7
        %v1024 = vsub.s32 0, %v1023
        %v1025 = vrot.slane %v1013, %v1024
        %v1026 = vmul.f32 %v1016, %v1025
        %v1027 = vmul.f32 %v1020, %v1025
        %v1028 = vmax.f32 %v1009, %v1026
        %v1029 = vmax.f32 %v1010, %v1027
        %v1030 = vmin.f32 %v1011, %v1026
        %v1031 = vmin.f32 %v1012, %v1027
        %v1032 = vld [vmem:[%s269 + $0x27] sm:$0x1]
        %1033 = vset.pattern.permute.xlu0 39
        %1034 = vperm.xlu0 %1033, %v287
        %v1035 = vpop.permute.xlu0 %1034
        %1037 = vset.pattern.permute.xlu0 39
        %1038 = vperm.xlu0 %1037, %v288
        %v1039 = vpop.permute.xlu0 %1038
        %v1041 = vlaneseq
        %v1042 = vshrl.u32 %v1041, 7
        %v1043 = vsub.s32 0, %v1042
        %v1044 = vrot.slane %v1032, %v1043
        %v1045 = vmul.f32 %v1035, %v1044
        %v1046 = vmul.f32 %v1039, %v1044
        %v1047 = vmax.f32 %v1028, %v1045
        %v1048 = vmax.f32 %v1029, %v1046
        %v1049 = vmin.f32 %v1030, %v1045
        %v1050 = vmin.f32 %v1031, %v1046
        %v1051 = vld [vmem:[%s269 + $0x28] sm:$0x1]
        %1052 = vset.pattern.permute.xlu0 40
        %1053 = vperm.xlu0 %1052, %v287
        %v1054 = vpop.permute.xlu0 %1053
        %1056 = vset.pattern.permute.xlu0 40
        %1057 = vperm.xlu0 %1056, %v288
        %v1058 = vpop.permute.xlu0 %1057
        %v1060 = vlaneseq
        %v1061 = vshrl.u32 %v1060, 7
        %v1062 = vsub.s32 0, %v1061
        %v1063 = vrot.slane %v1051, %v1062
        %v1064 = vmul.f32 %v1054, %v1063
        %v1065 = vmul.f32 %v1058, %v1063
        %v1066 = vmax.f32 %v1047, %v1064
        %v1067 = vmax.f32 %v1048, %v1065
        %v1068 = vmin.f32 %v1049, %v1064
        %v1069 = vmin.f32 %v1050, %v1065
        %v1070 = vld [vmem:[%s269 + $0x29] sm:$0x1]
        %1071 = vset.pattern.permute.xlu0 41
        %1072 = vperm.xlu0 %1071, %v287
        %v1073 = vpop.permute.xlu0 %1072
        %1075 = vset.pattern.permute.xlu0 41
        %1076 = vperm.xlu0 %1075, %v288
        %v1077 = vpop.permute.xlu0 %1076
        %v1079 = vlaneseq
        %v1080 = vshrl.u32 %v1079, 7
        %v1081 = vsub.s32 0, %v1080
        %v1082 = vrot.slane %v1070, %v1081
        %v1083 = vmul.f32 %v1073, %v1082
        %v1084 = vmul.f32 %v1077, %v1082
        %v1085 = vmax.f32 %v1066, %v1083
        %v1086 = vmax.f32 %v1067, %v1084
        %v1087 = vmin.f32 %v1068, %v1083
        %v1088 = vmin.f32 %v1069, %v1084
        %v1089 = vld [vmem:[%s269 + $0x2a] sm:$0x1]
        %1090 = vset.pattern.permute.xlu0 42
        %1091 = vperm.xlu0 %1090, %v287
        %v1092 = vpop.permute.xlu0 %1091
        %1094 = vset.pattern.permute.xlu0 42
        %1095 = vperm.xlu0 %1094, %v288
        %v1096 = vpop.permute.xlu0 %1095
        %v1098 = vlaneseq
        %v1099 = vshrl.u32 %v1098, 7
        %v1100 = vsub.s32 0, %v1099
        %v1101 = vrot.slane %v1089, %v1100
        %v1102 = vmul.f32 %v1092, %v1101
        %v1103 = vmul.f32 %v1096, %v1101
        %v1104 = vmax.f32 %v1085, %v1102
        %v1105 = vmax.f32 %v1086, %v1103
        %v1106 = vmin.f32 %v1087, %v1102
        %v1107 = vmin.f32 %v1088, %v1103
        %v1108 = vld [vmem:[%s269 + $0x2b] sm:$0x1]
        %1109 = vset.pattern.permute.xlu0 43
        %1110 = vperm.xlu0 %1109, %v287
        %v1111 = vpop.permute.xlu0 %1110
        %1113 = vset.pattern.permute.xlu0 43
        %1114 = vperm.xlu0 %1113, %v288
        %v1115 = vpop.permute.xlu0 %1114
        %v1117 = vlaneseq
        %v1118 = vshrl.u32 %v1117, 7
        %v1119 = vsub.s32 0, %v1118
        %v1120 = vrot.slane %v1108, %v1119
        %v1121 = vmul.f32 %v1111, %v1120
        %v1122 = vmul.f32 %v1115, %v1120
        %v1123 = vmax.f32 %v1104, %v1121
        %v1124 = vmax.f32 %v1105, %v1122
        %v1125 = vmin.f32 %v1106, %v1121
        %v1126 = vmin.f32 %v1107, %v1122
        %v1127 = vld [vmem:[%s269 + $0x2c] sm:$0x1]
        %1128 = vset.pattern.permute.xlu0 44
        %1129 = vperm.xlu0 %1128, %v287
        %v1130 = vpop.permute.xlu0 %1129
        %1132 = vset.pattern.permute.xlu0 44
        %1133 = vperm.xlu0 %1132, %v288
        %v1134 = vpop.permute.xlu0 %1133
        %v1136 = vlaneseq
        %v1137 = vshrl.u32 %v1136, 7
        %v1138 = vsub.s32 0, %v1137
        %v1139 = vrot.slane %v1127, %v1138
        %v1140 = vmul.f32 %v1130, %v1139
        %v1141 = vmul.f32 %v1134, %v1139
        %v1142 = vmax.f32 %v1123, %v1140
        %v1143 = vmax.f32 %v1124, %v1141
        %v1144 = vmin.f32 %v1125, %v1140
        %v1145 = vmin.f32 %v1126, %v1141
        %v1146 = vld [vmem:[%s269 + $0x2d] sm:$0x1]
        %1147 = vset.pattern.permute.xlu0 45
        %1148 = vperm.xlu0 %1147, %v287
        %v1149 = vpop.permute.xlu0 %1148
        %1151 = vset.pattern.permute.xlu0 45
        %1152 = vperm.xlu0 %1151, %v288
        %v1153 = vpop.permute.xlu0 %1152
        %v1155 = vlaneseq
        %v1156 = vshrl.u32 %v1155, 7
        %v1157 = vsub.s32 0, %v1156
        %v1158 = vrot.slane %v1146, %v1157
        %v1159 = vmul.f32 %v1149, %v1158
        %v1160 = vmul.f32 %v1153, %v1158
        %v1161 = vmax.f32 %v1142, %v1159
        %v1162 = vmax.f32 %v1143, %v1160
        %v1163 = vmin.f32 %v1144, %v1159
        %v1164 = vmin.f32 %v1145, %v1160
        %v1165 = vld [vmem:[%s269 + $0x2e] sm:$0x1]
        %1166 = vset.pattern.permute.xlu0 46
        %1167 = vperm.xlu0 %1166, %v287
        %v1168 = vpop.permute.xlu0 %1167
        %1170 = vset.pattern.permute.xlu0 46
        %1171 = vperm.xlu0 %1170, %v288
        %v1172 = vpop.permute.xlu0 %1171
        %v1174 = vlaneseq
        %v1175 = vshrl.u32 %v1174, 7
        %v1176 = vsub.s32 0, %v1175
        %v1177 = vrot.slane %v1165, %v1176
        %v1178 = vmul.f32 %v1168, %v1177
        %v1179 = vmul.f32 %v1172, %v1177
        %v1180 = vmax.f32 %v1161, %v1178
        %v1181 = vmax.f32 %v1162, %v1179
        %v1182 = vmin.f32 %v1163, %v1178
        %v1183 = vmin.f32 %v1164, %v1179
        %v1184 = vld [vmem:[%s269 + $0x2f] sm:$0x1]
        %1185 = vset.pattern.permute.xlu0 47
        %1186 = vperm.xlu0 %1185, %v287
        %v1187 = vpop.permute.xlu0 %1186
        %1189 = vset.pattern.permute.xlu0 47
        %1190 = vperm.xlu0 %1189, %v288
        %v1191 = vpop.permute.xlu0 %1190
        %v1193 = vlaneseq
        %v1194 = vshrl.u32 %v1193, 7
        %v1195 = vsub.s32 0, %v1194
        %v1196 = vrot.slane %v1184, %v1195
        %v1197 = vmul.f32 %v1187, %v1196
        %v1198 = vmul.f32 %v1191, %v1196
        %v1199 = vmax.f32 %v1180, %v1197
        %v1200 = vmax.f32 %v1181, %v1198
        %v1201 = vmin.f32 %v1182, %v1197
        %v1202 = vmin.f32 %v1183, %v1198
        %v1203 = vld [vmem:[%s269 + $0x30] sm:$0x1]
        %1204 = vset.pattern.permute.xlu0 48
        %1205 = vperm.xlu0 %1204, %v287
        %v1206 = vpop.permute.xlu0 %1205
        %1208 = vset.pattern.permute.xlu0 48
        %1209 = vperm.xlu0 %1208, %v288
        %v1210 = vpop.permute.xlu0 %1209
        %v1212 = vlaneseq
        %v1213 = vshrl.u32 %v1212, 7
        %v1214 = vsub.s32 0, %v1213
        %v1215 = vrot.slane %v1203, %v1214
        %v1216 = vmul.f32 %v1206, %v1215
        %v1217 = vmul.f32 %v1210, %v1215
        %v1218 = vmax.f32 %v1199, %v1216
        %v1219 = vmax.f32 %v1200, %v1217
        %v1220 = vmin.f32 %v1201, %v1216
        %v1221 = vmin.f32 %v1202, %v1217
        %v1222 = vld [vmem:[%s269 + $0x31] sm:$0x1]
        %1223 = vset.pattern.permute.xlu0 49
        %1224 = vperm.xlu0 %1223, %v287
        %v1225 = vpop.permute.xlu0 %1224
        %1227 = vset.pattern.permute.xlu0 49
        %1228 = vperm.xlu0 %1227, %v288
        %v1229 = vpop.permute.xlu0 %1228
        %v1231 = vlaneseq
        %v1232 = vshrl.u32 %v1231, 7
        %v1233 = vsub.s32 0, %v1232
        %v1234 = vrot.slane %v1222, %v1233
        %v1235 = vmul.f32 %v1225, %v1234
        %v1236 = vmul.f32 %v1229, %v1234
        %v1237 = vmax.f32 %v1218, %v1235
        %v1238 = vmax.f32 %v1219, %v1236
        %v1239 = vmin.f32 %v1220, %v1235
        %v1240 = vmin.f32 %v1221, %v1236
        %v1241 = vld [vmem:[%s269 + $0x32] sm:$0x1]
        %1242 = vset.pattern.permute.xlu0 50
        %1243 = vperm.xlu0 %1242, %v287
        %v1244 = vpop.permute.xlu0 %1243
        %1246 = vset.pattern.permute.xlu0 50
        %1247 = vperm.xlu0 %1246, %v288
        %v1248 = vpop.permute.xlu0 %1247
        %v1250 = vlaneseq
        %v1251 = vshrl.u32 %v1250, 7
        %v1252 = vsub.s32 0, %v1251
        %v1253 = vrot.slane %v1241, %v1252
        %v1254 = vmul.f32 %v1244, %v1253
        %v1255 = vmul.f32 %v1248, %v1253
        %v1256 = vmax.f32 %v1237, %v1254
        %v1257 = vmax.f32 %v1238, %v1255
        %v1258 = vmin.f32 %v1239, %v1254
        %v1259 = vmin.f32 %v1240, %v1255
        %v1260 = vld [vmem:[%s269 + $0x33] sm:$0x1]
        %1261 = vset.pattern.permute.xlu0 51
        %1262 = vperm.xlu0 %1261, %v287
        %v1263 = vpop.permute.xlu0 %1262
        %1265 = vset.pattern.permute.xlu0 51
        %1266 = vperm.xlu0 %1265, %v288
        %v1267 = vpop.permute.xlu0 %1266
        %v1269 = vlaneseq
        %v1270 = vshrl.u32 %v1269, 7
        %v1271 = vsub.s32 0, %v1270
        %v1272 = vrot.slane %v1260, %v1271
        %v1273 = vmul.f32 %v1263, %v1272
        %v1274 = vmul.f32 %v1267, %v1272
        %v1275 = vmax.f32 %v1256, %v1273
        %v1276 = vmax.f32 %v1257, %v1274
        %v1277 = vmin.f32 %v1258, %v1273
        %v1278 = vmin.f32 %v1259, %v1274
        %v1279 = vld [vmem:[%s269 + $0x34] sm:$0x1]
        %1280 = vset.pattern.permute.xlu0 52
        %1281 = vperm.xlu0 %1280, %v287
        %v1282 = vpop.permute.xlu0 %1281
        %1284 = vset.pattern.permute.xlu0 52
        %1285 = vperm.xlu0 %1284, %v288
        %v1286 = vpop.permute.xlu0 %1285
        %v1288 = vlaneseq
        %v1289 = vshrl.u32 %v1288, 7
        %v1290 = vsub.s32 0, %v1289
        %v1291 = vrot.slane %v1279, %v1290
        %v1292 = vmul.f32 %v1282, %v1291
        %v1293 = vmul.f32 %v1286, %v1291
        %v1294 = vmax.f32 %v1275, %v1292
        %v1295 = vmax.f32 %v1276, %v1293
        %v1296 = vmin.f32 %v1277, %v1292
        %v1297 = vmin.f32 %v1278, %v1293
        %v1298 = vld [vmem:[%s269 + $0x35] sm:$0x1]
        %1299 = vset.pattern.permute.xlu0 53
        %1300 = vperm.xlu0 %1299, %v287
        %v1301 = vpop.permute.xlu0 %1300
        %1303 = vset.pattern.permute.xlu0 53
        %1304 = vperm.xlu0 %1303, %v288
        %v1305 = vpop.permute.xlu0 %1304
        %v1307 = vlaneseq
        %v1308 = vshrl.u32 %v1307, 7
        %v1309 = vsub.s32 0, %v1308
        %v1310 = vrot.slane %v1298, %v1309
        %v1311 = vmul.f32 %v1301, %v1310
        %v1312 = vmul.f32 %v1305, %v1310
        %v1313 = vmax.f32 %v1294, %v1311
        %v1314 = vmax.f32 %v1295, %v1312
        %v1315 = vmin.f32 %v1296, %v1311
        %v1316 = vmin.f32 %v1297, %v1312
        %v1317 = vld [vmem:[%s269 + $0x36] sm:$0x1]
        %1318 = vset.pattern.permute.xlu0 54
        %1319 = vperm.xlu0 %1318, %v287
        %v1320 = vpop.permute.xlu0 %1319
        %1322 = vset.pattern.permute.xlu0 54
        %1323 = vperm.xlu0 %1322, %v288
        %v1324 = vpop.permute.xlu0 %1323
        %v1326 = vlaneseq
        %v1327 = vshrl.u32 %v1326, 7
        %v1328 = vsub.s32 0, %v1327
        %v1329 = vrot.slane %v1317, %v1328
        %v1330 = vmul.f32 %v1320, %v1329
        %v1331 = vmul.f32 %v1324, %v1329
        %v1332 = vmax.f32 %v1313, %v1330
        %v1333 = vmax.f32 %v1314, %v1331
        %v1334 = vmin.f32 %v1315, %v1330
        %v1335 = vmin.f32 %v1316, %v1331
        %v1336 = vld [vmem:[%s269 + $0x37] sm:$0x1]
        %1337 = vset.pattern.permute.xlu0 55
        %1338 = vperm.xlu0 %1337, %v287
        %v1339 = vpop.permute.xlu0 %1338
        %1341 = vset.pattern.permute.xlu0 55
        %1342 = vperm.xlu0 %1341, %v288
        %v1343 = vpop.permute.xlu0 %1342
        %v1345 = vlaneseq
        %v1346 = vshrl.u32 %v1345, 7
        %v1347 = vsub.s32 0, %v1346
        %v1348 = vrot.slane %v1336, %v1347
        %v1349 = vmul.f32 %v1339, %v1348
        %v1350 = vmul.f32 %v1343, %v1348
        %v1351 = vmax.f32 %v1332, %v1349
        %v1352 = vmax.f32 %v1333, %v1350
        %v1353 = vmin.f32 %v1334, %v1349
        %v1354 = vmin.f32 %v1335, %v1350
        %v1355 = vld [vmem:[%s269 + $0x38] sm:$0x1]
        %1356 = vset.pattern.permute.xlu0 56
        %1357 = vperm.xlu0 %1356, %v287
        %v1358 = vpop.permute.xlu0 %1357
        %1360 = vset.pattern.permute.xlu0 56
        %1361 = vperm.xlu0 %1360, %v288
        %v1362 = vpop.permute.xlu0 %1361
        %v1364 = vlaneseq
        %v1365 = vshrl.u32 %v1364, 7
        %v1366 = vsub.s32 0, %v1365
        %v1367 = vrot.slane %v1355, %v1366
        %v1368 = vmul.f32 %v1358, %v1367
        %v1369 = vmul.f32 %v1362, %v1367
        %v1370 = vmax.f32 %v1351, %v1368
        %v1371 = vmax.f32 %v1352, %v1369
        %v1372 = vmin.f32 %v1353, %v1368
        %v1373 = vmin.f32 %v1354, %v1369
        %v1374 = vld [vmem:[%s269 + $0x39] sm:$0x1]
        %1375 = vset.pattern.permute.xlu0 57
        %1376 = vperm.xlu0 %1375, %v287
        %v1377 = vpop.permute.xlu0 %1376
        %1379 = vset.pattern.permute.xlu0 57
        %1380 = vperm.xlu0 %1379, %v288
        %v1381 = vpop.permute.xlu0 %1380
        %v1383 = vlaneseq
        %v1384 = vshrl.u32 %v1383, 7
        %v1385 = vsub.s32 0, %v1384
        %v1386 = vrot.slane %v1374, %v1385
        %v1387 = vmul.f32 %v1377, %v1386
        %v1388 = vmul.f32 %v1381, %v1386
        %v1389 = vmax.f32 %v1370, %v1387
        %v1390 = vmax.f32 %v1371, %v1388
        %v1391 = vmin.f32 %v1372, %v1387
        %v1392 = vmin.f32 %v1373, %v1388
        %v1393 = vld [vmem:[%s269 + $0x3a] sm:$0x1]
        %1394 = vset.pattern.permute.xlu0 58
        %1395 = vperm.xlu0 %1394, %v287
        %v1396 = vpop.permute.xlu0 %1395
        %1398 = vset.pattern.permute.xlu0 58
        %1399 = vperm.xlu0 %1398, %v288
        %v1400 = vpop.permute.xlu0 %1399
        %v1402 = vlaneseq
        %v1403 = vshrl.u32 %v1402, 7
        %v1404 = vsub.s32 0, %v1403
        %v1405 = vrot.slane %v1393, %v1404
        %v1406 = vmul.f32 %v1396, %v1405
        %v1407 = vmul.f32 %v1400, %v1405
        %v1408 = vmax.f32 %v1389, %v1406
        %v1409 = vmax.f32 %v1390, %v1407
        %v1410 = vmin.f32 %v1391, %v1406
        %v1411 = vmin.f32 %v1392, %v1407
        %v1412 = vld [vmem:[%s269 + $0x3b] sm:$0x1]
        %1413 = vset.pattern.permute.xlu0 59
        %1414 = vperm.xlu0 %1413, %v287
        %v1415 = vpop.permute.xlu0 %1414
        %1417 = vset.pattern.permute.xlu0 59
        %1418 = vperm.xlu0 %1417, %v288
        %v1419 = vpop.permute.xlu0 %1418
        %v1421 = vlaneseq
        %v1422 = vshrl.u32 %v1421, 7
        %v1423 = vsub.s32 0, %v1422
        %v1424 = vrot.slane %v1412, %v1423
        %v1425 = vmul.f32 %v1415, %v1424
        %v1426 = vmul.f32 %v1419, %v1424
        %v1427 = vmax.f32 %v1408, %v1425
        %v1428 = vmax.f32 %v1409, %v1426
        %v1429 = vmin.f32 %v1410, %v1425
        %v1430 = vmin.f32 %v1411, %v1426
        %v1431 = vld [vmem:[%s269 + $0x3c] sm:$0x1]
        %1432 = vset.pattern.permute.xlu0 60
        %1433 = vperm.xlu0 %1432, %v287
        %v1434 = vpop.permute.xlu0 %1433
        %1436 = vset.pattern.permute.xlu0 60
        %1437 = vperm.xlu0 %1436, %v288
        %v1438 = vpop.permute.xlu0 %1437
        %v1440 = vlaneseq
        %v1441 = vshrl.u32 %v1440, 7
        %v1442 = vsub.s32 0, %v1441
        %v1443 = vrot.slane %v1431, %v1442
        %v1444 = vmul.f32 %v1434, %v1443
        %v1445 = vmul.f32 %v1438, %v1443
        %v1446 = vmax.f32 %v1427, %v1444
        %v1447 = vmax.f32 %v1428, %v1445
        %v1448 = vmin.f32 %v1429, %v1444
        %v1449 = vmin.f32 %v1430, %v1445
        %v1450 = vld [vmem:[%s269 + $0x3d] sm:$0x1]
        %1451 = vset.pattern.permute.xlu0 61
        %1452 = vperm.xlu0 %1451, %v287
        %v1453 = vpop.permute.xlu0 %1452
        %1455 = vset.pattern.permute.xlu0 61
        %1456 = vperm.xlu0 %1455, %v288
        %v1457 = vpop.permute.xlu0 %1456
        %v1459 = vlaneseq
        %v1460 = vshrl.u32 %v1459, 7
        %v1461 = vsub.s32 0, %v1460
        %v1462 = vrot.slane %v1450, %v1461
        %v1463 = vmul.f32 %v1453, %v1462
        %v1464 = vmul.f32 %v1457, %v1462
        %v1465 = vmax.f32 %v1446, %v1463
        %v1466 = vmax.f32 %v1447, %v1464
        %v1467 = vmin.f32 %v1448, %v1463
        %v1468 = vmin.f32 %v1449, %v1464
        %v1469 = vld [vmem:[%s269 + $0x3e] sm:$0x1]
        %1470 = vset.pattern.permute.xlu0 62
        %1471 = vperm.xlu0 %1470, %v287
        %v1472 = vpop.permute.xlu0 %1471
        %1474 = vset.pattern.permute.xlu0 62
        %1475 = vperm.xlu0 %1474, %v288
        %v1476 = vpop.permute.xlu0 %1475
        %v1478 = vlaneseq
        %v1479 = vshrl.u32 %v1478, 7
        %v1480 = vsub.s32 0, %v1479
        %v1481 = vrot.slane %v1469, %v1480
        %v1482 = vmul.f32 %v1472, %v1481
        %v1483 = vmul.f32 %v1476, %v1481
        %v1484 = vmax.f32 %v1465, %v1482
        %v1485 = vmax.f32 %v1466, %v1483
        %v1486 = vmin.f32 %v1467, %v1482
        %v1487 = vmin.f32 %v1468, %v1483
        %v1488 = vld [vmem:[%s269 + $0x3f] sm:$0x1]
        %1489 = vset.pattern.permute.xlu0 63
        %1490 = vperm.xlu0 %1489, %v287
        %v1491 = vpop.permute.xlu0 %1490
        %1493 = vset.pattern.permute.xlu0 63
        %1494 = vperm.xlu0 %1493, %v288
        %v1495 = vpop.permute.xlu0 %1494
        %v1497 = vlaneseq
        %v1498 = vshrl.u32 %v1497, 7
        %v1499 = vsub.s32 0, %v1498
        %v1500 = vrot.slane %v1488, %v1499
        %v1501 = vmul.f32 %v1491, %v1500
        %v1502 = vmul.f32 %v1495, %v1500
        %v1503 = vmax.f32 %v1484, %v1501
        %v1504 = vmax.f32 %v1485, %v1502
        %v1505 = vmin.f32 %v1486, %v1501
        %v1506 = vmin.f32 %v1487, %v1502
        %v1507 = vld [vmem:[%s269 + $0x40] sm:$0x1]
        %1508 = vset.pattern.permute.xlu0 64
        %1509 = vperm.xlu0 %1508, %v287
        %v1510 = vpop.permute.xlu0 %1509
        %1512 = vset.pattern.permute.xlu0 64
        %1513 = vperm.xlu0 %1512, %v288
        %v1514 = vpop.permute.xlu0 %1513
        %v1516 = vlaneseq
        %v1517 = vshrl.u32 %v1516, 7
        %v1518 = vsub.s32 0, %v1517
        %v1519 = vrot.slane %v1507, %v1518
        %v1520 = vmul.f32 %v1510, %v1519
        %v1521 = vmul.f32 %v1514, %v1519
        %v1522 = vmax.f32 %v1503, %v1520
        %v1523 = vmax.f32 %v1504, %v1521
        %v1524 = vmin.f32 %v1505, %v1520
        %v1525 = vmin.f32 %v1506, %v1521
        %v1526 = vld [vmem:[%s269 + $0x41] sm:$0x1]
        %1527 = vset.pattern.permute.xlu0 65
        %1528 = vperm.xlu0 %1527, %v287
        %v1529 = vpop.permute.xlu0 %1528
        %1531 = vset.pattern.permute.xlu0 65
        %1532 = vperm.xlu0 %1531, %v288
        %v1533 = vpop.permute.xlu0 %1532
        %v1535 = vlaneseq
        %v1536 = vshrl.u32 %v1535, 7
        %v1537 = vsub.s32 0, %v1536
        %v1538 = vrot.slane %v1526, %v1537
        %v1539 = vmul.f32 %v1529, %v1538
        %v1540 = vmul.f32 %v1533, %v1538
        %v1541 = vmax.f32 %v1522, %v1539
        %v1542 = vmax.f32 %v1523, %v1540
        %v1543 = vmin.f32 %v1524, %v1539
        %v1544 = vmin.f32 %v1525, %v1540
        %v1545 = vld [vmem:[%s269 + $0x42] sm:$0x1]
        %1546 = vset.pattern.permute.xlu0 66
        %1547 = vperm.xlu0 %1546, %v287
        %v1548 = vpop.permute.xlu0 %1547
        %1550 = vset.pattern.permute.xlu0 66
        %1551 = vperm.xlu0 %1550, %v288
        %v1552 = vpop.permute.xlu0 %1551
        %v1554 = vlaneseq
        %v1555 = vshrl.u32 %v1554, 7
        %v1556 = vsub.s32 0, %v1555
        %v1557 = vrot.slane %v1545, %v1556
        %v1558 = vmul.f32 %v1548, %v1557
        %v1559 = vmul.f32 %v1552, %v1557
        %v1560 = vmax.f32 %v1541, %v1558
        %v1561 = vmax.f32 %v1542, %v1559
        %v1562 = vmin.f32 %v1543, %v1558
        %v1563 = vmin.f32 %v1544, %v1559
        %v1564 = vld [vmem:[%s269 + $0x43] sm:$0x1]
        %1565 = vset.pattern.permute.xlu0 67
        %1566 = vperm.xlu0 %1565, %v287
        %v1567 = vpop.permute.xlu0 %1566
        %1569 = vset.pattern.permute.xlu0 67
        %1570 = vperm.xlu0 %1569, %v288
        %v1571 = vpop.permute.xlu0 %1570
        %v1573 = vlaneseq
        %v1574 = vshrl.u32 %v1573, 7
        %v1575 = vsub.s32 0, %v1574
        %v1576 = vrot.slane %v1564, %v1575
        %v1577 = vmul.f32 %v1567, %v1576
        %v1578 = vmul.f32 %v1571, %v1576
        %v1579 = vmax.f32 %v1560, %v1577
        %v1580 = vmax.f32 %v1561, %v1578
        %v1581 = vmin.f32 %v1562, %v1577
        %v1582 = vmin.f32 %v1563, %v1578
        %v1583 = vld [vmem:[%s269 + $0x44] sm:$0x1]
        %1584 = vset.pattern.permute.xlu0 68
        %1585 = vperm.xlu0 %1584, %v287
        %v1586 = vpop.permute.xlu0 %1585
        %1588 = vset.pattern.permute.xlu0 68
        %1589 = vperm.xlu0 %1588, %v288
        %v1590 = vpop.permute.xlu0 %1589
        %v1592 = vlaneseq
        %v1593 = vshrl.u32 %v1592, 7
        %v1594 = vsub.s32 0, %v1593
        %v1595 = vrot.slane %v1583, %v1594
        %v1596 = vmul.f32 %v1586, %v1595
        %v1597 = vmul.f32 %v1590, %v1595
        %v1598 = vmax.f32 %v1579, %v1596
        %v1599 = vmax.f32 %v1580, %v1597
        %v1600 = vmin.f32 %v1581, %v1596
        %v1601 = vmin.f32 %v1582, %v1597
        %v1602 = vld [vmem:[%s269 + $0x45] sm:$0x1]
        %1603 = vset.pattern.permute.xlu0 69
        %1604 = vperm.xlu0 %1603, %v287
        %v1605 = vpop.permute.xlu0 %1604
        %1607 = vset.pattern.permute.xlu0 69
        %1608 = vperm.xlu0 %1607, %v288
        %v1609 = vpop.permute.xlu0 %1608
        %v1611 = vlaneseq
        %v1612 = vshrl.u32 %v1611, 7
        %v1613 = vsub.s32 0, %v1612
        %v1614 = vrot.slane %v1602, %v1613
        %v1615 = vmul.f32 %v1605, %v1614
        %v1616 = vmul.f32 %v1609, %v1614
        %v1617 = vmax.f32 %v1598, %v1615
        %v1618 = vmax.f32 %v1599, %v1616
        %v1619 = vmin.f32 %v1600, %v1615
        %v1620 = vmin.f32 %v1601, %v1616
        %v1621 = vld [vmem:[%s269 + $0x46] sm:$0x1]
        %1622 = vset.pattern.permute.xlu0 70
        %1623 = vperm.xlu0 %1622, %v287
        %v1624 = vpop.permute.xlu0 %1623
        %1626 = vset.pattern.permute.xlu0 70
        %1627 = vperm.xlu0 %1626, %v288
        %v1628 = vpop.permute.xlu0 %1627
        %v1630 = vlaneseq
        %v1631 = vshrl.u32 %v1630, 7
        %v1632 = vsub.s32 0, %v1631
        %v1633 = vrot.slane %v1621, %v1632
        %v1634 = vmul.f32 %v1624, %v1633
        %v1635 = vmul.f32 %v1628, %v1633
        %v1636 = vmax.f32 %v1617, %v1634
        %v1637 = vmax.f32 %v1618, %v1635
        %v1638 = vmin.f32 %v1619, %v1634
        %v1639 = vmin.f32 %v1620, %v1635
        %v1640 = vld [vmem:[%s269 + $0x47] sm:$0x1]
        %1641 = vset.pattern.permute.xlu0 71
        %1642 = vperm.xlu0 %1641, %v287
        %v1643 = vpop.permute.xlu0 %1642
        %1645 = vset.pattern.permute.xlu0 71
        %1646 = vperm.xlu0 %1645, %v288
        %v1647 = vpop.permute.xlu0 %1646
        %v1649 = vlaneseq
        %v1650 = vshrl.u32 %v1649, 7
        %v1651 = vsub.s32 0, %v1650
        %v1652 = vrot.slane %v1640, %v1651
        %v1653 = vmul.f32 %v1643, %v1652
        %v1654 = vmul.f32 %v1647, %v1652
        %v1655 = vmax.f32 %v1636, %v1653
        %v1656 = vmax.f32 %v1637, %v1654
        %v1657 = vmin.f32 %v1638, %v1653
        %v1658 = vmin.f32 %v1639, %v1654
        %v1659 = vld [vmem:[%s269 + $0x48] sm:$0x1]
        %1660 = vset.pattern.permute.xlu0 72
        %1661 = vperm.xlu0 %1660, %v287
        %v1662 = vpop.permute.xlu0 %1661
        %1664 = vset.pattern.permute.xlu0 72
        %1665 = vperm.xlu0 %1664, %v288
        %v1666 = vpop.permute.xlu0 %1665
        %v1668 = vlaneseq
        %v1669 = vshrl.u32 %v1668, 7
        %v1670 = vsub.s32 0, %v1669
        %v1671 = vrot.slane %v1659, %v1670
        %v1672 = vmul.f32 %v1662, %v1671
        %v1673 = vmul.f32 %v1666, %v1671
        %v1674 = vmax.f32 %v1655, %v1672
        %v1675 = vmax.f32 %v1656, %v1673
        %v1676 = vmin.f32 %v1657, %v1672
        %v1677 = vmin.f32 %v1658, %v1673
        %v1678 = vld [vmem:[%s269 + $0x49] sm:$0x1]
        %1679 = vset.pattern.permute.xlu0 73
        %1680 = vperm.xlu0 %1679, %v287
        %v1681 = vpop.permute.xlu0 %1680
        %1683 = vset.pattern.permute.xlu0 73
        %1684 = vperm.xlu0 %1683, %v288
        %v1685 = vpop.permute.xlu0 %1684
        %v1687 = vlaneseq
        %v1688 = vshrl.u32 %v1687, 7
        %v1689 = vsub.s32 0, %v1688
        %v1690 = vrot.slane %v1678, %v1689
        %v1691 = vmul.f32 %v1681, %v1690
        %v1692 = vmul.f32 %v1685, %v1690
        %v1693 = vmax.f32 %v1674, %v1691
        %v1694 = vmax.f32 %v1675, %v1692
        %v1695 = vmin.f32 %v1676, %v1691
        %v1696 = vmin.f32 %v1677, %v1692
        %v1697 = vld [vmem:[%s269 + $0x4a] sm:$0x1]
        %1698 = vset.pattern.permute.xlu0 74
        %1699 = vperm.xlu0 %1698, %v287
        %v1700 = vpop.permute.xlu0 %1699
        %1702 = vset.pattern.permute.xlu0 74
        %1703 = vperm.xlu0 %1702, %v288
        %v1704 = vpop.permute.xlu0 %1703
        %v1706 = vlaneseq
        %v1707 = vshrl.u32 %v1706, 7
        %v1708 = vsub.s32 0, %v1707
        %v1709 = vrot.slane %v1697, %v1708
        %v1710 = vmul.f32 %v1700, %v1709
        %v1711 = vmul.f32 %v1704, %v1709
        %v1712 = vmax.f32 %v1693, %v1710
        %v1713 = vmax.f32 %v1694, %v1711
        %v1714 = vmin.f32 %v1695, %v1710
        %v1715 = vmin.f32 %v1696, %v1711
        %v1716 = vld [vmem:[%s269 + $0x4b] sm:$0x1]
        %1717 = vset.pattern.permute.xlu0 75
        %1718 = vperm.xlu0 %1717, %v287
        %v1719 = vpop.permute.xlu0 %1718
        %1721 = vset.pattern.permute.xlu0 75
        %1722 = vperm.xlu0 %1721, %v288
        %v1723 = vpop.permute.xlu0 %1722
        %v1725 = vlaneseq
        %v1726 = vshrl.u32 %v1725, 7
        %v1727 = vsub.s32 0, %v1726
        %v1728 = vrot.slane %v1716, %v1727
        %v1729 = vmul.f32 %v1719, %v1728
        %v1730 = vmul.f32 %v1723, %v1728
        %v1731 = vmax.f32 %v1712, %v1729
        %v1732 = vmax.f32 %v1713, %v1730
        %v1733 = vmin.f32 %v1714, %v1729
        %v1734 = vmin.f32 %v1715, %v1730
        %v1735 = vld [vmem:[%s269 + $0x4c] sm:$0x1]
        %1736 = vset.pattern.permute.xlu0 76
        %1737 = vperm.xlu0 %1736, %v287
        %v1738 = vpop.permute.xlu0 %1737
        %1740 = vset.pattern.permute.xlu0 76
        %1741 = vperm.xlu0 %1740, %v288
        %v1742 = vpop.permute.xlu0 %1741
        %v1744 = vlaneseq
        %v1745 = vshrl.u32 %v1744, 7
        %v1746 = vsub.s32 0, %v1745
        %v1747 = vrot.slane %v1735, %v1746
        %v1748 = vmul.f32 %v1738, %v1747
        %v1749 = vmul.f32 %v1742, %v1747
        %v1750 = vmax.f32 %v1731, %v1748
        %v1751 = vmax.f32 %v1732, %v1749
        %v1752 = vmin.f32 %v1733, %v1748
        %v1753 = vmin.f32 %v1734, %v1749
        %v1754 = vld [vmem:[%s269 + $0x4d] sm:$0x1]
        %1755 = vset.pattern.permute.xlu0 77
        %1756 = vperm.xlu0 %1755, %v287
        %v1757 = vpop.permute.xlu0 %1756
        %1759 = vset.pattern.permute.xlu0 77
        %1760 = vperm.xlu0 %1759, %v288
        %v1761 = vpop.permute.xlu0 %1760
        %v1763 = vlaneseq
        %v1764 = vshrl.u32 %v1763, 7
        %v1765 = vsub.s32 0, %v1764
        %v1766 = vrot.slane %v1754, %v1765
        %v1767 = vmul.f32 %v1757, %v1766
        %v1768 = vmul.f32 %v1761, %v1766
        %v1769 = vmax.f32 %v1750, %v1767
        %v1770 = vmax.f32 %v1751, %v1768
        %v1771 = vmin.f32 %v1752, %v1767
        %v1772 = vmin.f32 %v1753, %v1768
        %v1773 = vld [vmem:[%s269 + $0x4e] sm:$0x1]
        %1774 = vset.pattern.permute.xlu0 78
        %1775 = vperm.xlu0 %1774, %v287
        %v1776 = vpop.permute.xlu0 %1775
        %1778 = vset.pattern.permute.xlu0 78
        %1779 = vperm.xlu0 %1778, %v288
        %v1780 = vpop.permute.xlu0 %1779
        %v1782 = vlaneseq
        %v1783 = vshrl.u32 %v1782, 7
        %v1784 = vsub.s32 0, %v1783
        %v1785 = vrot.slane %v1773, %v1784
        %v1786 = vmul.f32 %v1776, %v1785
        %v1787 = vmul.f32 %v1780, %v1785
        %v1788 = vmax.f32 %v1769, %v1786
        %v1789 = vmax.f32 %v1770, %v1787
        %v1790 = vmin.f32 %v1771, %v1786
        %v1791 = vmin.f32 %v1772, %v1787
        %v1792 = vld [vmem:[%s269 + $0x4f] sm:$0x1]
        %1793 = vset.pattern.permute.xlu0 79
        %1794 = vperm.xlu0 %1793, %v287
        %v1795 = vpop.permute.xlu0 %1794
        %1797 = vset.pattern.permute.xlu0 79
        %1798 = vperm.xlu0 %1797, %v288
        %v1799 = vpop.permute.xlu0 %1798
        %v1801 = vlaneseq
        %v1802 = vshrl.u32 %v1801, 7
        %v1803 = vsub.s32 0, %v1802
        %v1804 = vrot.slane %v1792, %v1803
        %v1805 = vmul.f32 %v1795, %v1804
        %v1806 = vmul.f32 %v1799, %v1804
        %v1807 = vmax.f32 %v1788, %v1805
        %v1808 = vmax.f32 %v1789, %v1806
        %v1809 = vmin.f32 %v1790, %v1805
        %v1810 = vmin.f32 %v1791, %v1806
        %v1811 = vld [vmem:[%s269 + $0x50] sm:$0x1]
        %1812 = vset.pattern.permute.xlu0 80
        %1813 = vperm.xlu0 %1812, %v287
        %v1814 = vpop.permute.xlu0 %1813
        %1816 = vset.pattern.permute.xlu0 80
        %1817 = vperm.xlu0 %1816, %v288
        %v1818 = vpop.permute.xlu0 %1817
        %v1820 = vlaneseq
        %v1821 = vshrl.u32 %v1820, 7
        %v1822 = vsub.s32 0, %v1821
        %v1823 = vrot.slane %v1811, %v1822
        %v1824 = vmul.f32 %v1814, %v1823
        %v1825 = vmul.f32 %v1818, %v1823
        %v1826 = vmax.f32 %v1807, %v1824
        %v1827 = vmax.f32 %v1808, %v1825
        %v1828 = vmin.f32 %v1809, %v1824
        %v1829 = vmin.f32 %v1810, %v1825
        %v1830 = vld [vmem:[%s269 + $0x51] sm:$0x1]
        %1831 = vset.pattern.permute.xlu0 81
        %1832 = vperm.xlu0 %1831, %v287
        %v1833 = vpop.permute.xlu0 %1832
        %1835 = vset.pattern.permute.xlu0 81
        %1836 = vperm.xlu0 %1835, %v288
        %v1837 = vpop.permute.xlu0 %1836
        %v1839 = vlaneseq
        %v1840 = vshrl.u32 %v1839, 7
        %v1841 = vsub.s32 0, %v1840
        %v1842 = vrot.slane %v1830, %v1841
        %v1843 = vmul.f32 %v1833, %v1842
        %v1844 = vmul.f32 %v1837, %v1842
        %v1845 = vmax.f32 %v1826, %v1843
        %v1846 = vmax.f32 %v1827, %v1844
        %v1847 = vmin.f32 %v1828, %v1843
        %v1848 = vmin.f32 %v1829, %v1844
        %v1849 = vld [vmem:[%s269 + $0x52] sm:$0x1]
        %1850 = vset.pattern.permute.xlu0 82
        %1851 = vperm.xlu0 %1850, %v287
        %v1852 = vpop.permute.xlu0 %1851
        %1854 = vset.pattern.permute.xlu0 82
        %1855 = vperm.xlu0 %1854, %v288
        %v1856 = vpop.permute.xlu0 %1855
        %v1858 = vlaneseq
        %v1859 = vshrl.u32 %v1858, 7
        %v1860 = vsub.s32 0, %v1859
        %v1861 = vrot.slane %v1849, %v1860
        %v1862 = vmul.f32 %v1852, %v1861
        %v1863 = vmul.f32 %v1856, %v1861
        %v1864 = vmax.f32 %v1845, %v1862
        %v1865 = vmax.f32 %v1846, %v1863
        %v1866 = vmin.f32 %v1847, %v1862
        %v1867 = vmin.f32 %v1848, %v1863
        %v1868 = vld [vmem:[%s269 + $0x53] sm:$0x1]
        %1869 = vset.pattern.permute.xlu0 83
        %1870 = vperm.xlu0 %1869, %v287
        %v1871 = vpop.permute.xlu0 %1870
        %1873 = vset.pattern.permute.xlu0 83
        %1874 = vperm.xlu0 %1873, %v288
        %v1875 = vpop.permute.xlu0 %1874
        %v1877 = vlaneseq
        %v1878 = vshrl.u32 %v1877, 7
        %v1879 = vsub.s32 0, %v1878
        %v1880 = vrot.slane %v1868, %v1879
        %v1881 = vmul.f32 %v1871, %v1880
        %v1882 = vmul.f32 %v1875, %v1880
        %v1883 = vmax.f32 %v1864, %v1881
        %v1884 = vmax.f32 %v1865, %v1882
        %v1885 = vmin.f32 %v1866, %v1881
        %v1886 = vmin.f32 %v1867, %v1882
        %v1887 = vld [vmem:[%s269 + $0x54] sm:$0x1]
        %1888 = vset.pattern.permute.xlu0 84
        %1889 = vperm.xlu0 %1888, %v287
        %v1890 = vpop.permute.xlu0 %1889
        %1892 = vset.pattern.permute.xlu0 84
        %1893 = vperm.xlu0 %1892, %v288
        %v1894 = vpop.permute.xlu0 %1893
        %v1896 = vlaneseq
        %v1897 = vshrl.u32 %v1896, 7
        %v1898 = vsub.s32 0, %v1897
        %v1899 = vrot.slane %v1887, %v1898
        %v1900 = vmul.f32 %v1890, %v1899
        %v1901 = vmul.f32 %v1894, %v1899
        %v1902 = vmax.f32 %v1883, %v1900
        %v1903 = vmax.f32 %v1884, %v1901
        %v1904 = vmin.f32 %v1885, %v1900
        %v1905 = vmin.f32 %v1886, %v1901
        %v1906 = vld [vmem:[%s269 + $0x55] sm:$0x1]
        %1907 = vset.pattern.permute.xlu0 85
        %1908 = vperm.xlu0 %1907, %v287
        %v1909 = vpop.permute.xlu0 %1908
        %1911 = vset.pattern.permute.xlu0 85
        %1912 = vperm.xlu0 %1911, %v288
        %v1913 = vpop.permute.xlu0 %1912
        %v1915 = vlaneseq
        %v1916 = vshrl.u32 %v1915, 7
        %v1917 = vsub.s32 0, %v1916
        %v1918 = vrot.slane %v1906, %v1917
        %v1919 = vmul.f32 %v1909, %v1918
        %v1920 = vmul.f32 %v1913, %v1918
        %v1921 = vmax.f32 %v1902, %v1919
        %v1922 = vmax.f32 %v1903, %v1920
        %v1923 = vmin.f32 %v1904, %v1919
        %v1924 = vmin.f32 %v1905, %v1920
        %v1925 = vld [vmem:[%s269 + $0x56] sm:$0x1]
        %1926 = vset.pattern.permute.xlu0 86
        %1927 = vperm.xlu0 %1926, %v287
        %v1928 = vpop.permute.xlu0 %1927
        %1930 = vset.pattern.permute.xlu0 86
        %1931 = vperm.xlu0 %1930, %v288
        %v1932 = vpop.permute.xlu0 %1931
        %v1934 = vlaneseq
        %v1935 = vshrl.u32 %v1934, 7
        %v1936 = vsub.s32 0, %v1935
        %v1937 = vrot.slane %v1925, %v1936
        %v1938 = vmul.f32 %v1928, %v1937
        %v1939 = vmul.f32 %v1932, %v1937
        %v1940 = vmax.f32 %v1921, %v1938
        %v1941 = vmax.f32 %v1922, %v1939
        %v1942 = vmin.f32 %v1923, %v1938
        %v1943 = vmin.f32 %v1924, %v1939
        %v1944 = vld [vmem:[%s269 + $0x57] sm:$0x1]
        %1945 = vset.pattern.permute.xlu0 87
        %1946 = vperm.xlu0 %1945, %v287
        %v1947 = vpop.permute.xlu0 %1946
        %1949 = vset.pattern.permute.xlu0 87
        %1950 = vperm.xlu0 %1949, %v288
        %v1951 = vpop.permute.xlu0 %1950
        %v1953 = vlaneseq
        %v1954 = vshrl.u32 %v1953, 7
        %v1955 = vsub.s32 0, %v1954
        %v1956 = vrot.slane %v1944, %v1955
        %v1957 = vmul.f32 %v1947, %v1956
        %v1958 = vmul.f32 %v1951, %v1956
        %v1959 = vmax.f32 %v1940, %v1957
        %v1960 = vmax.f32 %v1941, %v1958
        %v1961 = vmin.f32 %v1942, %v1957
        %v1962 = vmin.f32 %v1943, %v1958
        %v1963 = vld [vmem:[%s269 + $0x58] sm:$0x1]
        %1964 = vset.pattern.permute.xlu0 88
        %1965 = vperm.xlu0 %1964, %v287
        %v1966 = vpop.permute.xlu0 %1965
        %1968 = vset.pattern.permute.xlu0 88
        %1969 = vperm.xlu0 %1968, %v288
        %v1970 = vpop.permute.xlu0 %1969
        %v1972 = vlaneseq
        %v1973 = vshrl.u32 %v1972, 7
        %v1974 = vsub.s32 0, %v1973
        %v1975 = vrot.slane %v1963, %v1974
        %v1976 = vmul.f32 %v1966, %v1975
        %v1977 = vmul.f32 %v1970, %v1975
        %v1978 = vmax.f32 %v1959, %v1976
        %v1979 = vmax.f32 %v1960, %v1977
        %v1980 = vmin.f32 %v1961, %v1976
        %v1981 = vmin.f32 %v1962, %v1977
        %v1982 = vld [vmem:[%s269 + $0x59] sm:$0x1]
        %1983 = vset.pattern.permute.xlu0 89
        %1984 = vperm.xlu0 %1983, %v287
        %v1985 = vpop.permute.xlu0 %1984
        %1987 = vset.pattern.permute.xlu0 89
        %1988 = vperm.xlu0 %1987, %v288
        %v1989 = vpop.permute.xlu0 %1988
        %v1991 = vlaneseq
        %v1992 = vshrl.u32 %v1991, 7
        %v1993 = vsub.s32 0, %v1992
        %v1994 = vrot.slane %v1982, %v1993
        %v1995 = vmul.f32 %v1985, %v1994
        %v1996 = vmul.f32 %v1989, %v1994
        %v1997 = vmax.f32 %v1978, %v1995
        %v1998 = vmax.f32 %v1979, %v1996
        %v1999 = vmin.f32 %v1980, %v1995
        %v2000 = vmin.f32 %v1981, %v1996
        %v2001 = vld [vmem:[%s269 + $0x5a] sm:$0x1]
        %2002 = vset.pattern.permute.xlu0 90
        %2003 = vperm.xlu0 %2002, %v287
        %v2004 = vpop.permute.xlu0 %2003
        %2006 = vset.pattern.permute.xlu0 90
        %2007 = vperm.xlu0 %2006, %v288
        %v2008 = vpop.permute.xlu0 %2007
        %v2010 = vlaneseq
        %v2011 = vshrl.u32 %v2010, 7
        %v2012 = vsub.s32 0, %v2011
        %v2013 = vrot.slane %v2001, %v2012
        %v2014 = vmul.f32 %v2004, %v2013
        %v2015 = vmul.f32 %v2008, %v2013
        %v2016 = vmax.f32 %v1997, %v2014
        %v2017 = vmax.f32 %v1998, %v2015
        %v2018 = vmin.f32 %v1999, %v2014
        %v2019 = vmin.f32 %v2000, %v2015
        %v2020 = vld [vmem:[%s269 + $0x5b] sm:$0x1]
        %2021 = vset.pattern.permute.xlu0 91
        %2022 = vperm.xlu0 %2021, %v287
        %v2023 = vpop.permute.xlu0 %2022
        %2025 = vset.pattern.permute.xlu0 91
        %2026 = vperm.xlu0 %2025, %v288
        %v2027 = vpop.permute.xlu0 %2026
        %v2029 = vlaneseq
        %v2030 = vshrl.u32 %v2029, 7
        %v2031 = vsub.s32 0, %v2030
        %v2032 = vrot.slane %v2020, %v2031
        %v2033 = vmul.f32 %v2023, %v2032
        %v2034 = vmul.f32 %v2027, %v2032
        %v2035 = vmax.f32 %v2016, %v2033
        %v2036 = vmax.f32 %v2017, %v2034
        %v2037 = vmin.f32 %v2018, %v2033
        %v2038 = vmin.f32 %v2019, %v2034
        %v2039 = vld [vmem:[%s269 + $0x5c] sm:$0x1]
        %2040 = vset.pattern.permute.xlu0 92
        %2041 = vperm.xlu0 %2040, %v287
        %v2042 = vpop.permute.xlu0 %2041
        %2044 = vset.pattern.permute.xlu0 92
        %2045 = vperm.xlu0 %2044, %v288
        %v2046 = vpop.permute.xlu0 %2045
        %v2048 = vlaneseq
        %v2049 = vshrl.u32 %v2048, 7
        %v2050 = vsub.s32 0, %v2049
        %v2051 = vrot.slane %v2039, %v2050
        %v2052 = vmul.f32 %v2042, %v2051
        %v2053 = vmul.f32 %v2046, %v2051
        %v2054 = vmax.f32 %v2035, %v2052
        %v2055 = vmax.f32 %v2036, %v2053
        %v2056 = vmin.f32 %v2037, %v2052
        %v2057 = vmin.f32 %v2038, %v2053
        %v2058 = vld [vmem:[%s269 + $0x5d] sm:$0x1]
        %2059 = vset.pattern.permute.xlu0 93
        %2060 = vperm.xlu0 %2059, %v287
        %v2061 = vpop.permute.xlu0 %2060
        %2063 = vset.pattern.permute.xlu0 93
        %2064 = vperm.xlu0 %2063, %v288
        %v2065 = vpop.permute.xlu0 %2064
        %v2067 = vlaneseq
        %v2068 = vshrl.u32 %v2067, 7
        %v2069 = vsub.s32 0, %v2068
        %v2070 = vrot.slane %v2058, %v2069
        %v2071 = vmul.f32 %v2061, %v2070
        %v2072 = vmul.f32 %v2065, %v2070
        %v2073 = vmax.f32 %v2054, %v2071
        %v2074 = vmax.f32 %v2055, %v2072
        %v2075 = vmin.f32 %v2056, %v2071
        %v2076 = vmin.f32 %v2057, %v2072
        %v2077 = vld [vmem:[%s269 + $0x5e] sm:$0x1]
        %2078 = vset.pattern.permute.xlu0 94
        %2079 = vperm.xlu0 %2078, %v287
        %v2080 = vpop.permute.xlu0 %2079
        %2082 = vset.pattern.permute.xlu0 94
        %2083 = vperm.xlu0 %2082, %v288
        %v2084 = vpop.permute.xlu0 %2083
        %v2086 = vlaneseq
        %v2087 = vshrl.u32 %v2086, 7
        %v2088 = vsub.s32 0, %v2087
        %v2089 = vrot.slane %v2077, %v2088
        %v2090 = vmul.f32 %v2080, %v2089
        %v2091 = vmul.f32 %v2084, %v2089
        %v2092 = vmax.f32 %v2073, %v2090
        %v2093 = vmax.f32 %v2074, %v2091
        %v2094 = vmin.f32 %v2075, %v2090
        %v2095 = vmin.f32 %v2076, %v2091
        %v2096 = vld [vmem:[%s269 + $0x5f] sm:$0x1]
        %2097 = vset.pattern.permute.xlu0 95
        %2098 = vperm.xlu0 %2097, %v287
        %v2099 = vpop.permute.xlu0 %2098
        %2101 = vset.pattern.permute.xlu0 95
        %2102 = vperm.xlu0 %2101, %v288
        %v2103 = vpop.permute.xlu0 %2102
        %v2105 = vlaneseq
        %v2106 = vshrl.u32 %v2105, 7
        %v2107 = vsub.s32 0, %v2106
        %v2108 = vrot.slane %v2096, %v2107
        %v2109 = vmul.f32 %v2099, %v2108
        %v2110 = vmul.f32 %v2103, %v2108
        %v2111 = vmax.f32 %v2092, %v2109
        %v2112 = vmax.f32 %v2093, %v2110
        %v2113 = vmin.f32 %v2094, %v2109
        %v2114 = vmin.f32 %v2095, %v2110
        %v2115 = vld [vmem:[%s269 + $0x60] sm:$0x1]
        %2116 = vset.pattern.permute.xlu0 96
        %2117 = vperm.xlu0 %2116, %v287
        %v2118 = vpop.permute.xlu0 %2117
        %2120 = vset.pattern.permute.xlu0 96
        %2121 = vperm.xlu0 %2120, %v288
        %v2122 = vpop.permute.xlu0 %2121
        %v2124 = vlaneseq
        %v2125 = vshrl.u32 %v2124, 7
        %v2126 = vsub.s32 0, %v2125
        %v2127 = vrot.slane %v2115, %v2126
        %v2128 = vmul.f32 %v2118, %v2127
        %v2129 = vmul.f32 %v2122, %v2127
        %v2130 = vmax.f32 %v2111, %v2128
        %v2131 = vmax.f32 %v2112, %v2129
        %v2132 = vmin.f32 %v2113, %v2128
        %v2133 = vmin.f32 %v2114, %v2129
        %v2134 = vld [vmem:[%s269 + $0x61] sm:$0x1]
        %2135 = vset.pattern.permute.xlu0 97
        %2136 = vperm.xlu0 %2135, %v287
        %v2137 = vpop.permute.xlu0 %2136
        %2139 = vset.pattern.permute.xlu0 97
        %2140 = vperm.xlu0 %2139, %v288
        %v2141 = vpop.permute.xlu0 %2140
        %v2143 = vlaneseq
        %v2144 = vshrl.u32 %v2143, 7
        %v2145 = vsub.s32 0, %v2144
        %v2146 = vrot.slane %v2134, %v2145
        %v2147 = vmul.f32 %v2137, %v2146
        %v2148 = vmul.f32 %v2141, %v2146
        %v2149 = vmax.f32 %v2130, %v2147
        %v2150 = vmax.f32 %v2131, %v2148
        %v2151 = vmin.f32 %v2132, %v2147
        %v2152 = vmin.f32 %v2133, %v2148
        %v2153 = vld [vmem:[%s269 + $0x62] sm:$0x1]
        %2154 = vset.pattern.permute.xlu0 98
        %2155 = vperm.xlu0 %2154, %v287
        %v2156 = vpop.permute.xlu0 %2155
        %2158 = vset.pattern.permute.xlu0 98
        %2159 = vperm.xlu0 %2158, %v288
        %v2160 = vpop.permute.xlu0 %2159
        %v2162 = vlaneseq
        %v2163 = vshrl.u32 %v2162, 7
        %v2164 = vsub.s32 0, %v2163
        %v2165 = vrot.slane %v2153, %v2164
        %v2166 = vmul.f32 %v2156, %v2165
        %v2167 = vmul.f32 %v2160, %v2165
        %v2168 = vmax.f32 %v2149, %v2166
        %v2169 = vmax.f32 %v2150, %v2167
        %v2170 = vmin.f32 %v2151, %v2166
        %v2171 = vmin.f32 %v2152, %v2167
        %v2172 = vld [vmem:[%s269 + $0x63] sm:$0x1]
        %2173 = vset.pattern.permute.xlu0 99
        %2174 = vperm.xlu0 %2173, %v287
        %v2175 = vpop.permute.xlu0 %2174
        %2177 = vset.pattern.permute.xlu0 99
        %2178 = vperm.xlu0 %2177, %v288
        %v2179 = vpop.permute.xlu0 %2178
        %v2181 = vlaneseq
        %v2182 = vshrl.u32 %v2181, 7
        %v2183 = vsub.s32 0, %v2182
        %v2184 = vrot.slane %v2172, %v2183
        %v2185 = vmul.f32 %v2175, %v2184
        %v2186 = vmul.f32 %v2179, %v2184
        %v2187 = vmax.f32 %v2168, %v2185
        %v2188 = vmax.f32 %v2169, %v2186
        %v2189 = vmin.f32 %v2170, %v2185
        %v2190 = vmin.f32 %v2171, %v2186
        %v2191 = vld [vmem:[%s269 + $0x64] sm:$0x1]
        %2192 = vset.pattern.permute.xlu0 100
        %2193 = vperm.xlu0 %2192, %v287
        %v2194 = vpop.permute.xlu0 %2193
        %2196 = vset.pattern.permute.xlu0 100
        %2197 = vperm.xlu0 %2196, %v288
        %v2198 = vpop.permute.xlu0 %2197
        %v2200 = vlaneseq
        %v2201 = vshrl.u32 %v2200, 7
        %v2202 = vsub.s32 0, %v2201
        %v2203 = vrot.slane %v2191, %v2202
        %v2204 = vmul.f32 %v2194, %v2203
        %v2205 = vmul.f32 %v2198, %v2203
        %v2206 = vmax.f32 %v2187, %v2204
        %v2207 = vmax.f32 %v2188, %v2205
        %v2208 = vmin.f32 %v2189, %v2204
        %v2209 = vmin.f32 %v2190, %v2205
        %v2210 = vld [vmem:[%s269 + $0x65] sm:$0x1]
        %2211 = vset.pattern.permute.xlu0 101
        %2212 = vperm.xlu0 %2211, %v287
        %v2213 = vpop.permute.xlu0 %2212
        %2215 = vset.pattern.permute.xlu0 101
        %2216 = vperm.xlu0 %2215, %v288
        %v2217 = vpop.permute.xlu0 %2216
        %v2219 = vlaneseq
        %v2220 = vshrl.u32 %v2219, 7
        %v2221 = vsub.s32 0, %v2220
        %v2222 = vrot.slane %v2210, %v2221
        %v2223 = vmul.f32 %v2213, %v2222
        %v2224 = vmul.f32 %v2217, %v2222
        %v2225 = vmax.f32 %v2206, %v2223
        %v2226 = vmax.f32 %v2207, %v2224
        %v2227 = vmin.f32 %v2208, %v2223
        %v2228 = vmin.f32 %v2209, %v2224
        %v2229 = vld [vmem:[%s269 + $0x66] sm:$0x1]
        %2230 = vset.pattern.permute.xlu0 102
        %2231 = vperm.xlu0 %2230, %v287
        %v2232 = vpop.permute.xlu0 %2231
        %2234 = vset.pattern.permute.xlu0 102
        %2235 = vperm.xlu0 %2234, %v288
        %v2236 = vpop.permute.xlu0 %2235
        %v2238 = vlaneseq
        %v2239 = vshrl.u32 %v2238, 7
        %v2240 = vsub.s32 0, %v2239
        %v2241 = vrot.slane %v2229, %v2240
        %v2242 = vmul.f32 %v2232, %v2241
        %v2243 = vmul.f32 %v2236, %v2241
        %v2244 = vmax.f32 %v2225, %v2242
        %v2245 = vmax.f32 %v2226, %v2243
        %v2246 = vmin.f32 %v2227, %v2242
        %v2247 = vmin.f32 %v2228, %v2243
        %v2248 = vld [vmem:[%s269 + $0x67] sm:$0x1]
        %2249 = vset.pattern.permute.xlu0 103
        %2250 = vperm.xlu0 %2249, %v287
        %v2251 = vpop.permute.xlu0 %2250
        %2253 = vset.pattern.permute.xlu0 103
        %2254 = vperm.xlu0 %2253, %v288
        %v2255 = vpop.permute.xlu0 %2254
        %v2257 = vlaneseq
        %v2258 = vshrl.u32 %v2257, 7
        %v2259 = vsub.s32 0, %v2258
        %v2260 = vrot.slane %v2248, %v2259
        %v2261 = vmul.f32 %v2251, %v2260
        %v2262 = vmul.f32 %v2255, %v2260
        %v2263 = vmax.f32 %v2244, %v2261
        %v2264 = vmax.f32 %v2245, %v2262
        %v2265 = vmin.f32 %v2246, %v2261
        %v2266 = vmin.f32 %v2247, %v2262
        %v2267 = vld [vmem:[%s269 + $0x68] sm:$0x1]
        %2268 = vset.pattern.permute.xlu0 104
        %2269 = vperm.xlu0 %2268, %v287
        %v2270 = vpop.permute.xlu0 %2269
        %2272 = vset.pattern.permute.xlu0 104
        %2273 = vperm.xlu0 %2272, %v288
        %v2274 = vpop.permute.xlu0 %2273
        %v2276 = vlaneseq
        %v2277 = vshrl.u32 %v2276, 7
        %v2278 = vsub.s32 0, %v2277
        %v2279 = vrot.slane %v2267, %v2278
        %v2280 = vmul.f32 %v2270, %v2279
        %v2281 = vmul.f32 %v2274, %v2279
        %v2282 = vmax.f32 %v2263, %v2280
        %v2283 = vmax.f32 %v2264, %v2281
        %v2284 = vmin.f32 %v2265, %v2280
        %v2285 = vmin.f32 %v2266, %v2281
        %v2286 = vld [vmem:[%s269 + $0x69] sm:$0x1]
        %2287 = vset.pattern.permute.xlu0 105
        %2288 = vperm.xlu0 %2287, %v287
        %v2289 = vpop.permute.xlu0 %2288
        %2291 = vset.pattern.permute.xlu0 105
        %2292 = vperm.xlu0 %2291, %v288
        %v2293 = vpop.permute.xlu0 %2292
        %v2295 = vlaneseq
        %v2296 = vshrl.u32 %v2295, 7
        %v2297 = vsub.s32 0, %v2296
        %v2298 = vrot.slane %v2286, %v2297
        %v2299 = vmul.f32 %v2289, %v2298
        %v2300 = vmul.f32 %v2293, %v2298
        %v2301 = vmax.f32 %v2282, %v2299
        %v2302 = vmax.f32 %v2283, %v2300
        %v2303 = vmin.f32 %v2284, %v2299
        %v2304 = vmin.f32 %v2285, %v2300
        %v2305 = vld [vmem:[%s269 + $0x6a] sm:$0x1]
        %2306 = vset.pattern.permute.xlu0 106
        %2307 = vperm.xlu0 %2306, %v287
        %v2308 = vpop.permute.xlu0 %2307
        %2310 = vset.pattern.permute.xlu0 106
        %2311 = vperm.xlu0 %2310, %v288
        %v2312 = vpop.permute.xlu0 %2311
        %v2314 = vlaneseq
        %v2315 = vshrl.u32 %v2314, 7
        %v2316 = vsub.s32 0, %v2315
        %v2317 = vrot.slane %v2305, %v2316
        %v2318 = vmul.f32 %v2308, %v2317
        %v2319 = vmul.f32 %v2312, %v2317
        %v2320 = vmax.f32 %v2301, %v2318
        %v2321 = vmax.f32 %v2302, %v2319
        %v2322 = vmin.f32 %v2303, %v2318
        %v2323 = vmin.f32 %v2304, %v2319
        %v2324 = vld [vmem:[%s269 + $0x6b] sm:$0x1]
        %2325 = vset.pattern.permute.xlu0 107
        %2326 = vperm.xlu0 %2325, %v287
        %v2327 = vpop.permute.xlu0 %2326
        %2329 = vset.pattern.permute.xlu0 107
        %2330 = vperm.xlu0 %2329, %v288
        %v2331 = vpop.permute.xlu0 %2330
        %v2333 = vlaneseq
        %v2334 = vshrl.u32 %v2333, 7
        %v2335 = vsub.s32 0, %v2334
        %v2336 = vrot.slane %v2324, %v2335
        %v2337 = vmul.f32 %v2327, %v2336
        %v2338 = vmul.f32 %v2331, %v2336
        %v2339 = vmax.f32 %v2320, %v2337
        %v2340 = vmax.f32 %v2321, %v2338
        %v2341 = vmin.f32 %v2322, %v2337
        %v2342 = vmin.f32 %v2323, %v2338
        %v2343 = vld [vmem:[%s269 + $0x6c] sm:$0x1]
        %2344 = vset.pattern.permute.xlu0 108
        %2345 = vperm.xlu0 %2344, %v287
        %v2346 = vpop.permute.xlu0 %2345
        %2348 = vset.pattern.permute.xlu0 108
        %2349 = vperm.xlu0 %2348, %v288
        %v2350 = vpop.permute.xlu0 %2349
        %v2352 = vlaneseq
        %v2353 = vshrl.u32 %v2352, 7
        %v2354 = vsub.s32 0, %v2353
        %v2355 = vrot.slane %v2343, %v2354
        %v2356 = vmul.f32 %v2346, %v2355
        %v2357 = vmul.f32 %v2350, %v2355
        %v2358 = vmax.f32 %v2339, %v2356
        %v2359 = vmax.f32 %v2340, %v2357
        %v2360 = vmin.f32 %v2341, %v2356
        %v2361 = vmin.f32 %v2342, %v2357
        %v2362 = vld [vmem:[%s269 + $0x6d] sm:$0x1]
        %2363 = vset.pattern.permute.xlu0 109
        %2364 = vperm.xlu0 %2363, %v287
        %v2365 = vpop.permute.xlu0 %2364
        %2367 = vset.pattern.permute.xlu0 109
        %2368 = vperm.xlu0 %2367, %v288
        %v2369 = vpop.permute.xlu0 %2368
        %v2371 = vlaneseq
        %v2372 = vshrl.u32 %v2371, 7
        %v2373 = vsub.s32 0, %v2372
        %v2374 = vrot.slane %v2362, %v2373
        %v2375 = vmul.f32 %v2365, %v2374
        %v2376 = vmul.f32 %v2369, %v2374
        %v2377 = vmax.f32 %v2358, %v2375
        %v2378 = vmax.f32 %v2359, %v2376
        %v2379 = vmin.f32 %v2360, %v2375
        %v2380 = vmin.f32 %v2361, %v2376
        %v2381 = vld [vmem:[%s269 + $0x6e] sm:$0x1]
        %2382 = vset.pattern.permute.xlu0 110
        %2383 = vperm.xlu0 %2382, %v287
        %v2384 = vpop.permute.xlu0 %2383
        %2386 = vset.pattern.permute.xlu0 110
        %2387 = vperm.xlu0 %2386, %v288
        %v2388 = vpop.permute.xlu0 %2387
        %v2390 = vlaneseq
        %v2391 = vshrl.u32 %v2390, 7
        %v2392 = vsub.s32 0, %v2391
        %v2393 = vrot.slane %v2381, %v2392
        %v2394 = vmul.f32 %v2384, %v2393
        %v2395 = vmul.f32 %v2388, %v2393
        %v2396 = vmax.f32 %v2377, %v2394
        %v2397 = vmax.f32 %v2378, %v2395
        %v2398 = vmin.f32 %v2379, %v2394
        %v2399 = vmin.f32 %v2380, %v2395
        %v2400 = vld [vmem:[%s269 + $0x6f] sm:$0x1]
        %2401 = vset.pattern.permute.xlu0 111
        %2402 = vperm.xlu0 %2401, %v287
        %v2403 = vpop.permute.xlu0 %2402
        %2405 = vset.pattern.permute.xlu0 111
        %2406 = vperm.xlu0 %2405, %v288
        %v2407 = vpop.permute.xlu0 %2406
        %v2409 = vlaneseq
        %v2410 = vshrl.u32 %v2409, 7
        %v2411 = vsub.s32 0, %v2410
        %v2412 = vrot.slane %v2400, %v2411
        %v2413 = vmul.f32 %v2403, %v2412
        %v2414 = vmul.f32 %v2407, %v2412
        %v2415 = vmax.f32 %v2396, %v2413
        %v2416 = vmax.f32 %v2397, %v2414
        %v2417 = vmin.f32 %v2398, %v2413
        %v2418 = vmin.f32 %v2399, %v2414
        %v2419 = vld [vmem:[%s269 + $0x70] sm:$0x1]
        %2420 = vset.pattern.permute.xlu0 112
        %2421 = vperm.xlu0 %2420, %v287
        %v2422 = vpop.permute.xlu0 %2421
        %2424 = vset.pattern.permute.xlu0 112
        %2425 = vperm.xlu0 %2424, %v288
        %v2426 = vpop.permute.xlu0 %2425
        %v2428 = vlaneseq
        %v2429 = vshrl.u32 %v2428, 7
        %v2430 = vsub.s32 0, %v2429
        %v2431 = vrot.slane %v2419, %v2430
        %v2432 = vmul.f32 %v2422, %v2431
        %v2433 = vmul.f32 %v2426, %v2431
        %v2434 = vmax.f32 %v2415, %v2432
        %v2435 = vmax.f32 %v2416, %v2433
        %v2436 = vmin.f32 %v2417, %v2432
        %v2437 = vmin.f32 %v2418, %v2433
        %v2438 = vld [vmem:[%s269 + $0x71] sm:$0x1]
        %2439 = vset.pattern.permute.xlu0 113
        %2440 = vperm.xlu0 %2439, %v287
        %v2441 = vpop.permute.xlu0 %2440
        %2443 = vset.pattern.permute.xlu0 113
        %2444 = vperm.xlu0 %2443, %v288
        %v2445 = vpop.permute.xlu0 %2444
        %v2447 = vlaneseq
        %v2448 = vshrl.u32 %v2447, 7
        %v2449 = vsub.s32 0, %v2448
        %v2450 = vrot.slane %v2438, %v2449
        %v2451 = vmul.f32 %v2441, %v2450
        %v2452 = vmul.f32 %v2445, %v2450
        %v2453 = vmax.f32 %v2434, %v2451
        %v2454 = vmax.f32 %v2435, %v2452
        %v2455 = vmin.f32 %v2436, %v2451
        %v2456 = vmin.f32 %v2437, %v2452
        %v2457 = vld [vmem:[%s269 + $0x72] sm:$0x1]
        %2458 = vset.pattern.permute.xlu0 114
        %2459 = vperm.xlu0 %2458, %v287
        %v2460 = vpop.permute.xlu0 %2459
        %2462 = vset.pattern.permute.xlu0 114
        %2463 = vperm.xlu0 %2462, %v288
        %v2464 = vpop.permute.xlu0 %2463
        %v2466 = vlaneseq
        %v2467 = vshrl.u32 %v2466, 7
        %v2468 = vsub.s32 0, %v2467
        %v2469 = vrot.slane %v2457, %v2468
        %v2470 = vmul.f32 %v2460, %v2469
        %v2471 = vmul.f32 %v2464, %v2469
        %v2472 = vmax.f32 %v2453, %v2470
        %v2473 = vmax.f32 %v2454, %v2471
        %v2474 = vmin.f32 %v2455, %v2470
        %v2475 = vmin.f32 %v2456, %v2471
        %v2476 = vld [vmem:[%s269 + $0x73] sm:$0x1]
        %2477 = vset.pattern.permute.xlu0 115
        %2478 = vperm.xlu0 %2477, %v287
        %v2479 = vpop.permute.xlu0 %2478
        %2481 = vset.pattern.permute.xlu0 115
        %2482 = vperm.xlu0 %2481, %v288
        %v2483 = vpop.permute.xlu0 %2482
        %v2485 = vlaneseq
        %v2486 = vshrl.u32 %v2485, 7
        %v2487 = vsub.s32 0, %v2486
        %v2488 = vrot.slane %v2476, %v2487
        %v2489 = vmul.f32 %v2479, %v2488
        %v2490 = vmul.f32 %v2483, %v2488
        %v2491 = vmax.f32 %v2472, %v2489
        %v2492 = vmax.f32 %v2473, %v2490
        %v2493 = vmin.f32 %v2474, %v2489
        %v2494 = vmin.f32 %v2475, %v2490
        %v2495 = vld [vmem:[%s269 + $0x74] sm:$0x1]
        %2496 = vset.pattern.permute.xlu0 116
        %2497 = vperm.xlu0 %2496, %v287
        %v2498 = vpop.permute.xlu0 %2497
        %2500 = vset.pattern.permute.xlu0 116
        %2501 = vperm.xlu0 %2500, %v288
        %v2502 = vpop.permute.xlu0 %2501
        %v2504 = vlaneseq
        %v2505 = vshrl.u32 %v2504, 7
        %v2506 = vsub.s32 0, %v2505
        %v2507 = vrot.slane %v2495, %v2506
        %v2508 = vmul.f32 %v2498, %v2507
        %v2509 = vmul.f32 %v2502, %v2507
        %v2510 = vmax.f32 %v2491, %v2508
        %v2511 = vmax.f32 %v2492, %v2509
        %v2512 = vmin.f32 %v2493, %v2508
        %v2513 = vmin.f32 %v2494, %v2509
        %v2514 = vld [vmem:[%s269 + $0x75] sm:$0x1]
        %2515 = vset.pattern.permute.xlu0 117
        %2516 = vperm.xlu0 %2515, %v287
        %v2517 = vpop.permute.xlu0 %2516
        %2519 = vset.pattern.permute.xlu0 117
        %2520 = vperm.xlu0 %2519, %v288
        %v2521 = vpop.permute.xlu0 %2520
        %v2523 = vlaneseq
        %v2524 = vshrl.u32 %v2523, 7
        %v2525 = vsub.s32 0, %v2524
        %v2526 = vrot.slane %v2514, %v2525
        %v2527 = vmul.f32 %v2517, %v2526
        %v2528 = vmul.f32 %v2521, %v2526
        %v2529 = vmax.f32 %v2510, %v2527
        %v2530 = vmax.f32 %v2511, %v2528
        %v2531 = vmin.f32 %v2512, %v2527
        %v2532 = vmin.f32 %v2513, %v2528
        %v2533 = vld [vmem:[%s269 + $0x76] sm:$0x1]
        %2534 = vset.pattern.permute.xlu0 118
        %2535 = vperm.xlu0 %2534, %v287
        %v2536 = vpop.permute.xlu0 %2535
        %2538 = vset.pattern.permute.xlu0 118
        %2539 = vperm.xlu0 %2538, %v288
        %v2540 = vpop.permute.xlu0 %2539
        %v2542 = vlaneseq
        %v2543 = vshrl.u32 %v2542, 7
        %v2544 = vsub.s32 0, %v2543
        %v2545 = vrot.slane %v2533, %v2544
        %v2546 = vmul.f32 %v2536, %v2545
        %v2547 = vmul.f32 %v2540, %v2545
        %v2548 = vmax.f32 %v2529, %v2546
        %v2549 = vmax.f32 %v2530, %v2547
        %v2550 = vmin.f32 %v2531, %v2546
        %v2551 = vmin.f32 %v2532, %v2547
        %v2552 = vld [vmem:[%s269 + $0x77] sm:$0x1]
        %2553 = vset.pattern.permute.xlu0 119
        %2554 = vperm.xlu0 %2553, %v287
        %v2555 = vpop.permute.xlu0 %2554
        %2557 = vset.pattern.permute.xlu0 119
        %2558 = vperm.xlu0 %2557, %v288
        %v2559 = vpop.permute.xlu0 %2558
        %v2561 = vlaneseq
        %v2562 = vshrl.u32 %v2561, 7
        %v2563 = vsub.s32 0, %v2562
        %v2564 = vrot.slane %v2552, %v2563
        %v2565 = vmul.f32 %v2555, %v2564
        %v2566 = vmul.f32 %v2559, %v2564
        %v2567 = vmax.f32 %v2548, %v2565
        %v2568 = vmax.f32 %v2549, %v2566
        %v2569 = vmin.f32 %v2550, %v2565
        %v2570 = vmin.f32 %v2551, %v2566
        %v2571 = vld [vmem:[%s269 + $0x78] sm:$0x1]
        %2572 = vset.pattern.permute.xlu0 120
        %2573 = vperm.xlu0 %2572, %v287
        %v2574 = vpop.permute.xlu0 %2573
        %2576 = vset.pattern.permute.xlu0 120
        %2577 = vperm.xlu0 %2576, %v288
        %v2578 = vpop.permute.xlu0 %2577
        %v2580 = vlaneseq
        %v2581 = vshrl.u32 %v2580, 7
        %v2582 = vsub.s32 0, %v2581
        %v2583 = vrot.slane %v2571, %v2582
        %v2584 = vmul.f32 %v2574, %v2583
        %v2585 = vmul.f32 %v2578, %v2583
        %v2586 = vmax.f32 %v2567, %v2584
        %v2587 = vmax.f32 %v2568, %v2585
        %v2588 = vmin.f32 %v2569, %v2584
        %v2589 = vmin.f32 %v2570, %v2585
        %v2590 = vld [vmem:[%s269 + $0x79] sm:$0x1]
        %2591 = vset.pattern.permute.xlu0 121
        %2592 = vperm.xlu0 %2591, %v287
        %v2593 = vpop.permute.xlu0 %2592
        %2595 = vset.pattern.permute.xlu0 121
        %2596 = vperm.xlu0 %2595, %v288
        %v2597 = vpop.permute.xlu0 %2596
        %v2599 = vlaneseq
        %v2600 = vshrl.u32 %v2599, 7
        %v2601 = vsub.s32 0, %v2600
        %v2602 = vrot.slane %v2590, %v2601
        %v2603 = vmul.f32 %v2593, %v2602
        %v2604 = vmul.f32 %v2597, %v2602
        %v2605 = vmax.f32 %v2586, %v2603
        %v2606 = vmax.f32 %v2587, %v2604
        %v2607 = vmin.f32 %v2588, %v2603
        %v2608 = vmin.f32 %v2589, %v2604
        %v2609 = vld [vmem:[%s269 + $0x7a] sm:$0x1]
        %2610 = vset.pattern.permute.xlu0 122
        %2611 = vperm.xlu0 %2610, %v287
        %v2612 = vpop.permute.xlu0 %2611
        %2614 = vset.pattern.permute.xlu0 122
        %2615 = vperm.xlu0 %2614, %v288
        %v2616 = vpop.permute.xlu0 %2615
        %v2618 = vlaneseq
        %v2619 = vshrl.u32 %v2618, 7
        %v2620 = vsub.s32 0, %v2619
        %v2621 = vrot.slane %v2609, %v2620
        %v2622 = vmul.f32 %v2612, %v2621
        %v2623 = vmul.f32 %v2616, %v2621
        %v2624 = vmax.f32 %v2605, %v2622
        %v2625 = vmax.f32 %v2606, %v2623
        %v2626 = vmin.f32 %v2607, %v2622
        %v2627 = vmin.f32 %v2608, %v2623
        %v2628 = vld [vmem:[%s269 + $0x7b] sm:$0x1]
        %2629 = vset.pattern.permute.xlu0 123
        %2630 = vperm.xlu0 %2629, %v287
        %v2631 = vpop.permute.xlu0 %2630
        %2633 = vset.pattern.permute.xlu0 123
        %2634 = vperm.xlu0 %2633, %v288
        %v2635 = vpop.permute.xlu0 %2634
        %v2637 = vlaneseq
        %v2638 = vshrl.u32 %v2637, 7
        %v2639 = vsub.s32 0, %v2638
        %v2640 = vrot.slane %v2628, %v2639
        %v2641 = vmul.f32 %v2631, %v2640
        %v2642 = vmul.f32 %v2635, %v2640
        %v2643 = vmax.f32 %v2624, %v2641
        %v2644 = vmax.f32 %v2625, %v2642
        %v2645 = vmin.f32 %v2626, %v2641
        %v2646 = vmin.f32 %v2627, %v2642
        %v2647 = vld [vmem:[%s269 + $0x7c] sm:$0x1]
        %2648 = vset.pattern.permute.xlu0 124
        %2649 = vperm.xlu0 %2648, %v287
        %v2650 = vpop.permute.xlu0 %2649
        %2652 = vset.pattern.permute.xlu0 124
        %2653 = vperm.xlu0 %2652, %v288
        %v2654 = vpop.permute.xlu0 %2653
        %v2656 = vlaneseq
        %v2657 = vshrl.u32 %v2656, 7
        %v2658 = vsub.s32 0, %v2657
        %v2659 = vrot.slane %v2647, %v2658
        %v2660 = vmul.f32 %v2650, %v2659
        %v2661 = vmul.f32 %v2654, %v2659
        %v2662 = vmax.f32 %v2643, %v2660
        %v2663 = vmax.f32 %v2644, %v2661
        %v2664 = vmin.f32 %v2645, %v2660
        %v2665 = vmin.f32 %v2646, %v2661
        %v2666 = vld [vmem:[%s269 + $0x7d] sm:$0x1]
        %2667 = vset.pattern.permute.xlu0 125
        %2668 = vperm.xlu0 %2667, %v287
        %v2669 = vpop.permute.xlu0 %2668
        %2671 = vset.pattern.permute.xlu0 125
        %2672 = vperm.xlu0 %2671, %v288
        %v2673 = vpop.permute.xlu0 %2672
        %v2675 = vlaneseq
        %v2676 = vshrl.u32 %v2675, 7
        %v2677 = vsub.s32 0, %v2676
        %v2678 = vrot.slane %v2666, %v2677
        %v2679 = vmul.f32 %v2669, %v2678
        %v2680 = vmul.f32 %v2673, %v2678
        %v2681 = vmax.f32 %v2662, %v2679
        %v2682 = vmax.f32 %v2663, %v2680
        %v2683 = vmin.f32 %v2664, %v2679
        %v2684 = vmin.f32 %v2665, %v2680
        %v2685 = vld [vmem:[%s269 + $0x7e] sm:$0x1]
        %2686 = vset.pattern.permute.xlu0 126
        %2687 = vperm.xlu0 %2686, %v287
        %v2688 = vpop.permute.xlu0 %2687
        %2690 = vset.pattern.permute.xlu0 126
        %2691 = vperm.xlu0 %2690, %v288
        %v2692 = vpop.permute.xlu0 %2691
        %v2694 = vlaneseq
        %v2695 = vshrl.u32 %v2694, 7
        %v2696 = vsub.s32 0, %v2695
        %v2697 = vrot.slane %v2685, %v2696
        %v2698 = vmul.f32 %v2688, %v2697
        %v2699 = vmul.f32 %v2692, %v2697
        %v2700 = vmax.f32 %v2681, %v2698
        %v2701 = vmax.f32 %v2682, %v2699
        %v2702 = vmin.f32 %v2683, %v2698
        %v2703 = vmin.f32 %v2684, %v2699
        %v2704 = vld [vmem:[%s269 + $0x7f] sm:$0x1]
        %2705 = vset.pattern.permute.xlu0 127
        %2706 = vperm.xlu0 %2705, %v287
        %v2707 = vpop.permute.xlu0 %2706
        %2709 = vset.pattern.permute.xlu0 127
        %2710 = vperm.xlu0 %2709, %v288
        %v2711 = vpop.permute.xlu0 %2710
        %v2713 = vlaneseq
        %v2714 = vshrl.u32 %v2713, 7
        %v2715 = vsub.s32 0, %v2714
        %v2716 = vrot.slane %v2704, %v2715
        %v2717 = vmul.f32 %v2707, %v2716
        %v2718 = vmul.f32 %v2711, %v2716
        %v2719 = vmax.f32 %v2700, %v2717
        %v2720 = vmax.f32 %v2701, %v2718
        %v2721 = vmin.f32 %v2702, %v2717
        %v2722 = vmin.f32 %v2703, %v2718
        %2723 = vst [vmem:[#allocation2] sm:$0xff] %v2719
        %2724 = vst [vmem:[#allocation2 + $0x8] sm:$0xff] %v2720
        %2725 = vst [vmem:[#allocation3] sm:$0xff] %v2721
        %2726 = vst [vmem:[#allocation3 + $0x8] sm:$0xff] %v2722
        %p2727 = scmp.eq.s32.totalorder %s22, 1
        // Predicated region
        $region75: #{mam_fully_connected.1} parent=65 // pred_check
          %p2728 = pneg %p2727
        $region76: #{mam_fully_connected.1} parent=65 // pred_check_branch
          %2730 = sbr.rel (%p2728) target = $region78
        $region77: #{mam_fully_connected.1} parent=65 // pred_region
          %v2731 = vadd.f32 %v2719, %v2721
          %v2732 = vadd.f32 %v2720, %v2722
          %v2733 = vld [vmem:[%s273] sm:$0x1]
          %v2735 = vlaneseq
          %v2736 = vshrl.u32 %v2735, 7
          %v2737 = vsub.s32 0, %v2736
          %v2738 = vrot.slane %v2733, %v2737
          %v2740 = vadd.f32 %v2731, %v2738
          %v2741 = vadd.f32 %v2732, %v2738
          %2742 = vst [vmem:[#allocation5] sm:$0xff] %v2740
          %2743 = vst [vmem:[#allocation5 + $0x8] sm:$0xff] %v2741
        $region78: #{mam_fully_connected.1} parent=65 // pred_fallthru
          _
        // Predicated region
        $region79: #{mam_fully_connected.1} parent=65 // pred_check
          %p2744 = pneg %p136
        $region80: #{mam_fully_connected.1} parent=65 // pred_check_branch
          %2746 = sbr.rel (%p2744) target = $region82
        $region81: #{mam_fully_connected.1} parent=65 // pred_region
          %s2747 = smul.u32 2, %s20
          %s2749 = ssub.s32 256, 256
          %2750 = vsyncadd [#allocation6], %s2749
          %s2751 = sadd.s32 %s21, %s2747
          %s2752 = smul.addr %s2751, 128
          %s2753 = scalar_lea.hbm %s3, %s2752
          %s2754 = sshll.u32 [#allocation5], 4
          %s2755 = int_to_ptr.vmem [resolvable:$true] %s2754
          %2760 = dma.vmem_to_hbm [thread:$0]  %s2755, 256, %s2753, [#allocation6], 128, 128, 8
        $region82: #{mam_fully_connected.1} parent=65 // pred_fallthru
          _
        // Predicated region
        $region83: #{mam_fully_connected.1} parent=65 // pred_check
          %p2761 = pneg %p136
        $region84: #{mam_fully_connected.1} parent=65 // pred_check_branch
          %2763 = sbr.rel (%p2761) target = $region86
        $region85: #{mam_fully_connected.1} parent=65 // pred_region
          %2764 = dma.done [#allocation6], 256
        $region86: #{mam_fully_connected.1} parent=65 // pred_fallthru
          _
      $region66: #{mam_fully_connected.1} parent=5 // pred_fallthru
        _
      %p2765 = scmp.le.s32.totalorder 2, %s10
      // Predicated region
      $region87: #{mam_fully_connected.1} parent=5 // pred_check
        %p2766 = pneg %p2765
      $region88: #{mam_fully_connected.1} parent=5 // pred_check_branch
        %2768 = sbr.rel (%p2766) target = $region90
      $region89: #{mam_fully_connected.1} parent=5 // pred_region
        %s2769 = ssub.s32 %s10, 2
      $region90: #{mam_fully_connected.1} parent=5 // pred_fallthru
        _
    $region6: #{mam_fully_connected.1} parent=1 // loop_footer
      %s14 = sadd.s32 1, %s10
    $region7: #{mam_fully_connected.1} parent=1 // loop_footer_branch
      %9 = sbr.rel target = $region3
    $region8: #{mam_fully_connected.1} parent=1 // loop_exit
      _
    %2770 = vsyncpa [#allocation6], 1
    %s2771 = scalar_lea.sflag [#allocation6], 1
    %2772 = vsyncpa %s2771, 1

</llo_original>
